<compile_context>
chip_gen: v7x
topology: tpu7x:2x2x1
jax: 0.10.0
libtpu: 0.0.40
codegen_flags: <defaults>
</compile_context>

<pallas_src>
import functools

import jax
import jax.numpy as jnp
from jax.experimental import pallas as pl
from jax.experimental.pallas import tpu as pltpu


MSA_CHANNEL = 64
PAIR_CHANNEL = 128
MSA_STACK_NUM_LAYER = 4
PAIRFORMER_NUM_LAYER = 48
HIDDEN_MULT = 4


# ---------------------------------------------------------------------------
# Pallas kernel: fused stack of residual transitions
#   for l in layers:  x <- x + relu(x @ W1[l]) @ W2[l]
# grid = (row_tiles, num_layers); the row tile stays resident in acc_ref.
# ---------------------------------------------------------------------------
def _fused_transition_kernel(x_ref, w1_ref, w2_ref, o_ref, acc_ref):
    l = pl.program_id(1)

    @pl.when(l == 0)
    def _():
        acc_ref[...] = x_ref[...].astype(jnp.float32)

    x = acc_ref[...]                                   # f32 resident activation
    h = jnp.dot(x.astype(jnp.bfloat16), w1_ref[...],   # bf16 MXU matmul
                preferred_element_type=jnp.float32)
    h = jnp.maximum(h, 0.0)
    y = jnp.dot(h.astype(jnp.bfloat16), w2_ref[...],
                preferred_element_type=jnp.float32)
    acc_ref[...] = x + y                               # residual in f32

    @pl.when(l == pl.num_programs(1) - 1)
    def _():
        o_ref[...] = acc_ref[...].astype(o_ref.dtype)


def _round_up(x, m):
    return (x + m - 1) // m * m


def fused_residual_transitions(x, w1s, w2s, *, tm_max=512):
    """Apply L stacked residual transitions inside a single pallas_call.

    x:   (M, C) float32
    w1s: (L, C, H) bfloat16
    w2s: (L, H, C) bfloat16
    returns (M, C) float32
    """
    M, C = x.shape
    L, _, H = w1s.shape

    # Pick a row tile (multiple of 8 sublanes) and pad M up to a multiple of it.
    tm = min(tm_max, _round_up(M, 8))
    M_pad = _round_up(M, tm)
    if M_pad != M:
        x = jnp.pad(x, ((0, M_pad - M), (0, 0)))   # zero rows stay zero: relu(0)@W2 = 0

    grid = (M_pad // tm, L)

    flops = 4 * M_pad * C * H * L
    bytes_accessed = (2 * M_pad * C * x.dtype.itemsize        # read x + write out once
                      + 2 * L * C * H * w1s.dtype.itemsize)   # stream bf16 weights once

    out = pl.pallas_call(
        _fused_transition_kernel,
        out_shape=jax.ShapeDtypeStruct((M_pad, C), x.dtype),
        grid=grid,
        in_specs=[
            # Activation row tile: same block index for every layer -> fetched once per row tile.
            pl.BlockSpec((tm, C), lambda i, l: (i, 0)),
            # Per-layer weights, streamed (double-buffered) along the layer axis.
            pl.BlockSpec((pl.Squeezed(), C, H), lambda i, l: (l, 0, 0)),
            pl.BlockSpec((pl.Squeezed(), H, C), lambda i, l: (l, 0, 0)),
        ],
        out_specs=pl.BlockSpec((tm, C), lambda i, l: (i, 0)),
        scratch_shapes=[pltpu.VMEM((tm, C), jnp.float32)],
        compiler_params=pltpu.CompilerParams(
            dimension_semantics=("parallel", "arbitrary"),
            vmem_limit_bytes=32 * 1024 * 1024),
        cost_estimate=pl.CostEstimate(
            flops=flops, transcendentals=0, bytes_accessed=bytes_accessed),
        input_output_aliases={0: 0},   # residual update in place
    )(x, w1s, w2s)

    if M_pad != M:
        out = out[:M]
    return out


# ---------------------------------------------------------------------------
# Parameter init (deterministic, in-script): stacked bf16 weights per stack.
# ---------------------------------------------------------------------------
def init_evoformer_params(key):
    k_t, k_m, k_p = jax.random.split(key, 3)

    def stack_init(k, n, c, scale=0.02):
        h = c * HIDDEN_MULT
        k1, k2 = jax.random.split(k)
        w1 = (jax.random.normal(k1, (n, c, h), jnp.float32) * scale).astype(jnp.bfloat16)
        w2 = (jax.random.normal(k2, (n, h, c), jnp.float32) * scale).astype(jnp.bfloat16)
        return w1, w2

    t_w1, t_w2 = stack_init(k_t, 1, PAIR_CHANNEL)                       # TemplateEmbedding
    m_w1, m_w2 = stack_init(k_m, MSA_STACK_NUM_LAYER, MSA_CHANNEL)      # EvoformerBlocks
    p_w1, p_w2 = stack_init(k_p, PAIRFORMER_NUM_LAYER, PAIR_CHANNEL)    # PairformerBlocks

    # Template embedding (layer 0) + 48 pairformer layers fused into one stack;
    # valid because the MSA stack does not touch pair activations in this skeleton,
    # so the original ordering (template -> msa -> pairformer) is preserved.
    return {
        "pair_w1": jnp.concatenate([t_w1, p_w1], axis=0),   # (49, 128, 512)
        "pair_w2": jnp.concatenate([t_w2, p_w2], axis=0),   # (49, 512, 128)
        "msa_w1": m_w1,                                      # (4, 64, 256)
        "msa_w2": m_w2,                                      # (4, 256, 64)
    }


# ---------------------------------------------------------------------------
# Evoformer forward: one fused Pallas call per activation stream.
# ---------------------------------------------------------------------------
def evoformer_forward(params, pair_act, msa_act):
    """pair_act: (num_res, num_res, 128), msa_act: (num_msa, num_res, 64)."""
    num_res = pair_act.shape[0]
    num_msa = msa_act.shape[0]

    pair = pair_act.reshape(num_res * num_res, PAIR_CHANNEL)
    msa = msa_act.reshape(num_msa * num_res, MSA_CHANNEL)

    # _embed_template_pair + trunk_pairformer: 1 + 48 pair transitions, one kernel.
    pair = fused_residual_transitions(pair, params["pair_w1"], params["pair_w2"])

    # _embed_process_msa: 4 EvoformerBlock transitions, one kernel.
    msa = fused_residual_transitions(msa, params["msa_w1"], params["msa_w2"])

    # The torch forward returns None; return the final activations so the
    # computation can be materialized / checked.
    return (pair.reshape(num_res, num_res, PAIR_CHANNEL),
            msa.reshape(num_msa, num_res, MSA_CHANNEL))


# ---------------------------------------------------------------------------
# Plain-JAX reference (f32) for a loose correctness check.
# ---------------------------------------------------------------------------
def _reference_transitions(x, w1s, w2s):
    x = x.astype(jnp.float32)
    for l in range(w1s.shape[0]):
        h = jnp.maximum(x @ w1s[l].astype(jnp.float32), 0.0)
        x = x + h @ w2s[l].astype(jnp.float32)
    return x


if __name__ == "__main__":
    num_res = 16          # small num_res for the example
    num_msa = 64          # shrunk from 1024 to keep the example small

    key = jax.random.PRNGKey(0)
    k_params, k_pair, k_msa = jax.random.split(key, 3)

    params = init_evoformer_params(k_params)
    pair_act = jax.random.normal(k_pair, (num_res, num_res, PAIR_CHANNEL),
                                 jnp.float32)
    msa_act = jax.random.normal(k_msa, (num_msa, num_res, MSA_CHANNEL),
                                jnp.float32)

    fwd = jax.jit(functools.partial(evoformer_forward, params))
    pair_out, msa_out = fwd(pair_act, msa_act)
    jax.block_until_ready((pair_out, msa_out))

    assert pair_out.shape == (num_res, num_res, PAIR_CHANNEL)
    assert msa_out.shape == (num_msa, num_res, MSA_CHANNEL)
    assert bool(jnp.all(jnp.isfinite(pair_out))) and bool(jnp.all(jnp.isfinite(msa_out)))

    # Loose numerical check against an f32 reference (kernel uses bf16 matmuls).
    pair_ref = _reference_transitions(
        pair_act.reshape(num_res * num_res, PAIR_CHANNEL),
        params["pair_w1"], params["pair_w2"]).reshape(pair_out.shape)
    msa_ref = _reference_transitions(
        msa_act.reshape(num_msa * num_res, MSA_CHANNEL),
        params["msa_w1"], params["msa_w2"]).reshape(msa_out.shape)
    assert bool(jnp.allclose(pair_out, pair_ref, rtol=1e-1, atol=1e-1))
    assert bool(jnp.allclose(msa_out, msa_ref, rtol=1e-1, atol=1e-1))

    print("KERNEL_OK")
</pallas_src>

<mosaic_0001>
module attributes {stable_mosaic.version = 11 : i64} {
  func.func @_fused_transition_kernel(%arg0: i32, %arg1: i32, %arg2: memref<256x128xf32, #tpu.memory_space<vmem>>, %arg3: memref<1x128x512xbf16, #tpu.memory_space<vmem>>, %arg4: memref<1x512x128xbf16, #tpu.memory_space<vmem>>, %arg5: memref<256x128xf32, #tpu.memory_space<vmem>>, %arg6: memref<256x128xf32, #tpu.memory_space<vmem>>) attributes {dimension_semantics = [#tpu.dimension_semantics<parallel>, #tpu.dimension_semantics<arbitrary>], iteration_bounds = array<i64: 1, 49>, scalar_prefetch = 0 : i64, scratch_operands = 1 : i64, tpu.core_type = #tpu.core_type<tc>, window_params = [{transform_indices = @transform_0, window_bounds = array<i64: 256, 128>}, {transform_indices = @transform_1, window_bounds = array<i64: 1, 128, 512>}, {transform_indices = @transform_2, window_bounds = array<i64: 1, 512, 128>}, {transform_indices = @transform_3, window_bounds = array<i64: 256, 128>}]} {
    %c0_i32 = arith.constant 0 : i32
    %0 = arith.cmpi eq, %arg1, %c0_i32 : i32
    %1 = arith.extui %0 : i1 to i32
    %c0_i32_0 = arith.constant 0 : i32
    %2 = arith.cmpi ne, %1, %c0_i32_0 : i32
    scf.if %2 {
      %c0_13 = arith.constant 0 : index
      %c0_14 = arith.constant 0 : index
      %19 = vector.load %arg2[%c0_13, %c0_14] : memref<256x128xf32, #tpu.memory_space<vmem>>, vector<256x128xf32>
      %c0_15 = arith.constant 0 : index
      %c0_16 = arith.constant 0 : index
      %20 = vector.load %arg6[%c0_15, %c0_16] : memref<256x128xf32, #tpu.memory_space<vmem>>, vector<256x128xf32>
      tpu.vector_store %arg6[%c0_15, %c0_16], %19 {strides = array<i32>} : memref<256x128xf32, #tpu.memory_space<vmem>>, vector<256x128xf32>,
    } else {
    }
    %c0 = arith.constant 0 : index
    %c0_1 = arith.constant 0 : index
    %3 = vector.load %arg6[%c0, %c0_1] : memref<256x128xf32, #tpu.memory_space<vmem>>, vector<256x128xf32>
    %4 = arith.truncf %3 : vector<256x128xf32> to vector<256x128xbf16>
    %c0_2 = arith.constant 0 : index
    %c0_3 = arith.constant 0 : index
    %c0_4 = arith.constant 0 : index
    %5 = vector.load %arg3[%c0_2, %c0_3, %c0_4] : memref<1x128x512xbf16, #tpu.memory_space<vmem>>, vector<1x128x512xbf16>
    %6 = vector.shape_cast %5 : vector<1x128x512xbf16> to vector<128x512xbf16>
    %cst = arith.constant dense<0.000000e+00> : vector<256x512xf32>
    %7 = tpu.matmul %4, %6, %cst {dimension_numbers = #tpu.dot_dimension_numbers<[1], [0], [0], [1], [0, 0, 1, 1], [], []>} : vector<256x128xbf16>, vector<128x512xbf16>, vector<256x512xf32> -> vector<256x512xf32>
    %cst_5 = arith.constant 0.000000e+00 : f32
    %8 = vector.broadcast %cst_5 : f32 to vector<256x512xf32>
    %9 = arith.maximumf %7, %8 : vector<256x512xf32>
    %10 = arith.truncf %9 : vector<256x512xf32> to vector<256x512xbf16>
    %c0_6 = arith.constant 0 : index
    %c0_7 = arith.constant 0 : index
    %c0_8 = arith.constant 0 : index
    %11 = vector.load %arg4[%c0_6, %c0_7, %c0_8] : memref<1x512x128xbf16, #tpu.memory_space<vmem>>, vector<1x512x128xbf16>
    %12 = vector.shape_cast %11 : vector<1x512x128xbf16> to vector<512x128xbf16>
    %cst_9 = arith.constant dense<0.000000e+00> : vector<256x128xf32>
    %13 = tpu.matmul %10, %12, %cst_9 {dimension_numbers = #tpu.dot_dimension_numbers<[1], [0], [0], [1], [0, 0, 1, 1], [], []>} : vector<256x512xbf16>, vector<512x128xbf16>, vector<256x128xf32> -> vector<256x128xf32>
    %14 = arith.addf %3, %13 : vector<256x128xf32>
    %c0_10 = arith.constant 0 : index
    %c0_11 = arith.constant 0 : index
    %15 = vector.load %arg6[%c0_10, %c0_11] : memref<256x128xf32, #tpu.memory_space<vmem>>, vector<256x128xf32>
    tpu.vector_store %arg6[%c0_10, %c0_11], %14 {strides = array<i32>} : memref<256x128xf32, #tpu.memory_space<vmem>>, vector<256x128xf32>,
    %c48_i32 = arith.constant 48 : i32
    %16 = arith.cmpi eq, %arg1, %c48_i32 : i32
    %17 = arith.extui %16 : i1 to i32
    %c0_i32_12 = arith.constant 0 : i32
    %18 = arith.cmpi ne, %17, %c0_i32_12 : i32
    scf.if %18 {
      %c0_13 = arith.constant 0 : index
      %c0_14 = arith.constant 0 : index
      %19 = vector.load %arg6[%c0_13, %c0_14] : memref<256x128xf32, #tpu.memory_space<vmem>>, vector<256x128xf32>
      %c0_15 = arith.constant 0 : index
      %c0_16 = arith.constant 0 : index
      %20 = vector.load %arg5[%c0_15, %c0_16] : memref<256x128xf32, #tpu.memory_space<vmem>>, vector<256x128xf32>
      tpu.vector_store %arg5[%c0_15, %c0_16], %19 {strides = array<i32>} : memref<256x128xf32, #tpu.memory_space<vmem>>, vector<256x128xf32>,
    } else {
    }
    return
  }
  func.func @transform_0(%arg0: i32, %arg1: i32) -> (i32, i32) {
    %c0_i32 = arith.constant 0 : i32
    %c0_i32_0 = arith.constant 0 : i32
    return %arg0, %c0_i32 : i32, i32
  }
  func.func @transform_1(%arg0: i32, %arg1: i32) -> (i32, i32, i32) {
    %c0_i32 = arith.constant 0 : i32
    %c0_i32_0 = arith.constant 0 : i32
    %c0_i32_1 = arith.constant 0 : i32
    return %arg1, %c0_i32, %c0_i32_0 : i32, i32, i32
  }
  func.func @transform_2(%arg0: i32, %arg1: i32) -> (i32, i32, i32) {
    %c0_i32 = arith.constant 0 : i32
    %c0_i32_0 = arith.constant 0 : i32
    %c0_i32_1 = arith.constant 0 : i32
    return %arg1, %c0_i32, %c0_i32_0 : i32, i32, i32
  }
  func.func @transform_3(%arg0: i32, %arg1: i32) -> (i32, i32) {
    %c0_i32 = arith.constant 0 : i32
    %c0_i32_0 = arith.constant 0 : i32
    return %arg0, %c0_i32 : i32, i32
  }
}

module attributes {stable_mosaic.version = 11 : i64} {
  func.func @_fused_transition_kernel(%arg0: i32, %arg1: i32, %arg2: memref<512x64xf32, #tpu.memory_space<vmem>>, %arg3: memref<1x64x256xbf16, #tpu.memory_space<vmem>>, %arg4: memref<1x256x64xbf16, #tpu.memory_space<vmem>>, %arg5: memref<512x64xf32, #tpu.memory_space<vmem>>, %arg6: memref<512x64xf32, #tpu.memory_space<vmem>>) attributes {dimension_semantics = [#tpu.dimension_semantics<parallel>, #tpu.dimension_semantics<arbitrary>], iteration_bounds = array<i64: 2, 4>, scalar_prefetch = 0 : i64, scratch_operands = 1 : i64, tpu.core_type = #tpu.core_type<tc>, window_params = [{transform_indices = @transform_0, window_bounds = array<i64: 512, 64>}, {transform_indices = @transform_1, window_bounds = array<i64: 1, 64, 256>}, {transform_indices = @transform_2, window_bounds = array<i64: 1, 256, 64>}, {transform_indices = @transform_3, window_bounds = array<i64: 512, 64>}]} {
    %c0_i32 = arith.constant 0 : i32
    %0 = arith.cmpi eq, %arg1, %c0_i32 : i32
    %1 = arith.extui %0 : i1 to i32
    %c0_i32_0 = arith.constant 0 : i32
    %2 = arith.cmpi ne, %1, %c0_i32_0 : i32
    scf.if %2 {
      %c0_13 = arith.constant 0 : index
      %c0_14 = arith.constant 0 : index
      %19 = vector.load %arg2[%c0_13, %c0_14] : memref<512x64xf32, #tpu.memory_space<vmem>>, vector<512x64xf32>
      %c0_15 = arith.constant 0 : index
      %c0_16 = arith.constant 0 : index
      %20 = vector.load %arg6[%c0_15, %c0_16] : memref<512x64xf32, #tpu.memory_space<vmem>>, vector<512x64xf32>
      tpu.vector_store %arg6[%c0_15, %c0_16], %19 {strides = array<i32>} : memref<512x64xf32, #tpu.memory_space<vmem>>, vector<512x64xf32>,
    } else {
    }
    %c0 = arith.constant 0 : index
    %c0_1 = arith.constant 0 : index
    %3 = vector.load %arg6[%c0, %c0_1] : memref<512x64xf32, #tpu.memory_space<vmem>>, vector<512x64xf32>
    %4 = arith.truncf %3 : vector<512x64xf32> to vector<512x64xbf16>
    %c0_2 = arith.constant 0 : index
    %c0_3 = arith.constant 0 : index
    %c0_4 = arith.constant 0 : index
    %5 = vector.load %arg3[%c0_2, %c0_3, %c0_4] : memref<1x64x256xbf16, #tpu.memory_space<vmem>>, vector<1x64x256xbf16>
    %6 = vector.shape_cast %5 : vector<1x64x256xbf16> to vector<64x256xbf16>
    %cst = arith.constant dense<0.000000e+00> : vector<512x256xf32>
    %7 = tpu.matmul %4, %6, %cst {dimension_numbers = #tpu.dot_dimension_numbers<[1], [0], [0], [1], [0, 0, 1, 1], [], []>} : vector<512x64xbf16>, vector<64x256xbf16>, vector<512x256xf32> -> vector<512x256xf32>
    %cst_5 = arith.constant 0.000000e+00 : f32
    %8 = vector.broadcast %cst_5 : f32 to vector<512x256xf32>
    %9 = arith.maximumf %7, %8 : vector<512x256xf32>
    %10 = arith.truncf %9 : vector<512x256xf32> to vector<512x256xbf16>
    %c0_6 = arith.constant 0 : index
    %c0_7 = arith.constant 0 : index
    %c0_8 = arith.constant 0 : index
    %11 = vector.load %arg4[%c0_6, %c0_7, %c0_8] : memref<1x256x64xbf16, #tpu.memory_space<vmem>>, vector<1x256x64xbf16>
    %12 = vector.shape_cast %11 : vector<1x256x64xbf16> to vector<256x64xbf16>
    %cst_9 = arith.constant dense<0.000000e+00> : vector<512x64xf32>
    %13 = tpu.matmul %10, %12, %cst_9 {dimension_numbers = #tpu.dot_dimension_numbers<[1], [0], [0], [1], [0, 0, 1, 1], [], []>} : vector<512x256xbf16>, vector<256x64xbf16>, vector<512x64xf32> -> vector<512x64xf32>
    %14 = arith.addf %3, %13 : vector<512x64xf32>
    %c0_10 = arith.constant 0 : index
    %c0_11 = arith.constant 0 : index
    %15 = vector.load %arg6[%c0_10, %c0_11] : memref<512x64xf32, #tpu.memory_space<vmem>>, vector<512x64xf32>
    tpu.vector_store %arg6[%c0_10, %c0_11], %14 {strides = array<i32>} : memref<512x64xf32, #tpu.memory_space<vmem>>, vector<512x64xf32>,
    %c3_i32 = arith.constant 3 : i32
    %16 = arith.cmpi eq, %arg1, %c3_i32 : i32
    %17 = arith.extui %16 : i1 to i32
    %c0_i32_12 = arith.constant 0 : i32
    %18 = arith.cmpi ne, %17, %c0_i32_12 : i32
    scf.if %18 {
      %c0_13 = arith.constant 0 : index
      %c0_14 = arith.constant 0 : index
      %19 = vector.load %arg6[%c0_13, %c0_14] : memref<512x64xf32, #tpu.memory_space<vmem>>, vector<512x64xf32>
      %c0_15 = arith.constant 0 : index
      %c0_16 = arith.constant 0 : index
      %20 = vector.load %arg5[%c0_15, %c0_16] : memref<512x64xf32, #tpu.memory_space<vmem>>, vector<512x64xf32>
      tpu.vector_store %arg5[%c0_15, %c0_16], %19 {strides = array<i32>} : memref<512x64xf32, #tpu.memory_space<vmem>>, vector<512x64xf32>,
    } else {
    }
    return
  }
  func.func @transform_0(%arg0: i32, %arg1: i32) -> (i32, i32) {
    %c0_i32 = arith.constant 0 : i32
    %c0_i32_0 = arith.constant 0 : i32
    return %arg0, %c0_i32 : i32, i32
  }
  func.func @transform_1(%arg0: i32, %arg1: i32) -> (i32, i32, i32) {
    %c0_i32 = arith.constant 0 : i32
    %c0_i32_0 = arith.constant 0 : i32
    %c0_i32_1 = arith.constant 0 : i32
    return %arg1, %c0_i32, %c0_i32_0 : i32, i32, i32
  }
  func.func @transform_2(%arg0: i32, %arg1: i32) -> (i32, i32, i32) {
    %c0_i32 = arith.constant 0 : i32
    %c0_i32_0 = arith.constant 0 : i32
    %c0_i32_1 = arith.constant 0 : i32
    return %arg1, %c0_i32, %c0_i32_0 : i32, i32, i32
  }
  func.func @transform_3(%arg0: i32, %arg1: i32) -> (i32, i32) {
    %c0_i32 = arith.constant 0 : i32
    %c0_i32_0 = arith.constant 0 : i32
    return %arg0, %c0_i32 : i32, i32
  }
}

</mosaic_0001>

<llo_original>
// kernel: evoformer_forward.2
$region0: #{evoformer_forward.2}
  #allocation0 [shape = 'u32[]', space=smem, size = 0x4, offset = 0x4, fixed_abs, tag = 'smem constant byte address 0x4 - core index']
  #allocation1 [shape = 'u32[144,128]{1,0:T(1,128)}', space=vmem, size = 0x12000, scoped, tag = 'internal scratch']
  #allocation2 [shape = 'f32[256,128]{1,0:T(8,128)}', space=vmem, size = 0x20000, scoped, tag = 'scratch operand']
  %s0 = inlined_call_operand.vmem [shape: f32[256,128], index: 0, kind: input, shape index: {}, may-alias: {0,3}]
  %s1 = inlined_call_operand.vmem [shape: bf16[49,128,512], index: 1, kind: input, shape index: {}]
  %s2 = inlined_call_operand.vmem [shape: bf16[49,512,128], index: 2, kind: input, shape index: {}]
  %s3 = inlined_call_operand.vmem [shape: f32[256,128], index: 3, kind: output, shape index: {}, may-alias: {0,3}]
  %s4 = sld [smem:[#allocation0]]
  $region53: #{evoformer_forward.2} parent=0
    _
  %s6 = ssub.s32 1, %s4
  %s7 = scalar_select 0, %s6, %s4
  loop: start=0, step=1, limit=51
  $region2: #{evoformer_forward.2} parent=0 // loop_pre_header
    _
  $region3: #{evoformer_forward.2} parent=0 // loop_header
    %s9 = sphi 0, %s13
    %p10 = scmp.ge.s32.totalorder %s9, 51
    %s16 = sphi 0, %s28
    %s17 = sphi 0, %s24
    %s18 = sphi 0, %s16
    %s19 = sphi 0, %s17
    %s20 = sphi 0, %s18
    %s21 = sphi 0, %s19
    %s31 = sphi 0, %s33
    %s34 = sphi 0, %s31
    %s35 = sphi 0, %s34
    %s51 = sphi 0, %s35
    %s57 = sphi 0, %s59
    %s60 = sphi 0, %s57
    %s61 = sphi 0, %s60
    %s77 = sphi 0, %s61
    %s83 = sphi 0, %s85
    %s86 = sphi 0, %s83
    %s87 = sphi 0, %s86
    %s103 = sphi 0, %s87
    %s109 = sphi 0, %s111
    %s112 = sphi 0, %s109
    %s113 = sphi 0, %s112
    %s129 = sphi 0, %s113
  $region4: #{evoformer_forward.2} parent=0 // loop_header_branch
    %12 = sbr.rel (%p10) target = $region8
  $region5: #{evoformer_forward.2} parent=0 // loop_body
    %s14 = ssub.s32 %s9, 1
    %s15 = ssub.s32 %s9, 2
    %s22 = sadd.s32 1, %s17
    %p23 = scmp.ge.s32.totalorder %s22, 49
    %s24 = scalar_select %p23, 0, %s22
    %s25 = sadd.s32 1, %s16
    %s26 = scalar_select %p23, %s25, %s16
    %p27 = scmp.ge.s32.totalorder %s26, 1
    %s28 = scalar_select %p27, 0, %s26
    %s29 = ssub.s32 %s16, %s28
    %p30 = scmp.eq.s32.totalorder %s29, 0
    %s32 = sadd.s32 %s31, 1
    %s33 = scalar_select %p30, %s31, %s32
    %p36 = pneg %p30
    %p37 = scmp.eq.s32.totalorder %s9, 48
    %p38 = por %p36, %p37
    %p39 = scmp.ne.s32.totalorder %s31, %s34
    %p40 = scmp.eq.s32.totalorder %s9, 0
    %p41 = por %p39, %p40
    %p42 = scmp.ne.s32.totalorder %s31, %s34
    %p43 = scmp.eq.s32.totalorder %s14, 48
    %p44 = por %p42, %p43
    %p45 = scmp.ne.s32.totalorder %s34, %s35
    %p46 = scmp.eq.s32.totalorder %s14, 0
    %p47 = por %p45, %p46
    %p48 = scmp.ne.s32.totalorder %s34, %s35
    %p49 = scmp.eq.s32.totalorder %s15, 48
    %p50 = por %p48, %p49
    %p52 = scmp.ne.s32.totalorder %s35, %s51
    %p53 = scmp.eq.s32.totalorder %s15, 0
    %p54 = por %p52, %p53
    %s55 = ssub.s32 %s17, %s24
    %p56 = scmp.eq.s32.totalorder %s55, 0
    %s58 = sadd.s32 %s57, 1
    %s59 = scalar_select %p56, %s57, %s58
    %p62 = pneg %p56
    %p63 = scmp.eq.s32.totalorder %s9, 48
    %p64 = por %p62, %p63
    %p65 = scmp.ne.s32.totalorder %s57, %s60
    %p66 = scmp.eq.s32.totalorder %s9, 0
    %p67 = por %p65, %p66
    %p68 = scmp.ne.s32.totalorder %s57, %s60
    %p69 = scmp.eq.s32.totalorder %s14, 48
    %p70 = por %p68, %p69
    %p71 = scmp.ne.s32.totalorder %s60, %s61
    %p72 = scmp.eq.s32.totalorder %s14, 0
    %p73 = por %p71, %p72
    %p74 = scmp.ne.s32.totalorder %s60, %s61
    %p75 = scmp.eq.s32.totalorder %s15, 48
    %p76 = por %p74, %p75
    %p78 = scmp.ne.s32.totalorder %s61, %s77
    %p79 = scmp.eq.s32.totalorder %s15, 0
    %p80 = por %p78, %p79
    %s81 = ssub.s32 %s17, %s24
    %p82 = scmp.eq.s32.totalorder %s81, 0
    %s84 = sadd.s32 %s83, 1
    %s85 = scalar_select %p82, %s83, %s84
    %p88 = pneg %p82
    %p89 = scmp.eq.s32.totalorder %s9, 48
    %p90 = por %p88, %p89
    %p91 = scmp.ne.s32.totalorder %s83, %s86
    %p92 = scmp.eq.s32.totalorder %s9, 0
    %p93 = por %p91, %p92
    %p94 = scmp.ne.s32.totalorder %s83, %s86
    %p95 = scmp.eq.s32.totalorder %s14, 48
    %p96 = por %p94, %p95
    %p97 = scmp.ne.s32.totalorder %s86, %s87
    %p98 = scmp.eq.s32.totalorder %s14, 0
    %p99 = por %p97, %p98
    %p100 = scmp.ne.s32.totalorder %s86, %s87
    %p101 = scmp.eq.s32.totalorder %s15, 48
    %p102 = por %p100, %p101
    %p104 = scmp.ne.s32.totalorder %s87, %s103
    %p105 = scmp.eq.s32.totalorder %s15, 0
    %p106 = por %p104, %p105
    %s107 = ssub.s32 %s16, %s28
    %p108 = scmp.eq.s32.totalorder %s107, 0
    %s110 = sadd.s32 %s109, 1
    %s111 = scalar_select %p108, %s109, %s110
    %p114 = pneg %p108
    %p115 = scmp.eq.s32.totalorder %s9, 48
    %p116 = por %p114, %p115
    %p117 = scmp.ne.s32.totalorder %s109, %s112
    %p118 = scmp.eq.s32.totalorder %s9, 0
    %p119 = por %p117, %p118
    %p120 = scmp.ne.s32.totalorder %s109, %s112
    %p121 = scmp.eq.s32.totalorder %s14, 48
    %p122 = por %p120, %p121
    %p123 = scmp.ne.s32.totalorder %s112, %s113
    %p124 = scmp.eq.s32.totalorder %s14, 0
    %p125 = por %p123, %p124
    %p126 = scmp.ne.s32.totalorder %s112, %s113
    %p127 = scmp.eq.s32.totalorder %s15, 48
    %p128 = por %p126, %p127
    %p130 = scmp.ne.s32.totalorder %s113, %s129
    %p131 = scmp.eq.s32.totalorder %s15, 0
    %p132 = por %p130, %p131
    %p133 = scmp.le.s32.totalorder 1, %s9
    %p134 = scmp.lt.s32.totalorder %s9, 50
    %p135 = pnand %p133, %p134
    %p136 = pneg %p135
    // Predicated region
    $region9: #{evoformer_forward.2} parent=5 // pred_check
      _
    $region10: #{evoformer_forward.2} parent=5 // pred_check_branch
      %138 = sbr.rel (%p135) target = $region12
    $region11: #{evoformer_forward.2} parent=5 // pred_region
      %s139 = ssub.s32 %s9, 1
      // Predicated region
      $region13: #{evoformer_forward.2} parent=11 // pred_check
        %p140 = pneg %p47
      $region14: #{evoformer_forward.2} parent=11 // pred_check_branch
        %142 = sbr.rel (%p140) target = $region16
      $region15: #{evoformer_forward.2} parent=11 // pred_region
        %s143 = smul.u32 32, %s18
        %p144 = scmp.lt.s32.totalorder %s143, 31
        %s145 = scalar_select %p144, %s143, 31
        %s146 = smul.addr %s145, 8
        %s147 = scalar_lea.vmem %s0, %s146
        %s148 = smul.u32 32, %s18
      $region16: #{evoformer_forward.2} parent=11 // pred_fallthru
        _
    $region12: #{evoformer_forward.2} parent=5 // pred_fallthru
      _
    %p149 = scmp.lt.s32.totalorder %s9, 49
    // Predicated region
    $region17: #{evoformer_forward.2} parent=5 // pred_check
      %p150 = pneg %p149
    $region18: #{evoformer_forward.2} parent=5 // pred_check_branch
      %152 = sbr.rel (%p150) target = $region20
    $region19: #{evoformer_forward.2} parent=5 // pred_region
      // Predicated region
      $region21: #{evoformer_forward.2} parent=19 // pred_check
        %p153 = pneg %p67
      $region22: #{evoformer_forward.2} parent=19 // pred_check_branch
        %155 = sbr.rel (%p153) target = $region24
      $region23: #{evoformer_forward.2} parent=19 // pred_region
        %p156 = scmp.lt.s32.totalorder %s17, 48
        %s157 = scalar_select %p156, %s17, 48
        %s158 = smul.addr %s157, 64
        %s159 = smul.addr %s158, 4
        %s160 = scalar_lea.vmem %s1, %s159
      $region24: #{evoformer_forward.2} parent=19 // pred_fallthru
        _
      // Predicated region
      $region25: #{evoformer_forward.2} parent=19 // pred_check
        %p161 = pneg %p93
      $region26: #{evoformer_forward.2} parent=19 // pred_check_branch
        %163 = sbr.rel (%p161) target = $region28
      $region27: #{evoformer_forward.2} parent=19 // pred_region
        %p164 = scmp.lt.s32.totalorder %s17, 48
        %s165 = scalar_select %p164, %s17, 48
        %s166 = smul.addr %s165, 64
        %s167 = smul.addr %s166, 4
        %s168 = scalar_lea.vmem %s2, %s167
      $region28: #{evoformer_forward.2} parent=19 // pred_fallthru
        _
    $region20: #{evoformer_forward.2} parent=5 // pred_fallthru
      _
    %p169 = scmp.le.s32.totalorder 1, %s9
    %p170 = scmp.lt.s32.totalorder %s9, 50
    %p171 = pnand %p169, %p170
    %p172 = pneg %p171
    // Predicated region
    $region29: #{evoformer_forward.2} parent=5 // pred_check
      _
    $region30: #{evoformer_forward.2} parent=5 // pred_check_branch
      %174 = sbr.rel (%p171) target = $region32
    $region31: #{evoformer_forward.2} parent=5 // pred_region
      %s175 = ssub.s32 %s9, 1
      %s176 = smul.u32 32, %s18
      %p177 = scmp.lt.s32.totalorder %s176, 31
      %s178 = scalar_select %p177, %s176, 31
      %s179 = smul.addr %s178, 8
      %s180 = scalar_lea.vmem %s0, %s179
      %p181 = pneg %p47
      %p182 = pneg %p44
      %p183 = scmp.lt.s32.totalorder %s19, 48
      %s184 = scalar_select %p183, %s19, 48
      %s185 = smul.addr %s184, 64
      %s186 = smul.addr %s185, 4
      %s187 = scalar_lea.vmem %s1, %s186
      %p188 = pneg %p73
      %p189 = pneg %p70
      %p190 = scmp.lt.s32.totalorder %s19, 48
      %s191 = scalar_select %p190, %s19, 48
      %s192 = smul.addr %s191, 64
      %s193 = smul.addr %s192, 4
      %s194 = scalar_lea.vmem %s2, %s193
      %p195 = pneg %p99
      %p196 = pneg %p96
      %p197 = pneg %p125
      %p198 = pneg %p122
      %s199 = smul.u32 32, %s18
      %p200 = scmp.lt.s32.totalorder %s199, 31
      %s201 = scalar_select %p200, %s199, 31
      %s202 = smul.addr %s201, 8
      %s203 = scalar_lea.vmem %s3, %s202
      %s204 = smul.u32 32, %s18
      %p205 = scmp.lt.s32.totalorder %s204, 31
      %s206 = scalar_select %p205, %s204, 31
      %s207 = smul.addr %s206, 8
      %s208 = scalar_lea.vmem %s0, %s207
      %s209 = smul.u32 32, %s18
      %p210 = scmp.lt.s32.totalorder %s19, 48
      %s211 = scalar_select %p210, %s19, 48
      %s212 = smul.addr %s211, 64
      %s213 = smul.addr %s212, 4
      %s214 = scalar_lea.vmem %s1, %s213
      %p215 = scmp.lt.s32.totalorder %s19, 48
      %s216 = scalar_select %p215, %s19, 48
      %s217 = smul.addr %s216, 64
      %s218 = smul.addr %s217, 4
      %s219 = scalar_lea.vmem %s2, %s218
      %s220 = smul.u32 32, %s18
      %p221 = scmp.lt.s32.totalorder %s220, 31
      %s222 = scalar_select %p221, %s220, 31
      %s223 = smul.addr %s222, 8
      %s224 = scalar_lea.vmem %s3, %s223
      %s225 = smul.u32 32, %s18
      %p227 = scmp.eq.s32.totalorder %s19, 0
      // Predicated region
      $region33: #{evoformer_forward.2} parent=31 // pred_check
        %p228 = pneg %p227
      $region34: #{evoformer_forward.2} parent=31 // pred_check_branch
        %230 = sbr.rel (%p228) target = $region36
      $region35: #{evoformer_forward.2} parent=31 // pred_region
        %v231 = vld [vmem:[%s208] sm:$0xff]
        %v232 = vld [vmem:[%s208 + $0x8] sm:$0xff]
        %v233 = vld [vmem:[%s208 + $0x10] sm:$0xff]
        %v234 = vld [vmem:[%s208 + $0x18] sm:$0xff]
        %v235 = vld [vmem:[%s208 + $0x20] sm:$0xff]
        %v236 = vld [vmem:[%s208 + $0x28] sm:$0xff]
        %v237 = vld [vmem:[%s208 + $0x30] sm:$0xff]
        %v238 = vld [vmem:[%s208 + $0x38] sm:$0xff]
        %v239 = vld [vmem:[%s208 + $0x40] sm:$0xff]
        %v240 = vld [vmem:[%s208 + $0x48] sm:$0xff]
        %v241 = vld [vmem:[%s208 + $0x50] sm:$0xff]
        %v242 = vld [vmem:[%s208 + $0x58] sm:$0xff]
        %v243 = vld [vmem:[%s208 + $0x60] sm:$0xff]
        %v244 = vld [vmem:[%s208 + $0x68] sm:$0xff]
        %v245 = vld [vmem:[%s208 + $0x70] sm:$0xff]
        %v246 = vld [vmem:[%s208 + $0x78] sm:$0xff]
        %v247 = vld [vmem:[%s208 + $0x80] sm:$0xff]
        %v248 = vld [vmem:[%s208 + $0x88] sm:$0xff]
        %v249 = vld [vmem:[%s208 + $0x90] sm:$0xff]
        %v250 = vld [vmem:[%s208 + $0x98] sm:$0xff]
        %v251 = vld [vmem:[%s208 + $0xa0] sm:$0xff]
        %v252 = vld [vmem:[%s208 + $0xa8] sm:$0xff]
        %v253 = vld [vmem:[%s208 + $0xb0] sm:$0xff]
        %v254 = vld [vmem:[%s208 + $0xb8] sm:$0xff]
        %v255 = vld [vmem:[%s208 + $0xc0] sm:$0xff]
        %v256 = vld [vmem:[%s208 + $0xc8] sm:$0xff]
        %v257 = vld [vmem:[%s208 + $0xd0] sm:$0xff]
        %v258 = vld [vmem:[%s208 + $0xd8] sm:$0xff]
        %v259 = vld [vmem:[%s208 + $0xe0] sm:$0xff]
        %v260 = vld [vmem:[%s208 + $0xe8] sm:$0xff]
        %v261 = vld [vmem:[%s208 + $0xf0] sm:$0xff]
        %v262 = vld [vmem:[%s208 + $0xf8] sm:$0xff]
        %263 = vst [vmem:[#allocation2] sm:$0xff] %v231
        %264 = vst [vmem:[#allocation2 + $0x8] sm:$0xff] %v232
        %265 = vst [vmem:[#allocation2 + $0x10] sm:$0xff] %v233
        %266 = vst [vmem:[#allocation2 + $0x18] sm:$0xff] %v234
        %267 = vst [vmem:[#allocation2 + $0x20] sm:$0xff] %v235
        %268 = vst [vmem:[#allocation2 + $0x28] sm:$0xff] %v236
        %269 = vst [vmem:[#allocation2 + $0x30] sm:$0xff] %v237
        %270 = vst [vmem:[#allocation2 + $0x38] sm:$0xff] %v238
        %271 = vst [vmem:[#allocation2 + $0x40] sm:$0xff] %v239
        %272 = vst [vmem:[#allocation2 + $0x48] sm:$0xff] %v240
        %273 = vst [vmem:[#allocation2 + $0x50] sm:$0xff] %v241
        %274 = vst [vmem:[#allocation2 + $0x58] sm:$0xff] %v242
        %275 = vst [vmem:[#allocation2 + $0x60] sm:$0xff] %v243
        %276 = vst [vmem:[#allocation2 + $0x68] sm:$0xff] %v244
        %277 = vst [vmem:[#allocation2 + $0x70] sm:$0xff] %v245
        %278 = vst [vmem:[#allocation2 + $0x78] sm:$0xff] %v246
        %279 = vst [vmem:[#allocation2 + $0x80] sm:$0xff] %v247
        %280 = vst [vmem:[#allocation2 + $0x88] sm:$0xff] %v248
        %281 = vst [vmem:[#allocation2 + $0x90] sm:$0xff] %v249
        %282 = vst [vmem:[#allocation2 + $0x98] sm:$0xff] %v250
        %283 = vst [vmem:[#allocation2 + $0xa0] sm:$0xff] %v251
        %284 = vst [vmem:[#allocation2 + $0xa8] sm:$0xff] %v252
        %285 = vst [vmem:[#allocation2 + $0xb0] sm:$0xff] %v253
        %286 = vst [vmem:[#allocation2 + $0xb8] sm:$0xff] %v254
        %287 = vst [vmem:[#allocation2 + $0xc0] sm:$0xff] %v255
        %288 = vst [vmem:[#allocation2 + $0xc8] sm:$0xff] %v256
        %289 = vst [vmem:[#allocation2 + $0xd0] sm:$0xff] %v257
        %290 = vst [vmem:[#allocation2 + $0xd8] sm:$0xff] %v258
        %291 = vst [vmem:[#allocation2 + $0xe0] sm:$0xff] %v259
        %292 = vst [vmem:[#allocation2 + $0xe8] sm:$0xff] %v260
        %293 = vst [vmem:[#allocation2 + $0xf0] sm:$0xff] %v261
        %294 = vst [vmem:[#allocation2 + $0xf8] sm:$0xff] %v262
      $region36: #{evoformer_forward.2} parent=31 // pred_fallthru
        _
      %v295 = vld [vmem:[#allocation2] sm:$0xff]
      %v296 = vld [vmem:[#allocation2 + $0x8] sm:$0xff]
      %v297 = vld [vmem:[#allocation2 + $0x10] sm:$0xff]
      %v298 = vld [vmem:[#allocation2 + $0x18] sm:$0xff]
      %v299 = vld [vmem:[#allocation2 + $0x20] sm:$0xff]
      %v300 = vld [vmem:[#allocation2 + $0x28] sm:$0xff]
      %v301 = vld [vmem:[#allocation2 + $0x30] sm:$0xff]
      %v302 = vld [vmem:[#allocation2 + $0x38] sm:$0xff]
      %v303 = vld [vmem:[#allocation2 + $0x40] sm:$0xff]
      %v304 = vld [vmem:[#allocation2 + $0x48] sm:$0xff]
      %v305 = vld [vmem:[#allocation2 + $0x50] sm:$0xff]
      %v306 = vld [vmem:[#allocation2 + $0x58] sm:$0xff]
      %v307 = vld [vmem:[#allocation2 + $0x60] sm:$0xff]
      %v308 = vld [vmem:[#allocation2 + $0x68] sm:$0xff]
      %v309 = vld [vmem:[#allocation2 + $0x70] sm:$0xff]
      %v310 = vld [vmem:[#allocation2 + $0x78] sm:$0xff]
      %v311 = vld [vmem:[#allocation2 + $0x80] sm:$0xff]
      %v312 = vld [vmem:[#allocation2 + $0x88] sm:$0xff]
      %v313 = vld [vmem:[#allocation2 + $0x90] sm:$0xff]
      %v314 = vld [vmem:[#allocation2 + $0x98] sm:$0xff]
      %v315 = vld [vmem:[#allocation2 + $0xa0] sm:$0xff]
      %v316 = vld [vmem:[#allocation2 + $0xa8] sm:$0xff]
      %v317 = vld [vmem:[#allocation2 + $0xb0] sm:$0xff]
      %v318 = vld [vmem:[#allocation2 + $0xb8] sm:$0xff]
      %v319 = vld [vmem:[#allocation2 + $0xc0] sm:$0xff]
      %v320 = vld [vmem:[#allocation2 + $0xc8] sm:$0xff]
      %v321 = vld [vmem:[#allocation2 + $0xd0] sm:$0xff]
      %v322 = vld [vmem:[#allocation2 + $0xd8] sm:$0xff]
      %v323 = vld [vmem:[#allocation2 + $0xe0] sm:$0xff]
      %v324 = vld [vmem:[#allocation2 + $0xe8] sm:$0xff]
      %v325 = vld [vmem:[#allocation2 + $0xf0] sm:$0xff]
      %v326 = vld [vmem:[#allocation2 + $0xf8] sm:$0xff]
      %v327 = vpack.c.bf16 %v296, %v295
      %v328 = vpack.c.bf16 %v298, %v297
      %v329 = vpack.c.bf16 %v300, %v299
      %v330 = vpack.c.bf16 %v302, %v301
      %v331 = vpack.c.bf16 %v304, %v303
      %v332 = vpack.c.bf16 %v306, %v305
      %v333 = vpack.c.bf16 %v308, %v307
      %v334 = vpack.c.bf16 %v310, %v309
      %v335 = vpack.c.bf16 %v312, %v311
      %v336 = vpack.c.bf16 %v314, %v313
      %v337 = vpack.c.bf16 %v316, %v315
      %v338 = vpack.c.bf16 %v318, %v317
      %v339 = vpack.c.bf16 %v320, %v319
      %v340 = vpack.c.bf16 %v322, %v321
      %v341 = vpack.c.bf16 %v324, %v323
      %v342 = vpack.c.bf16 %v326, %v325
      %v343 = vld [vmem:[%s214] sm:$0xff]
      %v344 = vld [vmem:[%s214 + $0x8] sm:$0xff]
      %v345 = vld [vmem:[%s214 + $0x10] sm:$0xff]
      %v346 = vld [vmem:[%s214 + $0x18] sm:$0xff]
      %v347 = vld [vmem:[%s214 + $0x20] sm:$0xff]
      %v348 = vld [vmem:[%s214 + $0x28] sm:$0xff]
      %v349 = vld [vmem:[%s214 + $0x30] sm:$0xff]
      %v350 = vld [vmem:[%s214 + $0x38] sm:$0xff]
      %v351 = vld [vmem:[%s214 + $0x40] sm:$0xff]
      %v352 = vld [vmem:[%s214 + $0x48] sm:$0xff]
      %v353 = vld [vmem:[%s214 + $0x50] sm:$0xff]
      %v354 = vld [vmem:[%s214 + $0x58] sm:$0xff]
      %v355 = vld [vmem:[%s214 + $0x60] sm:$0xff]
      %v356 = vld [vmem:[%s214 + $0x68] sm:$0xff]
      %v357 = vld [vmem:[%s214 + $0x70] sm:$0xff]
      %v358 = vld [vmem:[%s214 + $0x78] sm:$0xff]
      %v359 = vld [vmem:[%s214 + $0x80] sm:$0xff]
      %v360 = vld [vmem:[%s214 + $0x88] sm:$0xff]
      %v361 = vld [vmem:[%s214 + $0x90] sm:$0xff]
      %v362 = vld [vmem:[%s214 + $0x98] sm:$0xff]
      %v363 = vld [vmem:[%s214 + $0xa0] sm:$0xff]
      %v364 = vld [vmem:[%s214 + $0xa8] sm:$0xff]
      %v365 = vld [vmem:[%s214 + $0xb0] sm:$0xff]
      %v366 = vld [vmem:[%s214 + $0xb8] sm:$0xff]
      %v367 = vld [vmem:[%s214 + $0xc0] sm:$0xff]
      %v368 = vld [vmem:[%s214 + $0xc8] sm:$0xff]
      %v369 = vld [vmem:[%s214 + $0xd0] sm:$0xff]
      %v370 = vld [vmem:[%s214 + $0xd8] sm:$0xff]
      %v371 = vld [vmem:[%s214 + $0xe0] sm:$0xff]
      %v372 = vld [vmem:[%s214 + $0xe8] sm:$0xff]
      %v373 = vld [vmem:[%s214 + $0xf0] sm:$0xff]
      %v374 = vld [vmem:[%s214 + $0xf8] sm:$0xff]
      %v407 = vunpack.c.l.b16 %v343
      %v408 = vunpack.c.h.b16 %v343
      %v409 = vunpack.c.l.b16 %v344
      %v410 = vunpack.c.h.b16 %v344
      %v411 = vunpack.c.l.b16 %v345
      %v412 = vunpack.c.h.b16 %v345
      %v413 = vunpack.c.l.b16 %v346
      %v414 = vunpack.c.h.b16 %v346
      %v415 = vunpack.c.l.b16 %v347
      %v416 = vunpack.c.h.b16 %v347
      %v417 = vunpack.c.l.b16 %v348
      %v418 = vunpack.c.h.b16 %v348
      %v419 = vunpack.c.l.b16 %v349
      %v420 = vunpack.c.h.b16 %v349
      %v421 = vunpack.c.l.b16 %v350
      %v422 = vunpack.c.h.b16 %v350
      %v423 = vunpack.c.l.b16 %v351
      %v424 = vunpack.c.h.b16 %v351
      %v425 = vunpack.c.l.b16 %v352
      %v426 = vunpack.c.h.b16 %v352
      %v427 = vunpack.c.l.b16 %v353
      %v428 = vunpack.c.h.b16 %v353
      %v429 = vunpack.c.l.b16 %v354
      %v430 = vunpack.c.h.b16 %v354
      %v431 = vunpack.c.l.b16 %v355
      %v432 = vunpack.c.h.b16 %v355
      %v433 = vunpack.c.l.b16 %v356
      %v434 = vunpack.c.h.b16 %v356
      %v435 = vunpack.c.l.b16 %v357
      %v436 = vunpack.c.h.b16 %v357
      %v437 = vunpack.c.l.b16 %v358
      %v438 = vunpack.c.h.b16 %v358
      %v439 = vunpack.c.l.b16 %v359
      %v440 = vunpack.c.h.b16 %v359
      %v441 = vunpack.c.l.b16 %v360
      %v442 = vunpack.c.h.b16 %v360
      %v443 = vunpack.c.l.b16 %v361
      %v444 = vunpack.c.h.b16 %v361
      %v445 = vunpack.c.l.b16 %v362
      %v446 = vunpack.c.h.b16 %v362
      %v447 = vunpack.c.l.b16 %v363
      %v448 = vunpack.c.h.b16 %v363
      %v449 = vunpack.c.l.b16 %v364
      %v450 = vunpack.c.h.b16 %v364
      %v451 = vunpack.c.l.b16 %v365
      %v452 = vunpack.c.h.b16 %v365
      %v453 = vunpack.c.l.b16 %v366
      %v454 = vunpack.c.h.b16 %v366
      %v455 = vunpack.c.l.b16 %v367
      %v456 = vunpack.c.h.b16 %v367
      %v457 = vunpack.c.l.b16 %v368
      %v458 = vunpack.c.h.b16 %v368
      %v459 = vunpack.c.l.b16 %v369
      %v460 = vunpack.c.h.b16 %v369
      %v461 = vunpack.c.l.b16 %v370
      %v462 = vunpack.c.h.b16 %v370
      %v463 = vunpack.c.l.b16 %v371
      %v464 = vunpack.c.h.b16 %v371
      %v465 = vunpack.c.l.b16 %v372
      %v466 = vunpack.c.h.b16 %v372
      %v467 = vunpack.c.l.b16 %v373
      %v468 = vunpack.c.h.b16 %v373
      %v469 = vunpack.c.l.b16 %v374
      %v470 = vunpack.c.h.b16 %v374
      %v471 = vpack.c.b16 %v411, %v407
      %v472 = vpack.c.b16 %v412, %v408
      %v473 = vpack.c.b16 %v413, %v409
      %v474 = vpack.c.b16 %v414, %v410
      %v475 = vpack.c.b16 %v419, %v415
      %v476 = vpack.c.b16 %v420, %v416
      %v477 = vpack.c.b16 %v421, %v417
      %v478 = vpack.c.b16 %v422, %v418
      %v479 = vpack.c.b16 %v427, %v423
      %v480 = vpack.c.b16 %v428, %v424
      %v481 = vpack.c.b16 %v429, %v425
      %v482 = vpack.c.b16 %v430, %v426
      %v483 = vpack.c.b16 %v435, %v431
      %v484 = vpack.c.b16 %v436, %v432
      %v485 = vpack.c.b16 %v437, %v433
      %v486 = vpack.c.b16 %v438, %v434
      %v487 = vpack.c.b16 %v443, %v439
      %v488 = vpack.c.b16 %v444, %v440
      %v489 = vpack.c.b16 %v445, %v441
      %v490 = vpack.c.b16 %v446, %v442
      %v491 = vpack.c.b16 %v451, %v447
      %v492 = vpack.c.b16 %v452, %v448
      %v493 = vpack.c.b16 %v453, %v449
      %v494 = vpack.c.b16 %v454, %v450
      %v495 = vpack.c.b16 %v459, %v455
      %v496 = vpack.c.b16 %v460, %v456
      %v497 = vpack.c.b16 %v461, %v457
      %v498 = vpack.c.b16 %v462, %v458
      %v499 = vpack.c.b16 %v467, %v463
      %v500 = vpack.c.b16 %v468, %v464
      %v501 = vpack.c.b16 %v469, %v465
      %v502 = vpack.c.b16 %v470, %v466
      %535 = vmatprep.subr.bf16.mxu0 %v472
      %536 = vmatpush1.bf16.msra.mxu0 %v471
      %537 = vmatprep.subr.bf16.mxu0 %v476
      %538 = vmatpush1.bf16.msra.mxu0 %v475
      %539 = vmatprep.subr.bf16.mxu0 %v480
      %540 = vmatpush1.bf16.msra.mxu0 %v479
      %541 = vmatprep.subr.bf16.mxu0 %v484
      %542 = vmatpush1.bf16.msra.mxu0 %v483
      %543 = vmatprep.subr.bf16.mxu0 %v488
      %544 = vmatpush1.bf16.msra.mxu0 %v487
      %545 = vmatprep.subr.bf16.mxu0 %v492
      %546 = vmatpush1.bf16.msra.mxu0 %v491
      %547 = vmatprep.subr.bf16.mxu0 %v496
      %548 = vmatpush1.bf16.msra.mxu0 %v495
      %549 = vmatprep.subr.bf16.mxu0 %v500
      %550 = vmatpush1.bf16.msra.mxu0 %v499
      %551 = vmatprep.subr.bf16.mxu0 0
      %552 = vmatpush1.bf16.msra.mxu0 0
      %553 = vmatprep.subr.bf16.mxu0 0
      %554 = vmatpush1.bf16.msra.mxu0 0
      %555 = vmatprep.subr.bf16.mxu0 0
      %556 = vmatpush1.bf16.msra.mxu0 0
      %557 = vmatprep.subr.bf16.mxu0 0
      %558 = vmatpush1.bf16.msra.mxu0 0
      %559 = vmatprep.subr.bf16.mxu0 0
      %560 = vmatpush1.bf16.msra.mxu0 0
      %561 = vmatprep.subr.bf16.mxu0 0
      %562 = vmatpush1.bf16.msra.mxu0 0
      %563 = vmatprep.subr.bf16.mxu0 0
      %564 = vmatpush1.bf16.msra.mxu0 0
      %565 = vmatprep.subr.bf16.mxu0 0
      %566 = vmatpush1.bf16.msra.mxu0 0
      %567 = vmatprep.mubr.bf16.mxu0 0
      %568 = vmatmul.mubr.bf16.gmra.mrb[0].mxu0 %v327
      %v569 = vpop.f32.mrb[0].mxu0
      %v570 = vadd.f32 0.0, %v569
      %v571 = vpop.f32.mrb[0].mxu0
      %v572 = vadd.f32 0.0, %v571
      %v573 = vpop.f32.mrb[0].mxu0
      %v574 = vadd.f32 0.0, %v573
      %v575 = vpop.f32.mrb[0].mxu0
      %v576 = vadd.f32 0.0, %v575
      %577 = vmatprep.mubr.bf16.mxu0 0
      %578 = vmatmul.mubr.bf16.gmra.mrb[0].mxu0 %v328
      %v579 = vpop.f32.mrb[0].mxu0
      %v580 = vadd.f32 0.0, %v579
      %v581 = vpop.f32.mrb[0].mxu0
      %v582 = vadd.f32 0.0, %v581
      %v583 = vpop.f32.mrb[0].mxu0
      %v584 = vadd.f32 0.0, %v583
      %v585 = vpop.f32.mrb[0].mxu0
      %v586 = vadd.f32 0.0, %v585
      %587 = vmatprep.mubr.bf16.mxu0 0
      %588 = vmatmul.mubr.bf16.gmra.mrb[0].mxu0 %v329
      %v589 = vpop.f32.mrb[0].mxu0
      %v590 = vadd.f32 0.0, %v589
      %v591 = vpop.f32.mrb[0].mxu0
      %v592 = vadd.f32 0.0, %v591
      %v593 = vpop.f32.mrb[0].mxu0
      %v594 = vadd.f32 0.0, %v593
      %v595 = vpop.f32.mrb[0].mxu0
      %v596 = vadd.f32 0.0, %v595
      %597 = vmatprep.mubr.bf16.mxu0 0
      %598 = vmatmul.mubr.bf16.gmra.mrb[0].mxu0 %v330
      %v599 = vpop.f32.mrb[0].mxu0
      %v600 = vadd.f32 0.0, %v599
      %v601 = vpop.f32.mrb[0].mxu0
      %v602 = vadd.f32 0.0, %v601
      %v603 = vpop.f32.mrb[0].mxu0
      %v604 = vadd.f32 0.0, %v603
      %v605 = vpop.f32.mrb[0].mxu0
      %v606 = vadd.f32 0.0, %v605
      %607 = vmatprep.mubr.bf16.mxu0 0
      %608 = vmatmul.mubr.bf16.gmra.mrb[0].mxu0 %v331
      %v609 = vpop.f32.mrb[0].mxu0
      %v610 = vadd.f32 0.0, %v609
      %v611 = vpop.f32.mrb[0].mxu0
      %v612 = vadd.f32 0.0, %v611
      %v613 = vpop.f32.mrb[0].mxu0
      %v614 = vadd.f32 0.0, %v613
      %v615 = vpop.f32.mrb[0].mxu0
      %v616 = vadd.f32 0.0, %v615
      %617 = vmatprep.mubr.bf16.mxu0 0
      %618 = vmatmul.mubr.bf16.gmra.mrb[0].mxu0 %v332
      %v619 = vpop.f32.mrb[0].mxu0
      %v620 = vadd.f32 0.0, %v619
      %v621 = vpop.f32.mrb[0].mxu0
      %v622 = vadd.f32 0.0, %v621
      %v623 = vpop.f32.mrb[0].mxu0
      %v624 = vadd.f32 0.0, %v623
      %v625 = vpop.f32.mrb[0].mxu0
      %v626 = vadd.f32 0.0, %v625
      %627 = vmatprep.mubr.bf16.mxu0 0
      %628 = vmatmul.mubr.bf16.gmra.mrb[0].mxu0 %v333
      %v629 = vpop.f32.mrb[0].mxu0
      %v630 = vadd.f32 0.0, %v629
      %v631 = vpop.f32.mrb[0].mxu0
      %v632 = vadd.f32 0.0, %v631
      %v633 = vpop.f32.mrb[0].mxu0
      %v634 = vadd.f32 0.0, %v633
      %v635 = vpop.f32.mrb[0].mxu0
      %v636 = vadd.f32 0.0, %v635
      %637 = vmatprep.mubr.bf16.mxu0 0
      %638 = vmatmul.mubr.bf16.gmra.mrb[0].mxu0 %v334
      %v639 = vpop.f32.mrb[0].mxu0
      %v640 = vadd.f32 0.0, %v639
      %v641 = vpop.f32.mrb[0].mxu0
      %v642 = vadd.f32 0.0, %v641
      %v643 = vpop.f32.mrb[0].mxu0
      %v644 = vadd.f32 0.0, %v643
      %v645 = vpop.f32.mrb[0].mxu0
      %v646 = vadd.f32 0.0, %v645
      %647 = vmatprep.mubr.bf16.mxu0 0
      %648 = vmatmul.mubr.bf16.gmra.mrb[0].mxu0 %v335
      %v649 = vpop.f32.mrb[0].mxu0
      %v650 = vadd.f32 0.0, %v649
      %v651 = vpop.f32.mrb[0].mxu0
      %v652 = vadd.f32 0.0, %v651
      %v653 = vpop.f32.mrb[0].mxu0
      %v654 = vadd.f32 0.0, %v653
      %v655 = vpop.f32.mrb[0].mxu0
      %v656 = vadd.f32 0.0, %v655
      %657 = vmatprep.mubr.bf16.mxu0 0
      %658 = vmatmul.mubr.bf16.gmra.mrb[0].mxu0 %v336
      %v659 = vpop.f32.mrb[0].mxu0
      %v660 = vadd.f32 0.0, %v659
      %v661 = vpop.f32.mrb[0].mxu0
      %v662 = vadd.f32 0.0, %v661
      %v663 = vpop.f32.mrb[0].mxu0
      %v664 = vadd.f32 0.0, %v663
      %v665 = vpop.f32.mrb[0].mxu0
      %v666 = vadd.f32 0.0, %v665
      %667 = vmatprep.mubr.bf16.mxu0 0
      %668 = vmatmul.mubr.bf16.gmra.mrb[0].mxu0 %v337
      %v669 = vpop.f32.mrb[0].mxu0
      %v670 = vadd.f32 0.0, %v669
      %v671 = vpop.f32.mrb[0].mxu0
      %v672 = vadd.f32 0.0, %v671
      %v673 = vpop.f32.mrb[0].mxu0
      %v674 = vadd.f32 0.0, %v673
      %v675 = vpop.f32.mrb[0].mxu0
      %v676 = vadd.f32 0.0, %v675
      %677 = vmatprep.mubr.bf16.mxu0 0
      %678 = vmatmul.mubr.bf16.gmra.mrb[0].mxu0 %v338
      %v679 = vpop.f32.mrb[0].mxu0
      %v680 = vadd.f32 0.0, %v679
      %v681 = vpop.f32.mrb[0].mxu0
      %v682 = vadd.f32 0.0, %v681
      %v683 = vpop.f32.mrb[0].mxu0
      %v684 = vadd.f32 0.0, %v683
      %v685 = vpop.f32.mrb[0].mxu0
      %v686 = vadd.f32 0.0, %v685
      %687 = vmatprep.mubr.bf16.mxu0 0
      %688 = vmatmul.mubr.bf16.gmra.mrb[0].mxu0 %v339
      %v689 = vpop.f32.mrb[0].mxu0
      %v690 = vadd.f32 0.0, %v689
      %v691 = vpop.f32.mrb[0].mxu0
      %v692 = vadd.f32 0.0, %v691
      %v693 = vpop.f32.mrb[0].mxu0
      %v694 = vadd.f32 0.0, %v693
      %v695 = vpop.f32.mrb[0].mxu0
      %v696 = vadd.f32 0.0, %v695
      %697 = vmatprep.mubr.bf16.mxu0 0
      %698 = vmatmul.mubr.bf16.gmra.mrb[0].mxu0 %v340
      %v699 = vpop.f32.mrb[0].mxu0
      %v700 = vadd.f32 0.0, %v699
      %v701 = vpop.f32.mrb[0].mxu0
      %v702 = vadd.f32 0.0, %v701
      %v703 = vpop.f32.mrb[0].mxu0
      %v704 = vadd.f32 0.0, %v703
      %v705 = vpop.f32.mrb[0].mxu0
      %v706 = vadd.f32 0.0, %v705
      %707 = vmatprep.mubr.bf16.mxu0 0
      %708 = vmatmul.mubr.bf16.gmra.mrb[0].mxu0 %v341
      %v709 = vpop.f32.mrb[0].mxu0
      %v710 = vadd.f32 0.0, %v709
      %v711 = vpop.f32.mrb[0].mxu0
      %v712 = vadd.f32 0.0, %v711
      %v713 = vpop.f32.mrb[0].mxu0
      %v714 = vadd.f32 0.0, %v713
      %v715 = vpop.f32.mrb[0].mxu0
      %v716 = vadd.f32 0.0, %v715
      %717 = vmatprep.mubr.bf16.mxu0 0
      %718 = vmatmul.mubr.bf16.gmra.mrb[0].mxu0 %v342
      %v719 = vpop.f32.mrb[0].mxu0
      %v720 = vadd.f32 0.0, %v719
      %v721 = vpop.f32.mrb[0].mxu0
      %v722 = vadd.f32 0.0, %v721
      %v723 = vpop.f32.mrb[0].mxu0
      %v724 = vadd.f32 0.0, %v723
      %v725 = vpop.f32.mrb[0].mxu0
      %v726 = vadd.f32 0.0, %v725
      %727 = vdwg.mxu0
      %728 = vmatprep.subr.bf16.mxu0 %v474
      %729 = vmatpush1.bf16.msra.mxu0 %v473
      %730 = vmatprep.subr.bf16.mxu0 %v478
      %731 = vmatpush1.bf16.msra.mxu0 %v477
      %732 = vmatprep.subr.bf16.mxu0 %v482
      %733 = vmatpush1.bf16.msra.mxu0 %v481
      %734 = vmatprep.subr.bf16.mxu0 %v486
      %735 = vmatpush1.bf16.msra.mxu0 %v485
      %736 = vmatprep.subr.bf16.mxu0 %v490
      %737 = vmatpush1.bf16.msra.mxu0 %v489
      %738 = vmatprep.subr.bf16.mxu0 %v494
      %739 = vmatpush1.bf16.msra.mxu0 %v493
      %740 = vmatprep.subr.bf16.mxu0 %v498
      %741 = vmatpush1.bf16.msra.mxu0 %v497
      %742 = vmatprep.subr.bf16.mxu0 %v502
      %743 = vmatpush1.bf16.msra.mxu0 %v501
      %744 = vmatprep.subr.bf16.mxu0 0
      %745 = vmatpush1.bf16.msra.mxu0 0
      %746 = vmatprep.subr.bf16.mxu0 0
      %747 = vmatpush1.bf16.msra.mxu0 0
      %748 = vmatprep.subr.bf16.mxu0 0
      %749 = vmatpush1.bf16.msra.mxu0 0
      %750 = vmatprep.subr.bf16.mxu0 0
      %751 = vmatpush1.bf16.msra.mxu0 0
      %752 = vmatprep.subr.bf16.mxu0 0
      %753 = vmatpush1.bf16.msra.mxu0 0
      %754 = vmatprep.subr.bf16.mxu0 0
      %755 = vmatpush1.bf16.msra.mxu0 0
      %756 = vmatprep.subr.bf16.mxu0 0
      %757 = vmatpush1.bf16.msra.mxu0 0
      %758 = vmatprep.subr.bf16.mxu0 0
      %759 = vmatpush1.bf16.msra.mxu0 0
      %760 = vmatprep.mubr.bf16.mxu0 0
      %761 = vmatmul.mubr.bf16.gmra.mrb[0].mxu0 %v327
      %v762 = vpop.f32.mrb[0].mxu0
      %v763 = vadd.f32 0.0, %v762
      %v764 = vpop.f32.mrb[0].mxu0
      %v765 = vadd.f32 0.0, %v764
      %v766 = vpop.f32.mrb[0].mxu0
      %v767 = vadd.f32 0.0, %v766
      %v768 = vpop.f32.mrb[0].mxu0
      %v769 = vadd.f32 0.0, %v768
      %770 = vmatprep.mubr.bf16.mxu0 0
      %771 = vmatmul.mubr.bf16.gmra.mrb[0].mxu0 %v328
      %v772 = vpop.f32.mrb[0].mxu0
      %v773 = vadd.f32 0.0, %v772
      %v774 = vpop.f32.mrb[0].mxu0
      %v775 = vadd.f32 0.0, %v774
      %v776 = vpop.f32.mrb[0].mxu0
      %v777 = vadd.f32 0.0, %v776
      %v778 = vpop.f32.mrb[0].mxu0
      %v779 = vadd.f32 0.0, %v778
      %780 = vmatprep.mubr.bf16.mxu0 0
      %781 = vmatmul.mubr.bf16.gmra.mrb[0].mxu0 %v329
      %v782 = vpop.f32.mrb[0].mxu0
      %v783 = vadd.f32 0.0, %v782
      %v784 = vpop.f32.mrb[0].mxu0
      %v785 = vadd.f32 0.0, %v784
      %v786 = vpop.f32.mrb[0].mxu0
      %v787 = vadd.f32 0.0, %v786
      %v788 = vpop.f32.mrb[0].mxu0
      %v789 = vadd.f32 0.0, %v788
      %790 = vmatprep.mubr.bf16.mxu0 0
      %791 = vmatmul.mubr.bf16.gmra.mrb[0].mxu0 %v330
      %v792 = vpop.f32.mrb[0].mxu0
      %v793 = vadd.f32 0.0, %v792
      %v794 = vpop.f32.mrb[0].mxu0
      %v795 = vadd.f32 0.0, %v794
      %v796 = vpop.f32.mrb[0].mxu0
      %v797 = vadd.f32 0.0, %v796
      %v798 = vpop.f32.mrb[0].mxu0
      %v799 = vadd.f32 0.0, %v798
      %800 = vmatprep.mubr.bf16.mxu0 0
      %801 = vmatmul.mubr.bf16.gmra.mrb[0].mxu0 %v331
      %v802 = vpop.f32.mrb[0].mxu0
      %v803 = vadd.f32 0.0, %v802
      %v804 = vpop.f32.mrb[0].mxu0
      %v805 = vadd.f32 0.0, %v804
      %v806 = vpop.f32.mrb[0].mxu0
      %v807 = vadd.f32 0.0, %v806
      %v808 = vpop.f32.mrb[0].mxu0
      %v809 = vadd.f32 0.0, %v808
      %810 = vmatprep.mubr.bf16.mxu0 0
      %811 = vmatmul.mubr.bf16.gmra.mrb[0].mxu0 %v332
      %v812 = vpop.f32.mrb[0].mxu0
      %v813 = vadd.f32 0.0, %v812
      %v814 = vpop.f32.mrb[0].mxu0
      %v815 = vadd.f32 0.0, %v814
      %v816 = vpop.f32.mrb[0].mxu0
      %v817 = vadd.f32 0.0, %v816
      %v818 = vpop.f32.mrb[0].mxu0
      %v819 = vadd.f32 0.0, %v818
      %820 = vmatprep.mubr.bf16.mxu0 0
      %821 = vmatmul.mubr.bf16.gmra.mrb[0].mxu0 %v333
      %v822 = vpop.f32.mrb[0].mxu0
      %v823 = vadd.f32 0.0, %v822
      %v824 = vpop.f32.mrb[0].mxu0
      %v825 = vadd.f32 0.0, %v824
      %v826 = vpop.f32.mrb[0].mxu0
      %v827 = vadd.f32 0.0, %v826
      %v828 = vpop.f32.mrb[0].mxu0
      %v829 = vadd.f32 0.0, %v828
      %830 = vmatprep.mubr.bf16.mxu0 0
      %831 = vmatmul.mubr.bf16.gmra.mrb[0].mxu0 %v334
      %v832 = vpop.f32.mrb[0].mxu0
      %v833 = vadd.f32 0.0, %v832
      %v834 = vpop.f32.mrb[0].mxu0
      %v835 = vadd.f32 0.0, %v834
      %v836 = vpop.f32.mrb[0].mxu0
      %v837 = vadd.f32 0.0, %v836
      %v838 = vpop.f32.mrb[0].mxu0
      %v839 = vadd.f32 0.0, %v838
      %840 = vmatprep.mubr.bf16.mxu0 0
      %841 = vmatmul.mubr.bf16.gmra.mrb[0].mxu0 %v335
      %v842 = vpop.f32.mrb[0].mxu0
      %v843 = vadd.f32 0.0, %v842
      %v844 = vpop.f32.mrb[0].mxu0
      %v845 = vadd.f32 0.0, %v844
      %v846 = vpop.f32.mrb[0].mxu0
      %v847 = vadd.f32 0.0, %v846
      %v848 = vpop.f32.mrb[0].mxu0
      %v849 = vadd.f32 0.0, %v848
      %850 = vmatprep.mubr.bf16.mxu0 0
      %851 = vmatmul.mubr.bf16.gmra.mrb[0].mxu0 %v336
      %v852 = vpop.f32.mrb[0].mxu0
      %v853 = vadd.f32 0.0, %v852
      %v854 = vpop.f32.mrb[0].mxu0
      %v855 = vadd.f32 0.0, %v854
      %v856 = vpop.f32.mrb[0].mxu0
      %v857 = vadd.f32 0.0, %v856
      %v858 = vpop.f32.mrb[0].mxu0
      %v859 = vadd.f32 0.0, %v858
      %860 = vmatprep.mubr.bf16.mxu0 0
      %861 = vmatmul.mubr.bf16.gmra.mrb[0].mxu0 %v337
      %v862 = vpop.f32.mrb[0].mxu0
      %v863 = vadd.f32 0.0, %v862
      %v864 = vpop.f32.mrb[0].mxu0
      %v865 = vadd.f32 0.0, %v864
      %v866 = vpop.f32.mrb[0].mxu0
      %v867 = vadd.f32 0.0, %v866
      %v868 = vpop.f32.mrb[0].mxu0
      %v869 = vadd.f32 0.0, %v868
      %870 = vmatprep.mubr.bf16.mxu0 0
      %871 = vmatmul.mubr.bf16.gmra.mrb[0].mxu0 %v338
      %v872 = vpop.f32.mrb[0].mxu0
      %v873 = vadd.f32 0.0, %v872
      %v874 = vpop.f32.mrb[0].mxu0
      %v875 = vadd.f32 0.0, %v874
      %v876 = vpop.f32.mrb[0].mxu0
      %v877 = vadd.f32 0.0, %v876
      %v878 = vpop.f32.mrb[0].mxu0
      %v879 = vadd.f32 0.0, %v878
      %880 = vmatprep.mubr.bf16.mxu0 0
      %881 = vmatmul.mubr.bf16.gmra.mrb[0].mxu0 %v339
      %v882 = vpop.f32.mrb[0].mxu0
      %v883 = vadd.f32 0.0, %v882
      %v884 = vpop.f32.mrb[0].mxu0
      %v885 = vadd.f32 0.0, %v884
      %v886 = vpop.f32.mrb[0].mxu0
      %v887 = vadd.f32 0.0, %v886
      %v888 = vpop.f32.mrb[0].mxu0
      %v889 = vadd.f32 0.0, %v888
      %890 = vmatprep.mubr.bf16.mxu0 0
      %891 = vmatmul.mubr.bf16.gmra.mrb[0].mxu0 %v340
      %v892 = vpop.f32.mrb[0].mxu0
      %v893 = vadd.f32 0.0, %v892
      %v894 = vpop.f32.mrb[0].mxu0
      %v895 = vadd.f32 0.0, %v894
      %v896 = vpop.f32.mrb[0].mxu0
      %v897 = vadd.f32 0.0, %v896
      %v898 = vpop.f32.mrb[0].mxu0
      %v899 = vadd.f32 0.0, %v898
      %900 = vmatprep.mubr.bf16.mxu0 0
      %901 = vmatmul.mubr.bf16.gmra.mrb[0].mxu0 %v341
      %v902 = vpop.f32.mrb[0].mxu0
      %v903 = vadd.f32 0.0, %v902
      %v904 = vpop.f32.mrb[0].mxu0
      %v905 = vadd.f32 0.0, %v904
      %v906 = vpop.f32.mrb[0].mxu0
      %v907 = vadd.f32 0.0, %v906
      %v908 = vpop.f32.mrb[0].mxu0
      %v909 = vadd.f32 0.0, %v908
      %910 = vmatprep.mubr.bf16.mxu0 0
      %911 = vmatmul.mubr.bf16.gmra.mrb[0].mxu0 %v342
      %v912 = vpop.f32.mrb[0].mxu0
      %v913 = vadd.f32 0.0, %v912
      %v914 = vpop.f32.mrb[0].mxu0
      %v915 = vadd.f32 0.0, %v914
      %v916 = vpop.f32.mrb[0].mxu0
      %v917 = vadd.f32 0.0, %v916
      %v918 = vpop.f32.mrb[0].mxu0
      %v919 = vadd.f32 0.0, %v918
      %920 = vdwg.mxu0
      %v921 = vmax.f32 %v570, 0.0
      %v922 = vmax.f32 %v572, 0.0
      %v923 = vmax.f32 %v763, 0.0
      %v924 = vmax.f32 %v765, 0.0
      %v925 = vmax.f32 %v574, 0.0
      %v926 = vmax.f32 %v576, 0.0
      %v927 = vmax.f32 %v767, 0.0
      %v928 = vmax.f32 %v769, 0.0
      %v929 = vmax.f32 %v580, 0.0
      %v930 = vmax.f32 %v582, 0.0
      %v931 = vmax.f32 %v773, 0.0
      %v932 = vmax.f32 %v775, 0.0
      %v933 = vmax.f32 %v584, 0.0
      %v934 = vmax.f32 %v586, 0.0
      %v935 = vmax.f32 %v777, 0.0
      %v936 = vmax.f32 %v779, 0.0
      %v937 = vmax.f32 %v590, 0.0
      %v938 = vmax.f32 %v592, 0.0
      %v939 = vmax.f32 %v783, 0.0
      %v940 = vmax.f32 %v785, 0.0
      %v941 = vmax.f32 %v594, 0.0
      %v942 = vmax.f32 %v596, 0.0
      %v943 = vmax.f32 %v787, 0.0
      %v944 = vmax.f32 %v789, 0.0
      %v945 = vmax.f32 %v600, 0.0
      %v946 = vmax.f32 %v602, 0.0
      %v947 = vmax.f32 %v793, 0.0
      %v948 = vmax.f32 %v795, 0.0
      %v949 = vmax.f32 %v604, 0.0
      %v950 = vmax.f32 %v606, 0.0
      %v951 = vmax.f32 %v797, 0.0
      %v952 = vmax.f32 %v799, 0.0
      %v953 = vmax.f32 %v610, 0.0
      %v954 = vmax.f32 %v612, 0.0
      %v955 = vmax.f32 %v803, 0.0
      %v956 = vmax.f32 %v805, 0.0
      %v957 = vmax.f32 %v614, 0.0
      %v958 = vmax.f32 %v616, 0.0
      %v959 = vmax.f32 %v807, 0.0
      %v960 = vmax.f32 %v809, 0.0
      %v961 = vmax.f32 %v620, 0.0
      %v962 = vmax.f32 %v622, 0.0
      %v963 = vmax.f32 %v813, 0.0
      %v964 = vmax.f32 %v815, 0.0
      %v965 = vmax.f32 %v624, 0.0
      %v966 = vmax.f32 %v626, 0.0
      %v967 = vmax.f32 %v817, 0.0
      %v968 = vmax.f32 %v819, 0.0
      %v969 = vmax.f32 %v630, 0.0
      %v970 = vmax.f32 %v632, 0.0
      %v971 = vmax.f32 %v823, 0.0
      %v972 = vmax.f32 %v825, 0.0
      %v973 = vmax.f32 %v634, 0.0
      %v974 = vmax.f32 %v636, 0.0
      %v975 = vmax.f32 %v827, 0.0
      %v976 = vmax.f32 %v829, 0.0
      %v977 = vmax.f32 %v640, 0.0
      %v978 = vmax.f32 %v642, 0.0
      %v979 = vmax.f32 %v833, 0.0
      %v980 = vmax.f32 %v835, 0.0
      %v981 = vmax.f32 %v644, 0.0
      %v982 = vmax.f32 %v646, 0.0
      %v983 = vmax.f32 %v837, 0.0
      %v984 = vmax.f32 %v839, 0.0
      %v985 = vmax.f32 %v650, 0.0
      %v986 = vmax.f32 %v652, 0.0
      %v987 = vmax.f32 %v843, 0.0
      %v988 = vmax.f32 %v845, 0.0
      %v989 = vmax.f32 %v654, 0.0
      %v990 = vmax.f32 %v656, 0.0
      %v991 = vmax.f32 %v847, 0.0
      %v992 = vmax.f32 %v849, 0.0
      %v993 = vmax.f32 %v660, 0.0
      %v994 = vmax.f32 %v662, 0.0
      %v995 = vmax.f32 %v853, 0.0
      %v996 = vmax.f32 %v855, 0.0
      %v997 = vmax.f32 %v664, 0.0
      %v998 = vmax.f32 %v666, 0.0
      %v999 = vmax.f32 %v857, 0.0
      %v1000 = vmax.f32 %v859, 0.0
      %v1001 = vmax.f32 %v670, 0.0
      %v1002 = vmax.f32 %v672, 0.0
      %v1003 = vmax.f32 %v863, 0.0
      %v1004 = vmax.f32 %v865, 0.0
      %v1005 = vmax.f32 %v674, 0.0
      %v1006 = vmax.f32 %v676, 0.0
      %v1007 = vmax.f32 %v867, 0.0
      %v1008 = vmax.f32 %v869, 0.0
      %v1009 = vmax.f32 %v680, 0.0
      %v1010 = vmax.f32 %v682, 0.0
      %v1011 = vmax.f32 %v873, 0.0
      %v1012 = vmax.f32 %v875, 0.0
      %v1013 = vmax.f32 %v684, 0.0
      %v1014 = vmax.f32 %v686, 0.0
      %v1015 = vmax.f32 %v877, 0.0
      %v1016 = vmax.f32 %v879, 0.0
      %v1017 = vmax.f32 %v690, 0.0
      %v1018 = vmax.f32 %v692, 0.0
      %v1019 = vmax.f32 %v883, 0.0
      %v1020 = vmax.f32 %v885, 0.0
      %v1021 = vmax.f32 %v694, 0.0
      %v1022 = vmax.f32 %v696, 0.0
      %v1023 = vmax.f32 %v887, 0.0
      %v1024 = vmax.f32 %v889, 0.0
      %v1025 = vmax.f32 %v700, 0.0
      %v1026 = vmax.f32 %v702, 0.0
      %v1027 = vmax.f32 %v893, 0.0
      %v1028 = vmax.f32 %v895, 0.0
      %v1029 = vmax.f32 %v704, 0.0
      %v1030 = vmax.f32 %v706, 0.0
      %v1031 = vmax.f32 %v897, 0.0
      %v1032 = vmax.f32 %v899, 0.0
      %v1033 = vmax.f32 %v710, 0.0
      %v1034 = vmax.f32 %v712, 0.0
      %v1035 = vmax.f32 %v903, 0.0
      %v1036 = vmax.f32 %v905, 0.0
      %v1037 = vmax.f32 %v714, 0.0
      %v1038 = vmax.f32 %v716, 0.0
      %v1039 = vmax.f32 %v907, 0.0
      %v1040 = vmax.f32 %v909, 0.0
      %v1041 = vmax.f32 %v720, 0.0
      %v1042 = vmax.f32 %v722, 0.0
      %v1043 = vmax.f32 %v913, 0.0
      %v1044 = vmax.f32 %v915, 0.0
      %v1045 = vmax.f32 %v724, 0.0
      %v1046 = vmax.f32 %v726, 0.0
      %v1047 = vmax.f32 %v917, 0.0
      %v1048 = vmax.f32 %v919, 0.0
      %v1049 = vpack.c.bf16 %v925, %v921
      %v1050 = vpack.c.bf16 %v926, %v922
      %v1051 = vpack.c.bf16 %v927, %v923
      %v1052 = vpack.c.bf16 %v928, %v924
      %v1053 = vpack.c.bf16 %v933, %v929
      %v1054 = vpack.c.bf16 %v934, %v930
      %v1055 = vpack.c.bf16 %v935, %v931
      %v1056 = vpack.c.bf16 %v936, %v932
      %v1057 = vpack.c.bf16 %v941, %v937
      %v1058 = vpack.c.bf16 %v942, %v938
      %v1059 = vpack.c.bf16 %v943, %v939
      %v1060 = vpack.c.bf16 %v944, %v940
      %v1061 = vpack.c.bf16 %v949, %v945
      %v1062 = vpack.c.bf16 %v950, %v946
      %v1063 = vpack.c.bf16 %v951, %v947
      %v1064 = vpack.c.bf16 %v952, %v948
      %v1065 = vpack.c.bf16 %v957, %v953
      %v1066 = vpack.c.bf16 %v958, %v954
      %v1067 = vpack.c.bf16 %v959, %v955
      %v1068 = vpack.c.bf16 %v960, %v956
      %v1069 = vpack.c.bf16 %v965, %v961
      %v1070 = vpack.c.bf16 %v966, %v962
      %v1071 = vpack.c.bf16 %v967, %v963
      %v1072 = vpack.c.bf16 %v968, %v964
      %v1073 = vpack.c.bf16 %v973, %v969
      %v1074 = vpack.c.bf16 %v974, %v970
      %v1075 = vpack.c.bf16 %v975, %v971
      %v1076 = vpack.c.bf16 %v976, %v972
      %v1077 = vpack.c.bf16 %v981, %v977
      %v1078 = vpack.c.bf16 %v982, %v978
      %v1079 = vpack.c.bf16 %v983, %v979
      %v1080 = vpack.c.bf16 %v984, %v980
      %v1081 = vpack.c.bf16 %v989, %v985
      %v1082 = vpack.c.bf16 %v990, %v986
      %v1083 = vpack.c.bf16 %v991, %v987
      %v1084 = vpack.c.bf16 %v992, %v988
      %v1085 = vpack.c.bf16 %v997, %v993
      %v1086 = vpack.c.bf16 %v998, %v994
      %v1087 = vpack.c.bf16 %v999, %v995
      %v1088 = vpack.c.bf16 %v1000, %v996
      %v1089 = vpack.c.bf16 %v1005, %v1001
      %v1090 = vpack.c.bf16 %v1006, %v1002
      %v1091 = vpack.c.bf16 %v1007, %v1003
      %v1092 = vpack.c.bf16 %v1008, %v1004
      %v1093 = vpack.c.bf16 %v1013, %v1009
      %v1094 = vpack.c.bf16 %v1014, %v1010
      %v1095 = vpack.c.bf16 %v1015, %v1011
      %v1096 = vpack.c.bf16 %v1016, %v1012
      %v1097 = vpack.c.bf16 %v1021, %v1017
      %v1098 = vpack.c.bf16 %v1022, %v1018
      %v1099 = vpack.c.bf16 %v1023, %v1019
      %v1100 = vpack.c.bf16 %v1024, %v1020
      %v1101 = vpack.c.bf16 %v1029, %v1025
      %v1102 = vpack.c.bf16 %v1030, %v1026
      %v1103 = vpack.c.bf16 %v1031, %v1027
      %v1104 = vpack.c.bf16 %v1032, %v1028
      %v1105 = vpack.c.bf16 %v1037, %v1033
      %v1106 = vpack.c.bf16 %v1038, %v1034
      %v1107 = vpack.c.bf16 %v1039, %v1035
      %v1108 = vpack.c.bf16 %v1040, %v1036
      %v1109 = vpack.c.bf16 %v1045, %v1041
      %v1110 = vpack.c.bf16 %v1046, %v1042
      %v1111 = vpack.c.bf16 %v1047, %v1043
      %v1112 = vpack.c.bf16 %v1048, %v1044
      %v1113 = vld [vmem:[%s219] sm:$0xf]
      %v1114 = vld [vmem:[%s219 + $0x4] sm:$0xf]
      %v1115 = vld [vmem:[%s219 + $0x8] sm:$0xf]
      %v1116 = vld [vmem:[%s219 + $0xc] sm:$0xf]
      %v1117 = vld [vmem:[%s219 + $0x10] sm:$0xf]
      %v1118 = vld [vmem:[%s219 + $0x14] sm:$0xf]
      %v1119 = vld [vmem:[%s219 + $0x18] sm:$0xf]
      %v1120 = vld [vmem:[%s219 + $0x1c] sm:$0xf]
      %v1121 = vld [vmem:[%s219 + $0x20] sm:$0xf]
      %v1122 = vld [vmem:[%s219 + $0x24] sm:$0xf]
      %v1123 = vld [vmem:[%s219 + $0x28] sm:$0xf]
      %v1124 = vld [vmem:[%s219 + $0x2c] sm:$0xf]
      %v1125 = vld [vmem:[%s219 + $0x30] sm:$0xf]
      %v1126 = vld [vmem:[%s219 + $0x34] sm:$0xf]
      %v1127 = vld [vmem:[%s219 + $0x38] sm:$0xf]
      %v1128 = vld [vmem:[%s219 + $0x3c] sm:$0xf]
      %v1129 = vld [vmem:[%s219 + $0x40] sm:$0xf]
      %v1130 = vld [vmem:[%s219 + $0x44] sm:$0xf]
      %v1131 = vld [vmem:[%s219 + $0x48] sm:$0xf]
      %v1132 = vld [vmem:[%s219 + $0x4c] sm:$0xf]
      %v1133 = vld [vmem:[%s219 + $0x50] sm:$0xf]
      %v1134 = vld [vmem:[%s219 + $0x54] sm:$0xf]
      %v1135 = vld [vmem:[%s219 + $0x58] sm:$0xf]
      %v1136 = vld [vmem:[%s219 + $0x5c] sm:$0xf]
      %v1137 = vld [vmem:[%s219 + $0x60] sm:$0xf]
      %v1138 = vld [vmem:[%s219 + $0x64] sm:$0xf]
      %v1139 = vld [vmem:[%s219 + $0x68] sm:$0xf]
      %v1140 = vld [vmem:[%s219 + $0x6c] sm:$0xf]
      %v1141 = vld [vmem:[%s219 + $0x70] sm:$0xf]
      %v1142 = vld [vmem:[%s219 + $0x74] sm:$0xf]
      %v1143 = vld [vmem:[%s219 + $0x78] sm:$0xf]
      %v1144 = vld [vmem:[%s219 + $0x7c] sm:$0xf]
      %v1145 = vld [vmem:[%s219 + $0x80] sm:$0xf]
      %v1146 = vld [vmem:[%s219 + $0x84] sm:$0xf]
      %v1147 = vld [vmem:[%s219 + $0x88] sm:$0xf]
      %v1148 = vld [vmem:[%s219 + $0x8c] sm:$0xf]
      %v1149 = vld [vmem:[%s219 + $0x90] sm:$0xf]
      %v1150 = vld [vmem:[%s219 + $0x94] sm:$0xf]
      %v1151 = vld [vmem:[%s219 + $0x98] sm:$0xf]
      %v1152 = vld [vmem:[%s219 + $0x9c] sm:$0xf]
      %v1153 = vld [vmem:[%s219 + $0xa0] sm:$0xf]
      %v1154 = vld [vmem:[%s219 + $0xa4] sm:$0xf]
      %v1155 = vld [vmem:[%s219 + $0xa8] sm:$0xf]
      %v1156 = vld [vmem:[%s219 + $0xac] sm:$0xf]
      %v1157 = vld [vmem:[%s219 + $0xb0] sm:$0xf]
      %v1158 = vld [vmem:[%s219 + $0xb4] sm:$0xf]
      %v1159 = vld [vmem:[%s219 + $0xb8] sm:$0xf]
      %v1160 = vld [vmem:[%s219 + $0xbc] sm:$0xf]
      %v1161 = vld [vmem:[%s219 + $0xc0] sm:$0xf]
      %v1162 = vld [vmem:[%s219 + $0xc4] sm:$0xf]
      %v1163 = vld [vmem:[%s219 + $0xc8] sm:$0xf]
      %v1164 = vld [vmem:[%s219 + $0xcc] sm:$0xf]
      %v1165 = vld [vmem:[%s219 + $0xd0] sm:$0xf]
      %v1166 = vld [vmem:[%s219 + $0xd4] sm:$0xf]
      %v1167 = vld [vmem:[%s219 + $0xd8] sm:$0xf]
      %v1168 = vld [vmem:[%s219 + $0xdc] sm:$0xf]
      %v1169 = vld [vmem:[%s219 + $0xe0] sm:$0xf]
      %v1170 = vld [vmem:[%s219 + $0xe4] sm:$0xf]
      %v1171 = vld [vmem:[%s219 + $0xe8] sm:$0xf]
      %v1172 = vld [vmem:[%s219 + $0xec] sm:$0xf]
      %v1173 = vld [vmem:[%s219 + $0xf0] sm:$0xf]
      %v1174 = vld [vmem:[%s219 + $0xf4] sm:$0xf]
      %v1175 = vld [vmem:[%s219 + $0xf8] sm:$0xf]
      %v1176 = vld [vmem:[%s219 + $0xfc] sm:$0xf]
      %v1241 = vunpack.c.l.b16 %v1113
      %v1242 = vunpack.c.l.b16 %v1114
      %v1243 = vunpack.c.l.b16 %v1115
      %v1244 = vunpack.c.l.b16 %v1116
      %v1245 = vunpack.c.l.b16 %v1117
      %v1246 = vunpack.c.l.b16 %v1118
      %v1247 = vunpack.c.l.b16 %v1119
      %v1248 = vunpack.c.l.b16 %v1120
      %v1249 = vunpack.c.l.b16 %v1121
      %v1250 = vunpack.c.l.b16 %v1122
      %v1251 = vunpack.c.l.b16 %v1123
      %v1252 = vunpack.c.l.b16 %v1124
      %v1253 = vunpack.c.l.b16 %v1125
      %v1254 = vunpack.c.l.b16 %v1126
      %v1255 = vunpack.c.l.b16 %v1127
      %v1256 = vunpack.c.l.b16 %v1128
      %v1257 = vunpack.c.l.b16 %v1129
      %v1258 = vunpack.c.l.b16 %v1130
      %v1259 = vunpack.c.l.b16 %v1131
      %v1260 = vunpack.c.l.b16 %v1132
      %v1261 = vunpack.c.l.b16 %v1133
      %v1262 = vunpack.c.l.b16 %v1134
      %v1263 = vunpack.c.l.b16 %v1135
      %v1264 = vunpack.c.l.b16 %v1136
      %v1265 = vunpack.c.l.b16 %v1137
      %v1266 = vunpack.c.l.b16 %v1138
      %v1267 = vunpack.c.l.b16 %v1139
      %v1268 = vunpack.c.l.b16 %v1140
      %v1269 = vunpack.c.l.b16 %v1141
      %v1270 = vunpack.c.l.b16 %v1142
      %v1271 = vunpack.c.l.b16 %v1143
      %v1272 = vunpack.c.l.b16 %v1144
      %v1273 = vunpack.c.l.b16 %v1145
      %v1274 = vunpack.c.l.b16 %v1146
      %v1275 = vunpack.c.l.b16 %v1147
      %v1276 = vunpack.c.l.b16 %v1148
      %v1277 = vunpack.c.l.b16 %v1149
      %v1278 = vunpack.c.l.b16 %v1150
      %v1279 = vunpack.c.l.b16 %v1151
      %v1280 = vunpack.c.l.b16 %v1152
      %v1281 = vunpack.c.l.b16 %v1153
      %v1282 = vunpack.c.l.b16 %v1154
      %v1283 = vunpack.c.l.b16 %v1155
      %v1284 = vunpack.c.l.b16 %v1156
      %v1285 = vunpack.c.l.b16 %v1157
      %v1286 = vunpack.c.l.b16 %v1158
      %v1287 = vunpack.c.l.b16 %v1159
      %v1288 = vunpack.c.l.b16 %v1160
      %v1289 = vunpack.c.l.b16 %v1161
      %v1290 = vunpack.c.l.b16 %v1162
      %v1291 = vunpack.c.l.b16 %v1163
      %v1292 = vunpack.c.l.b16 %v1164
      %v1293 = vunpack.c.l.b16 %v1165
      %v1294 = vunpack.c.l.b16 %v1166
      %v1295 = vunpack.c.l.b16 %v1167
      %v1296 = vunpack.c.l.b16 %v1168
      %v1297 = vunpack.c.l.b16 %v1169
      %v1298 = vunpack.c.l.b16 %v1170
      %v1299 = vunpack.c.l.b16 %v1171
      %v1300 = vunpack.c.l.b16 %v1172
      %v1301 = vunpack.c.l.b16 %v1173
      %v1302 = vunpack.c.l.b16 %v1174
      %v1303 = vunpack.c.l.b16 %v1175
      %v1304 = vunpack.c.l.b16 %v1176
      %v1305 = vpack.c.b16 %v1242, %v1241
      %v1306 = vpack.c.b16 %v1244, %v1243
      %v1307 = vpack.c.b16 %v1246, %v1245
      %v1308 = vpack.c.b16 %v1248, %v1247
      %v1309 = vpack.c.b16 %v1250, %v1249
      %v1310 = vpack.c.b16 %v1252, %v1251
      %v1311 = vpack.c.b16 %v1254, %v1253
      %v1312 = vpack.c.b16 %v1256, %v1255
      %v1313 = vpack.c.b16 %v1258, %v1257
      %v1314 = vpack.c.b16 %v1260, %v1259
      %v1315 = vpack.c.b16 %v1262, %v1261
      %v1316 = vpack.c.b16 %v1264, %v1263
      %v1317 = vpack.c.b16 %v1266, %v1265
      %v1318 = vpack.c.b16 %v1268, %v1267
      %v1319 = vpack.c.b16 %v1270, %v1269
      %v1320 = vpack.c.b16 %v1272, %v1271
      %v1321 = vpack.c.b16 %v1274, %v1273
      %v1322 = vpack.c.b16 %v1276, %v1275
      %v1323 = vpack.c.b16 %v1278, %v1277
      %v1324 = vpack.c.b16 %v1280, %v1279
      %v1325 = vpack.c.b16 %v1282, %v1281
      %v1326 = vpack.c.b16 %v1284, %v1283
      %v1327 = vpack.c.b16 %v1286, %v1285
      %v1328 = vpack.c.b16 %v1288, %v1287
      %v1329 = vpack.c.b16 %v1290, %v1289
      %v1330 = vpack.c.b16 %v1292, %v1291
      %v1331 = vpack.c.b16 %v1294, %v1293
      %v1332 = vpack.c.b16 %v1296, %v1295
      %v1333 = vpack.c.b16 %v1298, %v1297
      %v1334 = vpack.c.b16 %v1300, %v1299
      %v1335 = vpack.c.b16 %v1302, %v1301
      %v1336 = vpack.c.b16 %v1304, %v1303
      %1369 = vmatprep.subr.bf16.mxu0 0
      %1370 = vmatpush1.bf16.msra.mxu0 %v1305
      %1371 = vmatprep.subr.bf16.mxu0 0
      %1372 = vmatpush1.bf16.msra.mxu0 %v1306
      %1373 = vmatprep.subr.bf16.mxu0 0
      %1374 = vmatpush1.bf16.msra.mxu0 %v1307
      %1375 = vmatprep.subr.bf16.mxu0 0
      %1376 = vmatpush1.bf16.msra.mxu0 %v1308
      %1377 = vmatprep.subr.bf16.mxu0 0
      %1378 = vmatpush1.bf16.msra.mxu0 %v1309
      %1379 = vmatprep.subr.bf16.mxu0 0
      %1380 = vmatpush1.bf16.msra.mxu0 %v1310
      %1381 = vmatprep.subr.bf16.mxu0 0
      %1382 = vmatpush1.bf16.msra.mxu0 %v1311
      %1383 = vmatprep.subr.bf16.mxu0 0
      %1384 = vmatpush1.bf16.msra.mxu0 %v1312
      %1385 = vmatprep.subr.bf16.mxu0 0
      %1386 = vmatpush1.bf16.msra.mxu0 %v1313
      %1387 = vmatprep.subr.bf16.mxu0 0
      %1388 = vmatpush1.bf16.msra.mxu0 %v1314
      %1389 = vmatprep.subr.bf16.mxu0 0
      %1390 = vmatpush1.bf16.msra.mxu0 %v1315
      %1391 = vmatprep.subr.bf16.mxu0 0
      %1392 = vmatpush1.bf16.msra.mxu0 %v1316
      %1393 = vmatprep.subr.bf16.mxu0 0
      %1394 = vmatpush1.bf16.msra.mxu0 %v1317
      %1395 = vmatprep.subr.bf16.mxu0 0
      %1396 = vmatpush1.bf16.msra.mxu0 %v1318
      %1397 = vmatprep.subr.bf16.mxu0 0
      %1398 = vmatpush1.bf16.msra.mxu0 %v1319
      %1399 = vmatprep.subr.bf16.mxu0 0
      %1400 = vmatpush1.bf16.msra.mxu0 %v1320
      %1401 = vmatprep.mubr.bf16.mxu0 %v1050
      %1402 = vmatmul.mubr.bf16.gmra.mrb[0].mxu0 %v1049
      %v1403 = vpop.f32.mrb[0].mxu0
      %v1404 = vadd.f32 0.0, %v1403
      %v1405 = vpop.f32.mrb[0].mxu0
      %v1406 = vpop.f32.mrb[0].mxu0
      %v1407 = vadd.f32 0.0, %v1406
      %v1408 = vpop.f32.mrb[0].mxu0
      %1409 = vmatprep.mubr.bf16.mxu0 %v1054
      %1410 = vmatmul.mubr.bf16.gmra.mrb[0].mxu0 %v1053
      %v1411 = vpop.f32.mrb[0].mxu0
      %v1412 = vadd.f32 0.0, %v1411
      %v1413 = vpop.f32.mrb[0].mxu0
      %v1414 = vpop.f32.mrb[0].mxu0
      %v1415 = vadd.f32 0.0, %v1414
      %v1416 = vpop.f32.mrb[0].mxu0
      %1417 = vmatprep.mubr.bf16.mxu0 %v1058
      %1418 = vmatmul.mubr.bf16.gmra.mrb[0].mxu0 %v1057
      %v1419 = vpop.f32.mrb[0].mxu0
      %v1420 = vadd.f32 0.0, %v1419
      %v1421 = vpop.f32.mrb[0].mxu0
      %v1422 = vpop.f32.mrb[0].mxu0
      %v1423 = vadd.f32 0.0, %v1422
      %v1424 = vpop.f32.mrb[0].mxu0
      %1425 = vmatprep.mubr.bf16.mxu0 %v1062
      %1426 = vmatmul.mubr.bf16.gmra.mrb[0].mxu0 %v1061
      %v1427 = vpop.f32.mrb[0].mxu0
      %v1428 = vadd.f32 0.0, %v1427
      %v1429 = vpop.f32.mrb[0].mxu0
      %v1430 = vpop.f32.mrb[0].mxu0
      %v1431 = vadd.f32 0.0, %v1430
      %v1432 = vpop.f32.mrb[0].mxu0
      %1433 = vmatprep.mubr.bf16.mxu0 %v1066
      %1434 = vmatmul.mubr.bf16.gmra.mrb[0].mxu0 %v1065
      %v1435 = vpop.f32.mrb[0].mxu0
      %v1436 = vadd.f32 0.0, %v1435
      %v1437 = vpop.f32.mrb[0].mxu0
      %v1438 = vpop.f32.mrb[0].mxu0
      %v1439 = vadd.f32 0.0, %v1438
      %v1440 = vpop.f32.mrb[0].mxu0
      %1441 = vmatprep.mubr.bf16.mxu0 %v1070
      %1442 = vmatmul.mubr.bf16.gmra.mrb[0].mxu0 %v1069
      %v1443 = vpop.f32.mrb[0].mxu0
      %v1444 = vadd.f32 0.0, %v1443
      %v1445 = vpop.f32.mrb[0].mxu0
      %v1446 = vpop.f32.mrb[0].mxu0
      %v1447 = vadd.f32 0.0, %v1446
      %v1448 = vpop.f32.mrb[0].mxu0
      %1449 = vmatprep.mubr.bf16.mxu0 %v1074
      %1450 = vmatmul.mubr.bf16.gmra.mrb[0].mxu0 %v1073
      %v1451 = vpop.f32.mrb[0].mxu0
      %v1452 = vadd.f32 0.0, %v1451
      %v1453 = vpop.f32.mrb[0].mxu0
      %v1454 = vpop.f32.mrb[0].mxu0
      %v1455 = vadd.f32 0.0, %v1454
      %v1456 = vpop.f32.mrb[0].mxu0
      %1457 = vmatprep.mubr.bf16.mxu0 %v1078
      %1458 = vmatmul.mubr.bf16.gmra.mrb[0].mxu0 %v1077
      %v1459 = vpop.f32.mrb[0].mxu0
      %v1460 = vadd.f32 0.0, %v1459
      %v1461 = vpop.f32.mrb[0].mxu0
      %v1462 = vpop.f32.mrb[0].mxu0
      %v1463 = vadd.f32 0.0, %v1462
      %v1464 = vpop.f32.mrb[0].mxu0
      %1465 = vmatprep.mubr.bf16.mxu0 %v1082
      %1466 = vmatmul.mubr.bf16.gmra.mrb[0].mxu0 %v1081
      %v1467 = vpop.f32.mrb[0].mxu0
      %v1468 = vadd.f32 0.0, %v1467
      %v1469 = vpop.f32.mrb[0].mxu0
      %v1470 = vpop.f32.mrb[0].mxu0
      %v1471 = vadd.f32 0.0, %v1470
      %v1472 = vpop.f32.mrb[0].mxu0
      %1473 = vmatprep.mubr.bf16.mxu0 %v1086
      %1474 = vmatmul.mubr.bf16.gmra.mrb[0].mxu0 %v1085
      %v1475 = vpop.f32.mrb[0].mxu0
      %v1476 = vadd.f32 0.0, %v1475
      %v1477 = vpop.f32.mrb[0].mxu0
      %v1478 = vpop.f32.mrb[0].mxu0
      %v1479 = vadd.f32 0.0, %v1478
      %v1480 = vpop.f32.mrb[0].mxu0
      %1481 = vmatprep.mubr.bf16.mxu0 %v1090
      %1482 = vmatmul.mubr.bf16.gmra.mrb[0].mxu0 %v1089
      %v1483 = vpop.f32.mrb[0].mxu0
      %v1484 = vadd.f32 0.0, %v1483
      %v1485 = vpop.f32.mrb[0].mxu0
      %v1486 = vpop.f32.mrb[0].mxu0
      %v1487 = vadd.f32 0.0, %v1486
      %v1488 = vpop.f32.mrb[0].mxu0
      %1489 = vmatprep.mubr.bf16.mxu0 %v1094
      %1490 = vmatmul.mubr.bf16.gmra.mrb[0].mxu0 %v1093
      %v1491 = vpop.f32.mrb[0].mxu0
      %v1492 = vadd.f32 0.0, %v1491
      %v1493 = vpop.f32.mrb[0].mxu0
      %v1494 = vpop.f32.mrb[0].mxu0
      %v1495 = vadd.f32 0.0, %v1494
      %v1496 = vpop.f32.mrb[0].mxu0
      %1497 = vmatprep.mubr.bf16.mxu0 %v1098
      %1498 = vmatmul.mubr.bf16.gmra.mrb[0].mxu0 %v1097
      %v1499 = vpop.f32.mrb[0].mxu0
      %v1500 = vadd.f32 0.0, %v1499
      %v1501 = vpop.f32.mrb[0].mxu0
      %v1502 = vpop.f32.mrb[0].mxu0
      %v1503 = vadd.f32 0.0, %v1502
      %v1504 = vpop.f32.mrb[0].mxu0
      %1505 = vmatprep.mubr.bf16.mxu0 %v1102
      %1506 = vmatmul.mubr.bf16.gmra.mrb[0].mxu0 %v1101
      %v1507 = vpop.f32.mrb[0].mxu0
      %v1508 = vadd.f32 0.0, %v1507
      %v1509 = vpop.f32.mrb[0].mxu0
      %v1510 = vpop.f32.mrb[0].mxu0
      %v1511 = vadd.f32 0.0, %v1510
      %v1512 = vpop.f32.mrb[0].mxu0
      %1513 = vmatprep.mubr.bf16.mxu0 %v1106
      %1514 = vmatmul.mubr.bf16.gmra.mrb[0].mxu0 %v1105
      %v1515 = vpop.f32.mrb[0].mxu0
      %v1516 = vadd.f32 0.0, %v1515
      %v1517 = vpop.f32.mrb[0].mxu0
      %v1518 = vpop.f32.mrb[0].mxu0
      %v1519 = vadd.f32 0.0, %v1518
      %v1520 = vpop.f32.mrb[0].mxu0
      %1521 = vmatprep.mubr.bf16.mxu0 %v1110
      %1522 = vmatmul.mubr.bf16.gmra.mrb[0].mxu0 %v1109
      %v1523 = vpop.f32.mrb[0].mxu0
      %v1524 = vadd.f32 0.0, %v1523
      %v1525 = vpop.f32.mrb[0].mxu0
      %v1526 = vpop.f32.mrb[0].mxu0
      %v1527 = vadd.f32 0.0, %v1526
      %v1528 = vpop.f32.mrb[0].mxu0
      %1529 = vdwg.mxu0
      %1530 = vmatprep.subr.bf16.mxu0 0
      %1531 = vmatpush1.bf16.msra.mxu0 %v1321
      %1532 = vmatprep.subr.bf16.mxu0 0
      %1533 = vmatpush1.bf16.msra.mxu0 %v1322
      %1534 = vmatprep.subr.bf16.mxu0 0
      %1535 = vmatpush1.bf16.msra.mxu0 %v1323
      %1536 = vmatprep.subr.bf16.mxu0 0
      %1537 = vmatpush1.bf16.msra.mxu0 %v1324
      %1538 = vmatprep.subr.bf16.mxu0 0
      %1539 = vmatpush1.bf16.msra.mxu0 %v1325
      %1540 = vmatprep.subr.bf16.mxu0 0
      %1541 = vmatpush1.bf16.msra.mxu0 %v1326
      %1542 = vmatprep.subr.bf16.mxu0 0
      %1543 = vmatpush1.bf16.msra.mxu0 %v1327
      %1544 = vmatprep.subr.bf16.mxu0 0
      %1545 = vmatpush1.bf16.msra.mxu0 %v1328
      %1546 = vmatprep.subr.bf16.mxu0 0
      %1547 = vmatpush1.bf16.msra.mxu0 %v1329
      %1548 = vmatprep.subr.bf16.mxu0 0
      %1549 = vmatpush1.bf16.msra.mxu0 %v1330
      %1550 = vmatprep.subr.bf16.mxu0 0
      %1551 = vmatpush1.bf16.msra.mxu0 %v1331
      %1552 = vmatprep.subr.bf16.mxu0 0
      %1553 = vmatpush1.bf16.msra.mxu0 %v1332
      %1554 = vmatprep.subr.bf16.mxu0 0
      %1555 = vmatpush1.bf16.msra.mxu0 %v1333
      %1556 = vmatprep.subr.bf16.mxu0 0
      %1557 = vmatpush1.bf16.msra.mxu0 %v1334
      %1558 = vmatprep.subr.bf16.mxu0 0
      %1559 = vmatpush1.bf16.msra.mxu0 %v1335
      %1560 = vmatprep.subr.bf16.mxu0 0
      %1561 = vmatpush1.bf16.msra.mxu0 %v1336
      %1562 = vmatprep.mubr.bf16.mxu0 %v1052
      %1563 = vmatmul.mubr.bf16.gmra.mrb[0].mxu0 %v1051
      %v1564 = vpop.f32.mrb[0].mxu0
      %v1565 = vadd.f32 %v1404, %v1564
      %v1566 = vpop.f32.mrb[0].mxu0
      %v1567 = vpop.f32.mrb[0].mxu0
      %v1568 = vadd.f32 %v1407, %v1567
      %v1569 = vpop.f32.mrb[0].mxu0
      %1570 = vmatprep.mubr.bf16.mxu0 %v1056
      %1571 = vmatmul.mubr.bf16.gmra.mrb[0].mxu0 %v1055
      %v1572 = vpop.f32.mrb[0].mxu0
      %v1573 = vadd.f32 %v1412, %v1572
      %v1574 = vpop.f32.mrb[0].mxu0
      %v1575 = vpop.f32.mrb[0].mxu0
      %v1576 = vadd.f32 %v1415, %v1575
      %v1577 = vpop.f32.mrb[0].mxu0
      %1578 = vmatprep.mubr.bf16.mxu0 %v1060
      %1579 = vmatmul.mubr.bf16.gmra.mrb[0].mxu0 %v1059
      %v1580 = vpop.f32.mrb[0].mxu0
      %v1581 = vadd.f32 %v1420, %v1580
      %v1582 = vpop.f32.mrb[0].mxu0
      %v1583 = vpop.f32.mrb[0].mxu0
      %v1584 = vadd.f32 %v1423, %v1583
      %v1585 = vpop.f32.mrb[0].mxu0
      %1586 = vmatprep.mubr.bf16.mxu0 %v1064
      %1587 = vmatmul.mubr.bf16.gmra.mrb[0].mxu0 %v1063
      %v1588 = vpop.f32.mrb[0].mxu0
      %v1589 = vadd.f32 %v1428, %v1588
      %v1590 = vpop.f32.mrb[0].mxu0
      %v1591 = vpop.f32.mrb[0].mxu0
      %v1592 = vadd.f32 %v1431, %v1591
      %v1593 = vpop.f32.mrb[0].mxu0
      %1594 = vmatprep.mubr.bf16.mxu0 %v1068
      %1595 = vmatmul.mubr.bf16.gmra.mrb[0].mxu0 %v1067
      %v1596 = vpop.f32.mrb[0].mxu0
      %v1597 = vadd.f32 %v1436, %v1596
      %v1598 = vpop.f32.mrb[0].mxu0
      %v1599 = vpop.f32.mrb[0].mxu0
      %v1600 = vadd.f32 %v1439, %v1599
      %v1601 = vpop.f32.mrb[0].mxu0
      %1602 = vmatprep.mubr.bf16.mxu0 %v1072
      %1603 = vmatmul.mubr.bf16.gmra.mrb[0].mxu0 %v1071
      %v1604 = vpop.f32.mrb[0].mxu0
      %v1605 = vadd.f32 %v1444, %v1604
      %v1606 = vpop.f32.mrb[0].mxu0
      %v1607 = vpop.f32.mrb[0].mxu0
      %v1608 = vadd.f32 %v1447, %v1607
      %v1609 = vpop.f32.mrb[0].mxu0
      %1610 = vmatprep.mubr.bf16.mxu0 %v1076
      %1611 = vmatmul.mubr.bf16.gmra.mrb[0].mxu0 %v1075
      %v1612 = vpop.f32.mrb[0].mxu0
      %v1613 = vadd.f32 %v1452, %v1612
      %v1614 = vpop.f32.mrb[0].mxu0
      %v1615 = vpop.f32.mrb[0].mxu0
      %v1616 = vadd.f32 %v1455, %v1615
      %v1617 = vpop.f32.mrb[0].mxu0
      %1618 = vmatprep.mubr.bf16.mxu0 %v1080
      %1619 = vmatmul.mubr.bf16.gmra.mrb[0].mxu0 %v1079
      %v1620 = vpop.f32.mrb[0].mxu0
      %v1621 = vadd.f32 %v1460, %v1620
      %v1622 = vpop.f32.mrb[0].mxu0
      %v1623 = vpop.f32.mrb[0].mxu0
      %v1624 = vadd.f32 %v1463, %v1623
      %v1625 = vpop.f32.mrb[0].mxu0
      %1626 = vmatprep.mubr.bf16.mxu0 %v1084
      %1627 = vmatmul.mubr.bf16.gmra.mrb[0].mxu0 %v1083
      %v1628 = vpop.f32.mrb[0].mxu0
      %v1629 = vadd.f32 %v1468, %v1628
      %v1630 = vpop.f32.mrb[0].mxu0
      %v1631 = vpop.f32.mrb[0].mxu0
      %v1632 = vadd.f32 %v1471, %v1631
      %v1633 = vpop.f32.mrb[0].mxu0
      %1634 = vmatprep.mubr.bf16.mxu0 %v1088
      %1635 = vmatmul.mubr.bf16.gmra.mrb[0].mxu0 %v1087
      %v1636 = vpop.f32.mrb[0].mxu0
      %v1637 = vadd.f32 %v1476, %v1636
      %v1638 = vpop.f32.mrb[0].mxu0
      %v1639 = vpop.f32.mrb[0].mxu0
      %v1640 = vadd.f32 %v1479, %v1639
      %v1641 = vpop.f32.mrb[0].mxu0
      %1642 = vmatprep.mubr.bf16.mxu0 %v1092
      %1643 = vmatmul.mubr.bf16.gmra.mrb[0].mxu0 %v1091
      %v1644 = vpop.f32.mrb[0].mxu0
      %v1645 = vadd.f32 %v1484, %v1644
      %v1646 = vpop.f32.mrb[0].mxu0
      %v1647 = vpop.f32.mrb[0].mxu0
      %v1648 = vadd.f32 %v1487, %v1647
      %v1649 = vpop.f32.mrb[0].mxu0
      %1650 = vmatprep.mubr.bf16.mxu0 %v1096
      %1651 = vmatmul.mubr.bf16.gmra.mrb[0].mxu0 %v1095
      %v1652 = vpop.f32.mrb[0].mxu0
      %v1653 = vadd.f32 %v1492, %v1652
      %v1654 = vpop.f32.mrb[0].mxu0
      %v1655 = vpop.f32.mrb[0].mxu0
      %v1656 = vadd.f32 %v1495, %v1655
      %v1657 = vpop.f32.mrb[0].mxu0
      %1658 = vmatprep.mubr.bf16.mxu0 %v1100
      %1659 = vmatmul.mubr.bf16.gmra.mrb[0].mxu0 %v1099
      %v1660 = vpop.f32.mrb[0].mxu0
      %v1661 = vadd.f32 %v1500, %v1660
      %v1662 = vpop.f32.mrb[0].mxu0
      %v1663 = vpop.f32.mrb[0].mxu0
      %v1664 = vadd.f32 %v1503, %v1663
      %v1665 = vpop.f32.mrb[0].mxu0
      %1666 = vmatprep.mubr.bf16.mxu0 %v1104
      %1667 = vmatmul.mubr.bf16.gmra.mrb[0].mxu0 %v1103
      %v1668 = vpop.f32.mrb[0].mxu0
      %v1669 = vadd.f32 %v1508, %v1668
      %v1670 = vpop.f32.mrb[0].mxu0
      %v1671 = vpop.f32.mrb[0].mxu0
      %v1672 = vadd.f32 %v1511, %v1671
      %v1673 = vpop.f32.mrb[0].mxu0
      %1674 = vmatprep.mubr.bf16.mxu0 %v1108
      %1675 = vmatmul.mubr.bf16.gmra.mrb[0].mxu0 %v1107
      %v1676 = vpop.f32.mrb[0].mxu0
      %v1677 = vadd.f32 %v1516, %v1676
      %v1678 = vpop.f32.mrb[0].mxu0
      %v1679 = vpop.f32.mrb[0].mxu0
      %v1680 = vadd.f32 %v1519, %v1679
      %v1681 = vpop.f32.mrb[0].mxu0
      %1682 = vmatprep.mubr.bf16.mxu0 %v1112
      %1683 = vmatmul.mubr.bf16.gmra.mrb[0].mxu0 %v1111
      %v1684 = vpop.f32.mrb[0].mxu0
      %v1685 = vadd.f32 %v1524, %v1684
      %v1686 = vpop.f32.mrb[0].mxu0
      %v1687 = vpop.f32.mrb[0].mxu0
      %v1688 = vadd.f32 %v1527, %v1687
      %v1689 = vpop.f32.mrb[0].mxu0
      %1690 = vdwg.mxu0
      %v1691 = vadd.f32 %v295, %v1565
      %v1692 = vadd.f32 %v296, %v1568
      %v1693 = vadd.f32 %v297, %v1573
      %v1694 = vadd.f32 %v298, %v1576
      %v1695 = vadd.f32 %v299, %v1581
      %v1696 = vadd.f32 %v300, %v1584
      %v1697 = vadd.f32 %v301, %v1589
      %v1698 = vadd.f32 %v302, %v1592
      %v1699 = vadd.f32 %v303, %v1597
      %v1700 = vadd.f32 %v304, %v1600
      %v1701 = vadd.f32 %v305, %v1605
      %v1702 = vadd.f32 %v306, %v1608
      %v1703 = vadd.f32 %v307, %v1613
      %v1704 = vadd.f32 %v308, %v1616
      %v1705 = vadd.f32 %v309, %v1621
      %v1706 = vadd.f32 %v310, %v1624
      %v1707 = vadd.f32 %v311, %v1629
      %v1708 = vadd.f32 %v312, %v1632
      %v1709 = vadd.f32 %v313, %v1637
      %v1710 = vadd.f32 %v314, %v1640
      %v1711 = vadd.f32 %v315, %v1645
      %v1712 = vadd.f32 %v316, %v1648
      %v1713 = vadd.f32 %v317, %v1653
      %v1714 = vadd.f32 %v318, %v1656
      %v1715 = vadd.f32 %v319, %v1661
      %v1716 = vadd.f32 %v320, %v1664
      %v1717 = vadd.f32 %v321, %v1669
      %v1718 = vadd.f32 %v322, %v1672
      %v1719 = vadd.f32 %v323, %v1677
      %v1720 = vadd.f32 %v324, %v1680
      %v1721 = vadd.f32 %v325, %v1685
      %v1722 = vadd.f32 %v326, %v1688
      %1723 = vst [vmem:[#allocation2] sm:$0xff] %v1691
      %1724 = vst [vmem:[#allocation2 + $0x8] sm:$0xff] %v1692
      %1725 = vst [vmem:[#allocation2 + $0x10] sm:$0xff] %v1693
      %1726 = vst [vmem:[#allocation2 + $0x18] sm:$0xff] %v1694
      %1727 = vst [vmem:[#allocation2 + $0x20] sm:$0xff] %v1695
      %1728 = vst [vmem:[#allocation2 + $0x28] sm:$0xff] %v1696
      %1729 = vst [vmem:[#allocation2 + $0x30] sm:$0xff] %v1697
      %1730 = vst [vmem:[#allocation2 + $0x38] sm:$0xff] %v1698
      %1731 = vst [vmem:[#allocation2 + $0x40] sm:$0xff] %v1699
      %1732 = vst [vmem:[#allocation2 + $0x48] sm:$0xff] %v1700
      %1733 = vst [vmem:[#allocation2 + $0x50] sm:$0xff] %v1701
      %1734 = vst [vmem:[#allocation2 + $0x58] sm:$0xff] %v1702
      %1735 = vst [vmem:[#allocation2 + $0x60] sm:$0xff] %v1703
      %1736 = vst [vmem:[#allocation2 + $0x68] sm:$0xff] %v1704
      %1737 = vst [vmem:[#allocation2 + $0x70] sm:$0xff] %v1705
      %1738 = vst [vmem:[#allocation2 + $0x78] sm:$0xff] %v1706
      %1739 = vst [vmem:[#allocation2 + $0x80] sm:$0xff] %v1707
      %1740 = vst [vmem:[#allocation2 + $0x88] sm:$0xff] %v1708
      %1741 = vst [vmem:[#allocation2 + $0x90] sm:$0xff] %v1709
      %1742 = vst [vmem:[#allocation2 + $0x98] sm:$0xff] %v1710
      %1743 = vst [vmem:[#allocation2 + $0xa0] sm:$0xff] %v1711
      %1744 = vst [vmem:[#allocation2 + $0xa8] sm:$0xff] %v1712
      %1745 = vst [vmem:[#allocation2 + $0xb0] sm:$0xff] %v1713
      %1746 = vst [vmem:[#allocation2 + $0xb8] sm:$0xff] %v1714
      %1747 = vst [vmem:[#allocation2 + $0xc0] sm:$0xff] %v1715
      %1748 = vst [vmem:[#allocation2 + $0xc8] sm:$0xff] %v1716
      %1749 = vst [vmem:[#allocation2 + $0xd0] sm:$0xff] %v1717
      %1750 = vst [vmem:[#allocation2 + $0xd8] sm:$0xff] %v1718
      %1751 = vst [vmem:[#allocation2 + $0xe0] sm:$0xff] %v1719
      %1752 = vst [vmem:[#allocation2 + $0xe8] sm:$0xff] %v1720
      %1753 = vst [vmem:[#allocation2 + $0xf0] sm:$0xff] %v1721
      %1754 = vst [vmem:[#allocation2 + $0xf8] sm:$0xff] %v1722
      %p1755 = scmp.eq.s32.totalorder %s19, 48
      // Predicated region
      $region37: #{evoformer_forward.2} parent=31 // pred_check
        %p1756 = pneg %p1755
      $region38: #{evoformer_forward.2} parent=31 // pred_check_branch
        %1758 = sbr.rel (%p1756) target = $region40
      $region39: #{evoformer_forward.2} parent=31 // pred_region
        %v1759 = vld [vmem:[#allocation2] sm:$0xff]
        %v1760 = vld [vmem:[#allocation2 + $0x8] sm:$0xff]
        %v1761 = vld [vmem:[#allocation2 + $0x10] sm:$0xff]
        %v1762 = vld [vmem:[#allocation2 + $0x18] sm:$0xff]
        %v1763 = vld [vmem:[#allocation2 + $0x20] sm:$0xff]
        %v1764 = vld [vmem:[#allocation2 + $0x28] sm:$0xff]
        %v1765 = vld [vmem:[#allocation2 + $0x30] sm:$0xff]
        %v1766 = vld [vmem:[#allocation2 + $0x38] sm:$0xff]
        %v1767 = vld [vmem:[#allocation2 + $0x40] sm:$0xff]
        %v1768 = vld [vmem:[#allocation2 + $0x48] sm:$0xff]
        %v1769 = vld [vmem:[#allocation2 + $0x50] sm:$0xff]
        %v1770 = vld [vmem:[#allocation2 + $0x58] sm:$0xff]
        %v1771 = vld [vmem:[#allocation2 + $0x60] sm:$0xff]
        %v1772 = vld [vmem:[#allocation2 + $0x68] sm:$0xff]
        %v1773 = vld [vmem:[#allocation2 + $0x70] sm:$0xff]
        %v1774 = vld [vmem:[#allocation2 + $0x78] sm:$0xff]
        %v1775 = vld [vmem:[#allocation2 + $0x80] sm:$0xff]
        %v1776 = vld [vmem:[#allocation2 + $0x88] sm:$0xff]
        %v1777 = vld [vmem:[#allocation2 + $0x90] sm:$0xff]
        %v1778 = vld [vmem:[#allocation2 + $0x98] sm:$0xff]
        %v1779 = vld [vmem:[#allocation2 + $0xa0] sm:$0xff]
        %v1780 = vld [vmem:[#allocation2 + $0xa8] sm:$0xff]
        %v1781 = vld [vmem:[#allocation2 + $0xb0] sm:$0xff]
        %v1782 = vld [vmem:[#allocation2 + $0xb8] sm:$0xff]
        %v1783 = vld [vmem:[#allocation2 + $0xc0] sm:$0xff]
        %v1784 = vld [vmem:[#allocation2 + $0xc8] sm:$0xff]
        %v1785 = vld [vmem:[#allocation2 + $0xd0] sm:$0xff]
        %v1786 = vld [vmem:[#allocation2 + $0xd8] sm:$0xff]
        %v1787 = vld [vmem:[#allocation2 + $0xe0] sm:$0xff]
        %v1788 = vld [vmem:[#allocation2 + $0xe8] sm:$0xff]
        %v1789 = vld [vmem:[#allocation2 + $0xf0] sm:$0xff]
        %v1790 = vld [vmem:[#allocation2 + $0xf8] sm:$0xff]
        %1791 = vst [vmem:[%s224] sm:$0xff] %v1759
        %1792 = vst [vmem:[%s224 + $0x8] sm:$0xff] %v1760
        %1793 = vst [vmem:[%s224 + $0x10] sm:$0xff] %v1761
        %1794 = vst [vmem:[%s224 + $0x18] sm:$0xff] %v1762
        %1795 = vst [vmem:[%s224 + $0x20] sm:$0xff] %v1763
        %1796 = vst [vmem:[%s224 + $0x28] sm:$0xff] %v1764
        %1797 = vst [vmem:[%s224 + $0x30] sm:$0xff] %v1765
        %1798 = vst [vmem:[%s224 + $0x38] sm:$0xff] %v1766
        %1799 = vst [vmem:[%s224 + $0x40] sm:$0xff] %v1767
        %1800 = vst [vmem:[%s224 + $0x48] sm:$0xff] %v1768
        %1801 = vst [vmem:[%s224 + $0x50] sm:$0xff] %v1769
        %1802 = vst [vmem:[%s224 + $0x58] sm:$0xff] %v1770
        %1803 = vst [vmem:[%s224 + $0x60] sm:$0xff] %v1771
        %1804 = vst [vmem:[%s224 + $0x68] sm:$0xff] %v1772
        %1805 = vst [vmem:[%s224 + $0x70] sm:$0xff] %v1773
        %1806 = vst [vmem:[%s224 + $0x78] sm:$0xff] %v1774
        %1807 = vst [vmem:[%s224 + $0x80] sm:$0xff] %v1775
        %1808 = vst [vmem:[%s224 + $0x88] sm:$0xff] %v1776
        %1809 = vst [vmem:[%s224 + $0x90] sm:$0xff] %v1777
        %1810 = vst [vmem:[%s224 + $0x98] sm:$0xff] %v1778
        %1811 = vst [vmem:[%s224 + $0xa0] sm:$0xff] %v1779
        %1812 = vst [vmem:[%s224 + $0xa8] sm:$0xff] %v1780
        %1813 = vst [vmem:[%s224 + $0xb0] sm:$0xff] %v1781
        %1814 = vst [vmem:[%s224 + $0xb8] sm:$0xff] %v1782
        %1815 = vst [vmem:[%s224 + $0xc0] sm:$0xff] %v1783
        %1816 = vst [vmem:[%s224 + $0xc8] sm:$0xff] %v1784
        %1817 = vst [vmem:[%s224 + $0xd0] sm:$0xff] %v1785
        %1818 = vst [vmem:[%s224 + $0xd8] sm:$0xff] %v1786
        %1819 = vst [vmem:[%s224 + $0xe0] sm:$0xff] %v1787
        %1820 = vst [vmem:[%s224 + $0xe8] sm:$0xff] %v1788
        %1821 = vst [vmem:[%s224 + $0xf0] sm:$0xff] %v1789
        %1822 = vst [vmem:[%s224 + $0xf8] sm:$0xff] %v1790
      $region40: #{evoformer_forward.2} parent=31 // pred_fallthru
        _
      %s1823 = smul.u32 32, %s18
      %p1824 = scmp.lt.s32.totalorder %s1823, 31
      %s1825 = scalar_select %p1824, %s1823, 31
      %s1826 = smul.addr %s1825, 8
      %s1827 = scalar_lea.vmem %s3, %s1826
      // Predicated region
      $region41: #{evoformer_forward.2} parent=31 // pred_check
        %p1828 = pneg %p122
      $region42: #{evoformer_forward.2} parent=31 // pred_check_branch
        %1830 = sbr.rel (%p1828) target = $region44
      $region43: #{evoformer_forward.2} parent=31 // pred_region
        %s1831 = smul.u32 32, %s18
      $region44: #{evoformer_forward.2} parent=31 // pred_fallthru
        _
      // Predicated region
      $region45: #{evoformer_forward.2} parent=31 // pred_check
        %p1832 = pneg %p122
      $region46: #{evoformer_forward.2} parent=31 // pred_check_branch
        %1834 = sbr.rel (%p1832) target = $region48
      $region47: #{evoformer_forward.2} parent=31 // pred_region
        %s1835 = smul.u32 32, %s18
        %p1836 = scmp.lt.s32.totalorder %s1835, 31
        %s1837 = scalar_select %p1836, %s1835, 31
        %s1838 = smul.addr %s1837, 8
        %s1839 = scalar_lea.vmem %s3, %s1838
      $region48: #{evoformer_forward.2} parent=31 // pred_fallthru
        _
    $region32: #{evoformer_forward.2} parent=5 // pred_fallthru
      _
    %p1840 = scmp.le.s32.totalorder 2, %s9
    // Predicated region
    $region49: #{evoformer_forward.2} parent=5 // pred_check
      %p1841 = pneg %p1840
    $region50: #{evoformer_forward.2} parent=5 // pred_check_branch
      %1843 = sbr.rel (%p1841) target = $region52
    $region51: #{evoformer_forward.2} parent=5 // pred_region
      %s1844 = ssub.s32 %s9, 2
    $region52: #{evoformer_forward.2} parent=5 // pred_fallthru
      _
  $region6: #{evoformer_forward.2} parent=0 // loop_footer
    %s13 = sadd.s32 1, %s9
  $region7: #{evoformer_forward.2} parent=0 // loop_footer_branch
    %8 = sbr.rel target = $region3
  $region8: #{evoformer_forward.2} parent=0 // loop_exit
    _

// kernel: evoformer_forward.3
$region0: #{evoformer_forward.3}
  #allocation0 [shape = 'u32[]', space=smem, size = 0x4, offset = 0x4, fixed_abs, tag = 'smem constant byte address 0x4 - core index']
  #allocation1 [shape = 'u32[144,128]{1,0:T(1,128)}', space=vmem, size = 0x12000, scoped, tag = 'internal scratch']
  #allocation2 [shape = 'f32[512,64]{1,0:T(8,128)}', space=vmem, size = 0x40000, scoped, tag = 'scratch operand']
  %s0 = inlined_call_operand.vmem [shape: f32[1024,64], index: 0, kind: input, shape index: {}, may-alias: {0,3}]
  %s1 = inlined_call_operand.vmem [shape: bf16[4,64,256], index: 1, kind: input, shape index: {}]
  %s2 = inlined_call_operand.vmem [shape: bf16[4,256,64], index: 2, kind: input, shape index: {}]
  %s3 = inlined_call_operand.vmem [shape: f32[1024,64], index: 3, kind: output, shape index: {}, may-alias: {0,3}]
  %s4 = sld [smem:[#allocation0]]
  $region53: #{evoformer_forward.3} parent=0
    _
  %s6 = ssub.s32 1, %s4
  %s7 = scalar_select 0, %s6, %s4
  loop: start=0, step=1, limit=10
  $region2: #{evoformer_forward.3} parent=0 // loop_pre_header
    _
  $region3: #{evoformer_forward.3} parent=0 // loop_header
    %s9 = sphi 0, %s13
    %p10 = scmp.ge.s32.totalorder %s9, 10
    %s16 = sphi 0, %s28
    %s17 = sphi 0, %s24
    %s18 = sphi 0, %s16
    %s19 = sphi 0, %s17
    %s20 = sphi 0, %s18
    %s21 = sphi 0, %s19
    %s31 = sphi 0, %s33
    %s34 = sphi 0, %s31
    %s35 = sphi 0, %s34
    %s51 = sphi 0, %s35
    %s57 = sphi 0, %s59
    %s60 = sphi 0, %s57
    %s61 = sphi 0, %s60
    %s77 = sphi 0, %s61
    %s83 = sphi 0, %s85
    %s86 = sphi 0, %s83
    %s87 = sphi 0, %s86
    %s103 = sphi 0, %s87
    %s109 = sphi 0, %s111
    %s112 = sphi 0, %s109
    %s113 = sphi 0, %s112
    %s129 = sphi 0, %s113
  $region4: #{evoformer_forward.3} parent=0 // loop_header_branch
    %12 = sbr.rel (%p10) target = $region8
  $region5: #{evoformer_forward.3} parent=0 // loop_body
    %s14 = ssub.s32 %s9, 1
    %s15 = ssub.s32 %s9, 2
    %s22 = sadd.s32 1, %s17
    %p23 = scmp.ge.s32.totalorder %s22, 4
    %s24 = scalar_select %p23, 0, %s22
    %s25 = sadd.s32 1, %s16
    %s26 = scalar_select %p23, %s25, %s16
    %p27 = scmp.ge.s32.totalorder %s26, 2
    %s28 = scalar_select %p27, 0, %s26
    %s29 = ssub.s32 %s16, %s28
    %p30 = scmp.eq.s32.totalorder %s29, 0
    %s32 = sadd.s32 %s31, 1
    %s33 = scalar_select %p30, %s31, %s32
    %p36 = pneg %p30
    %p37 = scmp.eq.s32.totalorder %s9, 7
    %p38 = por %p36, %p37
    %p39 = scmp.ne.s32.totalorder %s31, %s34
    %p40 = scmp.eq.s32.totalorder %s9, 0
    %p41 = por %p39, %p40
    %p42 = scmp.ne.s32.totalorder %s31, %s34
    %p43 = scmp.eq.s32.totalorder %s14, 7
    %p44 = por %p42, %p43
    %p45 = scmp.ne.s32.totalorder %s34, %s35
    %p46 = scmp.eq.s32.totalorder %s14, 0
    %p47 = por %p45, %p46
    %p48 = scmp.ne.s32.totalorder %s34, %s35
    %p49 = scmp.eq.s32.totalorder %s15, 7
    %p50 = por %p48, %p49
    %p52 = scmp.ne.s32.totalorder %s35, %s51
    %p53 = scmp.eq.s32.totalorder %s15, 0
    %p54 = por %p52, %p53
    %s55 = ssub.s32 %s17, %s24
    %p56 = scmp.eq.s32.totalorder %s55, 0
    %s58 = sadd.s32 %s57, 1
    %s59 = scalar_select %p56, %s57, %s58
    %p62 = pneg %p56
    %p63 = scmp.eq.s32.totalorder %s9, 7
    %p64 = por %p62, %p63
    %p65 = scmp.ne.s32.totalorder %s57, %s60
    %p66 = scmp.eq.s32.totalorder %s9, 0
    %p67 = por %p65, %p66
    %p68 = scmp.ne.s32.totalorder %s57, %s60
    %p69 = scmp.eq.s32.totalorder %s14, 7
    %p70 = por %p68, %p69
    %p71 = scmp.ne.s32.totalorder %s60, %s61
    %p72 = scmp.eq.s32.totalorder %s14, 0
    %p73 = por %p71, %p72
    %p74 = scmp.ne.s32.totalorder %s60, %s61
    %p75 = scmp.eq.s32.totalorder %s15, 7
    %p76 = por %p74, %p75
    %p78 = scmp.ne.s32.totalorder %s61, %s77
    %p79 = scmp.eq.s32.totalorder %s15, 0
    %p80 = por %p78, %p79
    %s81 = ssub.s32 %s17, %s24
    %p82 = scmp.eq.s32.totalorder %s81, 0
    %s84 = sadd.s32 %s83, 1
    %s85 = scalar_select %p82, %s83, %s84
    %p88 = pneg %p82
    %p89 = scmp.eq.s32.totalorder %s9, 7
    %p90 = por %p88, %p89
    %p91 = scmp.ne.s32.totalorder %s83, %s86
    %p92 = scmp.eq.s32.totalorder %s9, 0
    %p93 = por %p91, %p92
    %p94 = scmp.ne.s32.totalorder %s83, %s86
    %p95 = scmp.eq.s32.totalorder %s14, 7
    %p96 = por %p94, %p95
    %p97 = scmp.ne.s32.totalorder %s86, %s87
    %p98 = scmp.eq.s32.totalorder %s14, 0
    %p99 = por %p97, %p98
    %p100 = scmp.ne.s32.totalorder %s86, %s87
    %p101 = scmp.eq.s32.totalorder %s15, 7
    %p102 = por %p100, %p101
    %p104 = scmp.ne.s32.totalorder %s87, %s103
    %p105 = scmp.eq.s32.totalorder %s15, 0
    %p106 = por %p104, %p105
    %s107 = ssub.s32 %s16, %s28
    %p108 = scmp.eq.s32.totalorder %s107, 0
    %s110 = sadd.s32 %s109, 1
    %s111 = scalar_select %p108, %s109, %s110
    %p114 = pneg %p108
    %p115 = scmp.eq.s32.totalorder %s9, 7
    %p116 = por %p114, %p115
    %p117 = scmp.ne.s32.totalorder %s109, %s112
    %p118 = scmp.eq.s32.totalorder %s9, 0
    %p119 = por %p117, %p118
    %p120 = scmp.ne.s32.totalorder %s109, %s112
    %p121 = scmp.eq.s32.totalorder %s14, 7
    %p122 = por %p120, %p121
    %p123 = scmp.ne.s32.totalorder %s112, %s113
    %p124 = scmp.eq.s32.totalorder %s14, 0
    %p125 = por %p123, %p124
    %p126 = scmp.ne.s32.totalorder %s112, %s113
    %p127 = scmp.eq.s32.totalorder %s15, 7
    %p128 = por %p126, %p127
    %p130 = scmp.ne.s32.totalorder %s113, %s129
    %p131 = scmp.eq.s32.totalorder %s15, 0
    %p132 = por %p130, %p131
    %p133 = scmp.le.s32.totalorder 1, %s9
    %p134 = scmp.lt.s32.totalorder %s9, 9
    %p135 = pnand %p133, %p134
    %p136 = pneg %p135
    // Predicated region
    $region9: #{evoformer_forward.3} parent=5 // pred_check
      _
    $region10: #{evoformer_forward.3} parent=5 // pred_check_branch
      %138 = sbr.rel (%p135) target = $region12
    $region11: #{evoformer_forward.3} parent=5 // pred_region
      %s139 = ssub.s32 %s9, 1
    $region12: #{evoformer_forward.3} parent=5 // pred_fallthru
      _
    %p140 = scmp.lt.s32.totalorder %s9, 8
    // Predicated region
    $region13: #{evoformer_forward.3} parent=5 // pred_check
      %p141 = pneg %p140
    $region14: #{evoformer_forward.3} parent=5 // pred_check_branch
      %143 = sbr.rel (%p141) target = $region16
    $region15: #{evoformer_forward.3} parent=5 // pred_region
      // Predicated region
      $region17: #{evoformer_forward.3} parent=15 // pred_check
        %p144 = pneg %p41
      $region18: #{evoformer_forward.3} parent=15 // pred_check_branch
        %146 = sbr.rel (%p144) target = $region20
      $region19: #{evoformer_forward.3} parent=15 // pred_region
        %s147 = smul.u32 64, %s16
        %p148 = scmp.lt.s32.totalorder %s147, 127
        %s149 = scalar_select %p148, %s147, 127
        %s150 = smul.addr %s149, 8
        %s151 = scalar_lea.vmem %s0, %s150
        %s152 = smul.u32 64, %s16
      $region20: #{evoformer_forward.3} parent=15 // pred_fallthru
        _
      // Predicated region
      $region21: #{evoformer_forward.3} parent=15 // pred_check
        %p153 = pneg %p67
      $region22: #{evoformer_forward.3} parent=15 // pred_check_branch
        %155 = sbr.rel (%p153) target = $region24
      $region23: #{evoformer_forward.3} parent=15 // pred_region
        %p156 = scmp.lt.s32.totalorder %s17, 3
        %s157 = scalar_select %p156, %s17, 3
        %s158 = smul.addr %s157, 16
        %s159 = smul.addr %s158, 4
        %s160 = scalar_lea.vmem %s1, %s159
      $region24: #{evoformer_forward.3} parent=15 // pred_fallthru
        _
      // Predicated region
      $region25: #{evoformer_forward.3} parent=15 // pred_check
        %p161 = pneg %p93
      $region26: #{evoformer_forward.3} parent=15 // pred_check_branch
        %163 = sbr.rel (%p161) target = $region28
      $region27: #{evoformer_forward.3} parent=15 // pred_region
        %p164 = scmp.lt.s32.totalorder %s17, 3
        %s165 = scalar_select %p164, %s17, 3
        %s166 = smul.addr %s165, 32
        %s167 = smul.addr %s166, 4
        %s168 = scalar_lea.vmem %s2, %s167
      $region28: #{evoformer_forward.3} parent=15 // pred_fallthru
        _
    $region16: #{evoformer_forward.3} parent=5 // pred_fallthru
      _
    %p169 = scmp.le.s32.totalorder 1, %s9
    %p170 = scmp.lt.s32.totalorder %s9, 9
    %p171 = pnand %p169, %p170
    %p172 = pneg %p171
    // Predicated region
    $region29: #{evoformer_forward.3} parent=5 // pred_check
      _
    $region30: #{evoformer_forward.3} parent=5 // pred_check_branch
      %174 = sbr.rel (%p171) target = $region32
    $region31: #{evoformer_forward.3} parent=5 // pred_region
      %s175 = ssub.s32 %s9, 1
      %s176 = smul.u32 64, %s18
      %p177 = scmp.lt.s32.totalorder %s176, 127
      %s178 = scalar_select %p177, %s176, 127
      %s179 = smul.addr %s178, 8
      %s180 = scalar_lea.vmem %s0, %s179
      %p181 = pneg %p47
      %p182 = pneg %p44
      %p183 = scmp.lt.s32.totalorder %s19, 3
      %s184 = scalar_select %p183, %s19, 3
      %s185 = smul.addr %s184, 16
      %s186 = smul.addr %s185, 4
      %s187 = scalar_lea.vmem %s1, %s186
      %p188 = pneg %p73
      %p189 = pneg %p70
      %p190 = scmp.lt.s32.totalorder %s19, 3
      %s191 = scalar_select %p190, %s19, 3
      %s192 = smul.addr %s191, 32
      %s193 = smul.addr %s192, 4
      %s194 = scalar_lea.vmem %s2, %s193
      %p195 = pneg %p99
      %p196 = pneg %p96
      %p197 = pneg %p125
      %p198 = pneg %p122
      %s199 = smul.u32 64, %s18
      %p200 = scmp.lt.s32.totalorder %s199, 127
      %s201 = scalar_select %p200, %s199, 127
      %s202 = smul.addr %s201, 8
      %s203 = scalar_lea.vmem %s3, %s202
      %s204 = smul.u32 64, %s18
      %p205 = scmp.lt.s32.totalorder %s204, 127
      %s206 = scalar_select %p205, %s204, 127
      %s207 = smul.addr %s206, 8
      %s208 = scalar_lea.vmem %s0, %s207
      %s209 = smul.u32 64, %s18
      %p210 = scmp.lt.s32.totalorder %s19, 3
      %s211 = scalar_select %p210, %s19, 3
      %s212 = smul.addr %s211, 16
      %s213 = smul.addr %s212, 4
      %s214 = scalar_lea.vmem %s1, %s213
      %p215 = scmp.lt.s32.totalorder %s19, 3
      %s216 = scalar_select %p215, %s19, 3
      %s217 = smul.addr %s216, 32
      %s218 = smul.addr %s217, 4
      %s219 = scalar_lea.vmem %s2, %s218
      %s220 = smul.u32 64, %s18
      %p221 = scmp.lt.s32.totalorder %s220, 127
      %s222 = scalar_select %p221, %s220, 127
      %s223 = smul.addr %s222, 8
      %s224 = scalar_lea.vmem %s3, %s223
      %s225 = smul.u32 64, %s18
      %p227 = scmp.eq.s32.totalorder %s19, 0
      // Predicated region
      $region33: #{evoformer_forward.3} parent=31 // pred_check
        %p228 = pneg %p227
      $region34: #{evoformer_forward.3} parent=31 // pred_check_branch
        %230 = sbr.rel (%p228) target = $region36
      $region35: #{evoformer_forward.3} parent=31 // pred_region
        %v231 = vld [vmem:[%s208] sm:$0xff]
        %v232 = vld [vmem:[%s208 + $0x8] sm:$0xff]
        %v233 = vld [vmem:[%s208 + $0x10] sm:$0xff]
        %v234 = vld [vmem:[%s208 + $0x18] sm:$0xff]
        %v235 = vld [vmem:[%s208 + $0x20] sm:$0xff]
        %v236 = vld [vmem:[%s208 + $0x28] sm:$0xff]
        %v237 = vld [vmem:[%s208 + $0x30] sm:$0xff]
        %v238 = vld [vmem:[%s208 + $0x38] sm:$0xff]
        %v239 = vld [vmem:[%s208 + $0x40] sm:$0xff]
        %v240 = vld [vmem:[%s208 + $0x48] sm:$0xff]
        %v241 = vld [vmem:[%s208 + $0x50] sm:$0xff]
        %v242 = vld [vmem:[%s208 + $0x58] sm:$0xff]
        %v243 = vld [vmem:[%s208 + $0x60] sm:$0xff]
        %v244 = vld [vmem:[%s208 + $0x68] sm:$0xff]
        %v245 = vld [vmem:[%s208 + $0x70] sm:$0xff]
        %v246 = vld [vmem:[%s208 + $0x78] sm:$0xff]
        %v247 = vld [vmem:[%s208 + $0x80] sm:$0xff]
        %v248 = vld [vmem:[%s208 + $0x88] sm:$0xff]
        %v249 = vld [vmem:[%s208 + $0x90] sm:$0xff]
        %v250 = vld [vmem:[%s208 + $0x98] sm:$0xff]
        %v251 = vld [vmem:[%s208 + $0xa0] sm:$0xff]
        %v252 = vld [vmem:[%s208 + $0xa8] sm:$0xff]
        %v253 = vld [vmem:[%s208 + $0xb0] sm:$0xff]
        %v254 = vld [vmem:[%s208 + $0xb8] sm:$0xff]
        %v255 = vld [vmem:[%s208 + $0xc0] sm:$0xff]
        %v256 = vld [vmem:[%s208 + $0xc8] sm:$0xff]
        %v257 = vld [vmem:[%s208 + $0xd0] sm:$0xff]
        %v258 = vld [vmem:[%s208 + $0xd8] sm:$0xff]
        %v259 = vld [vmem:[%s208 + $0xe0] sm:$0xff]
        %v260 = vld [vmem:[%s208 + $0xe8] sm:$0xff]
        %v261 = vld [vmem:[%s208 + $0xf0] sm:$0xff]
        %v262 = vld [vmem:[%s208 + $0xf8] sm:$0xff]
        %v263 = vld [vmem:[%s208 + $0x100] sm:$0xff]
        %v264 = vld [vmem:[%s208 + $0x108] sm:$0xff]
        %v265 = vld [vmem:[%s208 + $0x110] sm:$0xff]
        %v266 = vld [vmem:[%s208 + $0x118] sm:$0xff]
        %v267 = vld [vmem:[%s208 + $0x120] sm:$0xff]
        %v268 = vld [vmem:[%s208 + $0x128] sm:$0xff]
        %v269 = vld [vmem:[%s208 + $0x130] sm:$0xff]
        %v270 = vld [vmem:[%s208 + $0x138] sm:$0xff]
        %v271 = vld [vmem:[%s208 + $0x140] sm:$0xff]
        %v272 = vld [vmem:[%s208 + $0x148] sm:$0xff]
        %v273 = vld [vmem:[%s208 + $0x150] sm:$0xff]
        %v274 = vld [vmem:[%s208 + $0x158] sm:$0xff]
        %v275 = vld [vmem:[%s208 + $0x160] sm:$0xff]
        %v276 = vld [vmem:[%s208 + $0x168] sm:$0xff]
        %v277 = vld [vmem:[%s208 + $0x170] sm:$0xff]
        %v278 = vld [vmem:[%s208 + $0x178] sm:$0xff]
        %v279 = vld [vmem:[%s208 + $0x180] sm:$0xff]
        %v280 = vld [vmem:[%s208 + $0x188] sm:$0xff]
        %v281 = vld [vmem:[%s208 + $0x190] sm:$0xff]
        %v282 = vld [vmem:[%s208 + $0x198] sm:$0xff]
        %v283 = vld [vmem:[%s208 + $0x1a0] sm:$0xff]
        %v284 = vld [vmem:[%s208 + $0x1a8] sm:$0xff]
        %v285 = vld [vmem:[%s208 + $0x1b0] sm:$0xff]
        %v286 = vld [vmem:[%s208 + $0x1b8] sm:$0xff]
        %v287 = vld [vmem:[%s208 + $0x1c0] sm:$0xff]
        %v288 = vld [vmem:[%s208 + $0x1c8] sm:$0xff]
        %v289 = vld [vmem:[%s208 + $0x1d0] sm:$0xff]
        %v290 = vld [vmem:[%s208 + $0x1d8] sm:$0xff]
        %v291 = vld [vmem:[%s208 + $0x1e0] sm:$0xff]
        %v292 = vld [vmem:[%s208 + $0x1e8] sm:$0xff]
        %v293 = vld [vmem:[%s208 + $0x1f0] sm:$0xff]
        %v294 = vld [vmem:[%s208 + $0x1f8] sm:$0xff]
        %vm295 = vcmask 523264
        %296 = vst.msk [vmem:[#allocation2] sm:$0xff] %vm295, %v231
        %297 = vst.msk [vmem:[#allocation2 + $0x8] sm:$0xff] %vm295, %v232
        %298 = vst.msk [vmem:[#allocation2 + $0x10] sm:$0xff] %vm295, %v233
        %299 = vst.msk [vmem:[#allocation2 + $0x18] sm:$0xff] %vm295, %v234
        %300 = vst.msk [vmem:[#allocation2 + $0x20] sm:$0xff] %vm295, %v235
        %301 = vst.msk [vmem:[#allocation2 + $0x28] sm:$0xff] %vm295, %v236
        %302 = vst.msk [vmem:[#allocation2 + $0x30] sm:$0xff] %vm295, %v237
        %303 = vst.msk [vmem:[#allocation2 + $0x38] sm:$0xff] %vm295, %v238
        %304 = vst.msk [vmem:[#allocation2 + $0x40] sm:$0xff] %vm295, %v239
        %305 = vst.msk [vmem:[#allocation2 + $0x48] sm:$0xff] %vm295, %v240
        %306 = vst.msk [vmem:[#allocation2 + $0x50] sm:$0xff] %vm295, %v241
        %307 = vst.msk [vmem:[#allocation2 + $0x58] sm:$0xff] %vm295, %v242
        %308 = vst.msk [vmem:[#allocation2 + $0x60] sm:$0xff] %vm295, %v243
        %309 = vst.msk [vmem:[#allocation2 + $0x68] sm:$0xff] %vm295, %v244
        %310 = vst.msk [vmem:[#allocation2 + $0x70] sm:$0xff] %vm295, %v245
        %311 = vst.msk [vmem:[#allocation2 + $0x78] sm:$0xff] %vm295, %v246
        %312 = vst.msk [vmem:[#allocation2 + $0x80] sm:$0xff] %vm295, %v247
        %313 = vst.msk [vmem:[#allocation2 + $0x88] sm:$0xff] %vm295, %v248
        %314 = vst.msk [vmem:[#allocation2 + $0x90] sm:$0xff] %vm295, %v249
        %315 = vst.msk [vmem:[#allocation2 + $0x98] sm:$0xff] %vm295, %v250
        %316 = vst.msk [vmem:[#allocation2 + $0xa0] sm:$0xff] %vm295, %v251
        %317 = vst.msk [vmem:[#allocation2 + $0xa8] sm:$0xff] %vm295, %v252
        %318 = vst.msk [vmem:[#allocation2 + $0xb0] sm:$0xff] %vm295, %v253
        %319 = vst.msk [vmem:[#allocation2 + $0xb8] sm:$0xff] %vm295, %v254
        %320 = vst.msk [vmem:[#allocation2 + $0xc0] sm:$0xff] %vm295, %v255
        %321 = vst.msk [vmem:[#allocation2 + $0xc8] sm:$0xff] %vm295, %v256
        %322 = vst.msk [vmem:[#allocation2 + $0xd0] sm:$0xff] %vm295, %v257
        %323 = vst.msk [vmem:[#allocation2 + $0xd8] sm:$0xff] %vm295, %v258
        %324 = vst.msk [vmem:[#allocation2 + $0xe0] sm:$0xff] %vm295, %v259
        %325 = vst.msk [vmem:[#allocation2 + $0xe8] sm:$0xff] %vm295, %v260
        %326 = vst.msk [vmem:[#allocation2 + $0xf0] sm:$0xff] %vm295, %v261
        %327 = vst.msk [vmem:[#allocation2 + $0xf8] sm:$0xff] %vm295, %v262
        %328 = vst.msk [vmem:[#allocation2 + $0x100] sm:$0xff] %vm295, %v263
        %329 = vst.msk [vmem:[#allocation2 + $0x108] sm:$0xff] %vm295, %v264
        %330 = vst.msk [vmem:[#allocation2 + $0x110] sm:$0xff] %vm295, %v265
        %331 = vst.msk [vmem:[#allocation2 + $0x118] sm:$0xff] %vm295, %v266
        %332 = vst.msk [vmem:[#allocation2 + $0x120] sm:$0xff] %vm295, %v267
        %333 = vst.msk [vmem:[#allocation2 + $0x128] sm:$0xff] %vm295, %v268
        %334 = vst.msk [vmem:[#allocation2 + $0x130] sm:$0xff] %vm295, %v269
        %335 = vst.msk [vmem:[#allocation2 + $0x138] sm:$0xff] %vm295, %v270
        %336 = vst.msk [vmem:[#allocation2 + $0x140] sm:$0xff] %vm295, %v271
        %337 = vst.msk [vmem:[#allocation2 + $0x148] sm:$0xff] %vm295, %v272
        %338 = vst.msk [vmem:[#allocation2 + $0x150] sm:$0xff] %vm295, %v273
        %339 = vst.msk [vmem:[#allocation2 + $0x158] sm:$0xff] %vm295, %v274
        %340 = vst.msk [vmem:[#allocation2 + $0x160] sm:$0xff] %vm295, %v275
        %341 = vst.msk [vmem:[#allocation2 + $0x168] sm:$0xff] %vm295, %v276
        %342 = vst.msk [vmem:[#allocation2 + $0x170] sm:$0xff] %vm295, %v277
        %343 = vst.msk [vmem:[#allocation2 + $0x178] sm:$0xff] %vm295, %v278
        %344 = vst.msk [vmem:[#allocation2 + $0x180] sm:$0xff] %vm295, %v279
        %345 = vst.msk [vmem:[#allocation2 + $0x188] sm:$0xff] %vm295, %v280
        %346 = vst.msk [vmem:[#allocation2 + $0x190] sm:$0xff] %vm295, %v281
        %347 = vst.msk [vmem:[#allocation2 + $0x198] sm:$0xff] %vm295, %v282
        %348 = vst.msk [vmem:[#allocation2 + $0x1a0] sm:$0xff] %vm295, %v283
        %349 = vst.msk [vmem:[#allocation2 + $0x1a8] sm:$0xff] %vm295, %v284
        %350 = vst.msk [vmem:[#allocation2 + $0x1b0] sm:$0xff] %vm295, %v285
        %351 = vst.msk [vmem:[#allocation2 + $0x1b8] sm:$0xff] %vm295, %v286
        %352 = vst.msk [vmem:[#allocation2 + $0x1c0] sm:$0xff] %vm295, %v287
        %353 = vst.msk [vmem:[#allocation2 + $0x1c8] sm:$0xff] %vm295, %v288
        %354 = vst.msk [vmem:[#allocation2 + $0x1d0] sm:$0xff] %vm295, %v289
        %355 = vst.msk [vmem:[#allocation2 + $0x1d8] sm:$0xff] %vm295, %v290
        %356 = vst.msk [vmem:[#allocation2 + $0x1e0] sm:$0xff] %vm295, %v291
        %357 = vst.msk [vmem:[#allocation2 + $0x1e8] sm:$0xff] %vm295, %v292
        %358 = vst.msk [vmem:[#allocation2 + $0x1f0] sm:$0xff] %vm295, %v293
        %359 = vst.msk [vmem:[#allocation2 + $0x1f8] sm:$0xff] %vm295, %v294
      $region36: #{evoformer_forward.3} parent=31 // pred_fallthru
        _
      %v360 = vld [vmem:[#allocation2] sm:$0xff]
      %v361 = vld [vmem:[#allocation2 + $0x8] sm:$0xff]
      %v362 = vld [vmem:[#allocation2 + $0x10] sm:$0xff]
      %v363 = vld [vmem:[#allocation2 + $0x18] sm:$0xff]
      %v364 = vld [vmem:[#allocation2 + $0x20] sm:$0xff]
      %v365 = vld [vmem:[#allocation2 + $0x28] sm:$0xff]
      %v366 = vld [vmem:[#allocation2 + $0x30] sm:$0xff]
      %v367 = vld [vmem:[#allocation2 + $0x38] sm:$0xff]
      %v368 = vld [vmem:[#allocation2 + $0x40] sm:$0xff]
      %v369 = vld [vmem:[#allocation2 + $0x48] sm:$0xff]
      %v370 = vld [vmem:[#allocation2 + $0x50] sm:$0xff]
      %v371 = vld [vmem:[#allocation2 + $0x58] sm:$0xff]
      %v372 = vld [vmem:[#allocation2 + $0x60] sm:$0xff]
      %v373 = vld [vmem:[#allocation2 + $0x68] sm:$0xff]
      %v374 = vld [vmem:[#allocation2 + $0x70] sm:$0xff]
      %v375 = vld [vmem:[#allocation2 + $0x78] sm:$0xff]
      %v376 = vld [vmem:[#allocation2 + $0x80] sm:$0xff]
      %v377 = vld [vmem:[#allocation2 + $0x88] sm:$0xff]
      %v378 = vld [vmem:[#allocation2 + $0x90] sm:$0xff]
      %v379 = vld [vmem:[#allocation2 + $0x98] sm:$0xff]
      %v380 = vld [vmem:[#allocation2 + $0xa0] sm:$0xff]
      %v381 = vld [vmem:[#allocation2 + $0xa8] sm:$0xff]
      %v382 = vld [vmem:[#allocation2 + $0xb0] sm:$0xff]
      %v383 = vld [vmem:[#allocation2 + $0xb8] sm:$0xff]
      %v384 = vld [vmem:[#allocation2 + $0xc0] sm:$0xff]
      %v385 = vld [vmem:[#allocation2 + $0xc8] sm:$0xff]
      %v386 = vld [vmem:[#allocation2 + $0xd0] sm:$0xff]
      %v387 = vld [vmem:[#allocation2 + $0xd8] sm:$0xff]
      %v388 = vld [vmem:[#allocation2 + $0xe0] sm:$0xff]
      %v389 = vld [vmem:[#allocation2 + $0xe8] sm:$0xff]
      %v390 = vld [vmem:[#allocation2 + $0xf0] sm:$0xff]
      %v391 = vld [vmem:[#allocation2 + $0xf8] sm:$0xff]
      %v392 = vld [vmem:[#allocation2 + $0x100] sm:$0xff]
      %v393 = vld [vmem:[#allocation2 + $0x108] sm:$0xff]
      %v394 = vld [vmem:[#allocation2 + $0x110] sm:$0xff]
      %v395 = vld [vmem:[#allocation2 + $0x118] sm:$0xff]
      %v396 = vld [vmem:[#allocation2 + $0x120] sm:$0xff]
      %v397 = vld [vmem:[#allocation2 + $0x128] sm:$0xff]
      %v398 = vld [vmem:[#allocation2 + $0x130] sm:$0xff]
      %v399 = vld [vmem:[#allocation2 + $0x138] sm:$0xff]
      %v400 = vld [vmem:[#allocation2 + $0x140] sm:$0xff]
      %v401 = vld [vmem:[#allocation2 + $0x148] sm:$0xff]
      %v402 = vld [vmem:[#allocation2 + $0x150] sm:$0xff]
      %v403 = vld [vmem:[#allocation2 + $0x158] sm:$0xff]
      %v404 = vld [vmem:[#allocation2 + $0x160] sm:$0xff]
      %v405 = vld [vmem:[#allocation2 + $0x168] sm:$0xff]
      %v406 = vld [vmem:[#allocation2 + $0x170] sm:$0xff]
      %v407 = vld [vmem:[#allocation2 + $0x178] sm:$0xff]
      %v408 = vld [vmem:[#allocation2 + $0x180] sm:$0xff]
      %v409 = vld [vmem:[#allocation2 + $0x188] sm:$0xff]
      %v410 = vld [vmem:[#allocation2 + $0x190] sm:$0xff]
      %v411 = vld [vmem:[#allocation2 + $0x198] sm:$0xff]
      %v412 = vld [vmem:[#allocation2 + $0x1a0] sm:$0xff]
      %v413 = vld [vmem:[#allocation2 + $0x1a8] sm:$0xff]
      %v414 = vld [vmem:[#allocation2 + $0x1b0] sm:$0xff]
      %v415 = vld [vmem:[#allocation2 + $0x1b8] sm:$0xff]
      %v416 = vld [vmem:[#allocation2 + $0x1c0] sm:$0xff]
      %v417 = vld [vmem:[#allocation2 + $0x1c8] sm:$0xff]
      %v418 = vld [vmem:[#allocation2 + $0x1d0] sm:$0xff]
      %v419 = vld [vmem:[#allocation2 + $0x1d8] sm:$0xff]
      %v420 = vld [vmem:[#allocation2 + $0x1e0] sm:$0xff]
      %v421 = vld [vmem:[#allocation2 + $0x1e8] sm:$0xff]
      %v422 = vld [vmem:[#allocation2 + $0x1f0] sm:$0xff]
      %v423 = vld [vmem:[#allocation2 + $0x1f8] sm:$0xff]
      %v424 = vpack.c.bf16 %v361, %v360
      %v425 = vpack.c.bf16 %v363, %v362
      %v426 = vpack.c.bf16 %v365, %v364
      %v427 = vpack.c.bf16 %v367, %v366
      %v428 = vpack.c.bf16 %v369, %v368
      %v429 = vpack.c.bf16 %v371, %v370
      %v430 = vpack.c.bf16 %v373, %v372
      %v431 = vpack.c.bf16 %v375, %v374
      %v432 = vpack.c.bf16 %v377, %v376
      %v433 = vpack.c.bf16 %v379, %v378
      %v434 = vpack.c.bf16 %v381, %v380
      %v435 = vpack.c.bf16 %v383, %v382
      %v436 = vpack.c.bf16 %v385, %v384
      %v437 = vpack.c.bf16 %v387, %v386
      %v438 = vpack.c.bf16 %v389, %v388
      %v439 = vpack.c.bf16 %v391, %v390
      %v440 = vpack.c.bf16 %v393, %v392
      %v441 = vpack.c.bf16 %v395, %v394
      %v442 = vpack.c.bf16 %v397, %v396
      %v443 = vpack.c.bf16 %v399, %v398
      %v444 = vpack.c.bf16 %v401, %v400
      %v445 = vpack.c.bf16 %v403, %v402
      %v446 = vpack.c.bf16 %v405, %v404
      %v447 = vpack.c.bf16 %v407, %v406
      %v448 = vpack.c.bf16 %v409, %v408
      %v449 = vpack.c.bf16 %v411, %v410
      %v450 = vpack.c.bf16 %v413, %v412
      %v451 = vpack.c.bf16 %v415, %v414
      %v452 = vpack.c.bf16 %v417, %v416
      %v453 = vpack.c.bf16 %v419, %v418
      %v454 = vpack.c.bf16 %v421, %v420
      %v455 = vpack.c.bf16 %v423, %v422
      %v456 = vld [vmem:[%s214] sm:$0xff]
      %v457 = vld [vmem:[%s214 + $0x8] sm:$0xff]
      %v458 = vld [vmem:[%s214 + $0x10] sm:$0xff]
      %v459 = vld [vmem:[%s214 + $0x18] sm:$0xff]
      %v460 = vld [vmem:[%s214 + $0x20] sm:$0xff]
      %v461 = vld [vmem:[%s214 + $0x28] sm:$0xff]
      %v462 = vld [vmem:[%s214 + $0x30] sm:$0xff]
      %v463 = vld [vmem:[%s214 + $0x38] sm:$0xff]
      %v472 = vunpack.c.l.b16 %v456
      %v473 = vunpack.c.h.b16 %v456
      %v474 = vunpack.c.l.b16 %v457
      %v475 = vunpack.c.h.b16 %v457
      %v476 = vunpack.c.l.b16 %v458
      %v477 = vunpack.c.h.b16 %v458
      %v478 = vunpack.c.l.b16 %v459
      %v479 = vunpack.c.h.b16 %v459
      %v480 = vunpack.c.l.b16 %v460
      %v481 = vunpack.c.h.b16 %v460
      %v482 = vunpack.c.l.b16 %v461
      %v483 = vunpack.c.h.b16 %v461
      %v484 = vunpack.c.l.b16 %v462
      %v485 = vunpack.c.h.b16 %v462
      %v486 = vunpack.c.l.b16 %v463
      %v487 = vunpack.c.h.b16 %v463
      %v488 = vpack.c.b16 %v474, %v472
      %v489 = vpack.c.b16 %v475, %v473
      %v490 = vpack.c.b16 %v478, %v476
      %v491 = vpack.c.b16 %v479, %v477
      %v492 = vpack.c.b16 %v482, %v480
      %v493 = vpack.c.b16 %v483, %v481
      %v494 = vpack.c.b16 %v486, %v484
      %v495 = vpack.c.b16 %v487, %v485
      %vm504 = vcmask 523264
      %v506 = vsel %vm504, %v424, 0
      %v509 = vsel %vm504, %v425, 0
      %v512 = vsel %vm504, %v426, 0
      %v515 = vsel %vm504, %v427, 0
      %v518 = vsel %vm504, %v428, 0
      %v521 = vsel %vm504, %v429, 0
      %v524 = vsel %vm504, %v430, 0
      %v527 = vsel %vm504, %v431, 0
      %v530 = vsel %vm504, %v432, 0
      %v533 = vsel %vm504, %v433, 0
      %v536 = vsel %vm504, %v434, 0
      %v539 = vsel %vm504, %v435, 0
      %v542 = vsel %vm504, %v436, 0
      %v545 = vsel %vm504, %v437, 0
      %v548 = vsel %vm504, %v438, 0
      %v551 = vsel %vm504, %v439, 0
      %v554 = vsel %vm504, %v440, 0
      %v557 = vsel %vm504, %v441, 0
      %v560 = vsel %vm504, %v442, 0
      %v563 = vsel %vm504, %v443, 0
      %v566 = vsel %vm504, %v444, 0
      %v569 = vsel %vm504, %v445, 0
      %v572 = vsel %vm504, %v446, 0
      %v575 = vsel %vm504, %v447, 0
      %v578 = vsel %vm504, %v448, 0
      %v581 = vsel %vm504, %v449, 0
      %v584 = vsel %vm504, %v450, 0
      %v587 = vsel %vm504, %v451, 0
      %v590 = vsel %vm504, %v452, 0
      %v593 = vsel %vm504, %v453, 0
      %v596 = vsel %vm504, %v454, 0
      %v599 = vsel %vm504, %v455, 0
      %601 = vmatprep.subr.bf16.mxu0 %v489
      %602 = vmatpush1.bf16.msra.mxu0 %v488
      %603 = vmatprep.subr.bf16.mxu0 %v491
      %604 = vmatpush1.bf16.msra.mxu0 %v490
      %605 = vmatprep.subr.bf16.mxu0 %v493
      %606 = vmatpush1.bf16.msra.mxu0 %v492
      %607 = vmatprep.subr.bf16.mxu0 %v495
      %608 = vmatpush1.bf16.msra.mxu0 %v494
      %609 = vmatprep.subr.bf16.mxu0 0
      %610 = vmatpush1.bf16.msra.mxu0 0
      %611 = vmatprep.subr.bf16.mxu0 0
      %612 = vmatpush1.bf16.msra.mxu0 0
      %613 = vmatprep.subr.bf16.mxu0 0
      %614 = vmatpush1.bf16.msra.mxu0 0
      %615 = vmatprep.subr.bf16.mxu0 0
      %616 = vmatpush1.bf16.msra.mxu0 0
      %617 = vmatprep.subr.bf16.mxu0 0
      %618 = vmatpush1.bf16.msra.mxu0 0
      %619 = vmatprep.subr.bf16.mxu0 0
      %620 = vmatpush1.bf16.msra.mxu0 0
      %621 = vmatprep.subr.bf16.mxu0 0
      %622 = vmatpush1.bf16.msra.mxu0 0
      %623 = vmatprep.subr.bf16.mxu0 0
      %624 = vmatpush1.bf16.msra.mxu0 0
      %625 = vmatprep.subr.bf16.mxu0 0
      %626 = vmatpush1.bf16.msra.mxu0 0
      %627 = vmatprep.subr.bf16.mxu0 0
      %628 = vmatpush1.bf16.msra.mxu0 0
      %629 = vmatprep.subr.bf16.mxu0 0
      %630 = vmatpush1.bf16.msra.mxu0 0
      %631 = vmatprep.subr.bf16.mxu0 0
      %632 = vmatpush1.bf16.msra.mxu0 0
      %633 = vmatprep.mubr.bf16.mxu0 0
      %634 = vmatmul.mubr.bf16.gmra.mrb[0].mxu0 %v506
      %v635 = vpop.f32.mrb[0].mxu0
      %v636 = vadd.f32 0.0, %v635
      %v637 = vpop.f32.mrb[0].mxu0
      %v638 = vadd.f32 0.0, %v637
      %v639 = vpop.f32.mrb[0].mxu0
      %v640 = vadd.f32 0.0, %v639
      %v641 = vpop.f32.mrb[0].mxu0
      %v642 = vadd.f32 0.0, %v641
      %643 = vmatprep.mubr.bf16.mxu0 0
      %644 = vmatmul.mubr.bf16.gmra.mrb[0].mxu0 %v509
      %v645 = vpop.f32.mrb[0].mxu0
      %v646 = vadd.f32 0.0, %v645
      %v647 = vpop.f32.mrb[0].mxu0
      %v648 = vadd.f32 0.0, %v647
      %v649 = vpop.f32.mrb[0].mxu0
      %v650 = vadd.f32 0.0, %v649
      %v651 = vpop.f32.mrb[0].mxu0
      %v652 = vadd.f32 0.0, %v651
      %653 = vmatprep.mubr.bf16.mxu0 0
      %654 = vmatmul.mubr.bf16.gmra.mrb[0].mxu0 %v512
      %v655 = vpop.f32.mrb[0].mxu0
      %v656 = vadd.f32 0.0, %v655
      %v657 = vpop.f32.mrb[0].mxu0
      %v658 = vadd.f32 0.0, %v657
      %v659 = vpop.f32.mrb[0].mxu0
      %v660 = vadd.f32 0.0, %v659
      %v661 = vpop.f32.mrb[0].mxu0
      %v662 = vadd.f32 0.0, %v661
      %663 = vmatprep.mubr.bf16.mxu0 0
      %664 = vmatmul.mubr.bf16.gmra.mrb[0].mxu0 %v515
      %v665 = vpop.f32.mrb[0].mxu0
      %v666 = vadd.f32 0.0, %v665
      %v667 = vpop.f32.mrb[0].mxu0
      %v668 = vadd.f32 0.0, %v667
      %v669 = vpop.f32.mrb[0].mxu0
      %v670 = vadd.f32 0.0, %v669
      %v671 = vpop.f32.mrb[0].mxu0
      %v672 = vadd.f32 0.0, %v671
      %673 = vmatprep.mubr.bf16.mxu0 0
      %674 = vmatmul.mubr.bf16.gmra.mrb[0].mxu0 %v518
      %v675 = vpop.f32.mrb[0].mxu0
      %v676 = vadd.f32 0.0, %v675
      %v677 = vpop.f32.mrb[0].mxu0
      %v678 = vadd.f32 0.0, %v677
      %v679 = vpop.f32.mrb[0].mxu0
      %v680 = vadd.f32 0.0, %v679
      %v681 = vpop.f32.mrb[0].mxu0
      %v682 = vadd.f32 0.0, %v681
      %683 = vmatprep.mubr.bf16.mxu0 0
      %684 = vmatmul.mubr.bf16.gmra.mrb[0].mxu0 %v521
      %v685 = vpop.f32.mrb[0].mxu0
      %v686 = vadd.f32 0.0, %v685
      %v687 = vpop.f32.mrb[0].mxu0
      %v688 = vadd.f32 0.0, %v687
      %v689 = vpop.f32.mrb[0].mxu0
      %v690 = vadd.f32 0.0, %v689
      %v691 = vpop.f32.mrb[0].mxu0
      %v692 = vadd.f32 0.0, %v691
      %693 = vmatprep.mubr.bf16.mxu0 0
      %694 = vmatmul.mubr.bf16.gmra.mrb[0].mxu0 %v524
      %v695 = vpop.f32.mrb[0].mxu0
      %v696 = vadd.f32 0.0, %v695
      %v697 = vpop.f32.mrb[0].mxu0
      %v698 = vadd.f32 0.0, %v697
      %v699 = vpop.f32.mrb[0].mxu0
      %v700 = vadd.f32 0.0, %v699
      %v701 = vpop.f32.mrb[0].mxu0
      %v702 = vadd.f32 0.0, %v701
      %703 = vmatprep.mubr.bf16.mxu0 0
      %704 = vmatmul.mubr.bf16.gmra.mrb[0].mxu0 %v527
      %v705 = vpop.f32.mrb[0].mxu0
      %v706 = vadd.f32 0.0, %v705
      %v707 = vpop.f32.mrb[0].mxu0
      %v708 = vadd.f32 0.0, %v707
      %v709 = vpop.f32.mrb[0].mxu0
      %v710 = vadd.f32 0.0, %v709
      %v711 = vpop.f32.mrb[0].mxu0
      %v712 = vadd.f32 0.0, %v711
      %713 = vmatprep.mubr.bf16.mxu0 0
      %714 = vmatmul.mubr.bf16.gmra.mrb[0].mxu0 %v530
      %v715 = vpop.f32.mrb[0].mxu0
      %v716 = vadd.f32 0.0, %v715
      %v717 = vpop.f32.mrb[0].mxu0
      %v718 = vadd.f32 0.0, %v717
      %v719 = vpop.f32.mrb[0].mxu0
      %v720 = vadd.f32 0.0, %v719
      %v721 = vpop.f32.mrb[0].mxu0
      %v722 = vadd.f32 0.0, %v721
      %723 = vmatprep.mubr.bf16.mxu0 0
      %724 = vmatmul.mubr.bf16.gmra.mrb[0].mxu0 %v533
      %v725 = vpop.f32.mrb[0].mxu0
      %v726 = vadd.f32 0.0, %v725
      %v727 = vpop.f32.mrb[0].mxu0
      %v728 = vadd.f32 0.0, %v727
      %v729 = vpop.f32.mrb[0].mxu0
      %v730 = vadd.f32 0.0, %v729
      %v731 = vpop.f32.mrb[0].mxu0
      %v732 = vadd.f32 0.0, %v731
      %733 = vmatprep.mubr.bf16.mxu0 0
      %734 = vmatmul.mubr.bf16.gmra.mrb[0].mxu0 %v536
      %v735 = vpop.f32.mrb[0].mxu0
      %v736 = vadd.f32 0.0, %v735
      %v737 = vpop.f32.mrb[0].mxu0
      %v738 = vadd.f32 0.0, %v737
      %v739 = vpop.f32.mrb[0].mxu0
      %v740 = vadd.f32 0.0, %v739
      %v741 = vpop.f32.mrb[0].mxu0
      %v742 = vadd.f32 0.0, %v741
      %743 = vmatprep.mubr.bf16.mxu0 0
      %744 = vmatmul.mubr.bf16.gmra.mrb[0].mxu0 %v539
      %v745 = vpop.f32.mrb[0].mxu0
      %v746 = vadd.f32 0.0, %v745
      %v747 = vpop.f32.mrb[0].mxu0
      %v748 = vadd.f32 0.0, %v747
      %v749 = vpop.f32.mrb[0].mxu0
      %v750 = vadd.f32 0.0, %v749
      %v751 = vpop.f32.mrb[0].mxu0
      %v752 = vadd.f32 0.0, %v751
      %753 = vmatprep.mubr.bf16.mxu0 0
      %754 = vmatmul.mubr.bf16.gmra.mrb[0].mxu0 %v542
      %v755 = vpop.f32.mrb[0].mxu0
      %v756 = vadd.f32 0.0, %v755
      %v757 = vpop.f32.mrb[0].mxu0
      %v758 = vadd.f32 0.0, %v757
      %v759 = vpop.f32.mrb[0].mxu0
      %v760 = vadd.f32 0.0, %v759
      %v761 = vpop.f32.mrb[0].mxu0
      %v762 = vadd.f32 0.0, %v761
      %763 = vmatprep.mubr.bf16.mxu0 0
      %764 = vmatmul.mubr.bf16.gmra.mrb[0].mxu0 %v545
      %v765 = vpop.f32.mrb[0].mxu0
      %v766 = vadd.f32 0.0, %v765
      %v767 = vpop.f32.mrb[0].mxu0
      %v768 = vadd.f32 0.0, %v767
      %v769 = vpop.f32.mrb[0].mxu0
      %v770 = vadd.f32 0.0, %v769
      %v771 = vpop.f32.mrb[0].mxu0
      %v772 = vadd.f32 0.0, %v771
      %773 = vmatprep.mubr.bf16.mxu0 0
      %774 = vmatmul.mubr.bf16.gmra.mrb[0].mxu0 %v548
      %v775 = vpop.f32.mrb[0].mxu0
      %v776 = vadd.f32 0.0, %v775
      %v777 = vpop.f32.mrb[0].mxu0
      %v778 = vadd.f32 0.0, %v777
      %v779 = vpop.f32.mrb[0].mxu0
      %v780 = vadd.f32 0.0, %v779
      %v781 = vpop.f32.mrb[0].mxu0
      %v782 = vadd.f32 0.0, %v781
      %783 = vmatprep.mubr.bf16.mxu0 0
      %784 = vmatmul.mubr.bf16.gmra.mrb[0].mxu0 %v551
      %v785 = vpop.f32.mrb[0].mxu0
      %v786 = vadd.f32 0.0, %v785
      %v787 = vpop.f32.mrb[0].mxu0
      %v788 = vadd.f32 0.0, %v787
      %v789 = vpop.f32.mrb[0].mxu0
      %v790 = vadd.f32 0.0, %v789
      %v791 = vpop.f32.mrb[0].mxu0
      %v792 = vadd.f32 0.0, %v791
      %793 = vmatprep.mubr.bf16.mxu0 0
      %794 = vmatmul.mubr.bf16.gmra.mrb[0].mxu0 %v554
      %v795 = vpop.f32.mrb[0].mxu0
      %v796 = vadd.f32 0.0, %v795
      %v797 = vpop.f32.mrb[0].mxu0
      %v798 = vadd.f32 0.0, %v797
      %v799 = vpop.f32.mrb[0].mxu0
      %v800 = vadd.f32 0.0, %v799
      %v801 = vpop.f32.mrb[0].mxu0
      %v802 = vadd.f32 0.0, %v801
      %803 = vmatprep.mubr.bf16.mxu0 0
      %804 = vmatmul.mubr.bf16.gmra.mrb[0].mxu0 %v557
      %v805 = vpop.f32.mrb[0].mxu0
      %v806 = vadd.f32 0.0, %v805
      %v807 = vpop.f32.mrb[0].mxu0
      %v808 = vadd.f32 0.0, %v807
      %v809 = vpop.f32.mrb[0].mxu0
      %v810 = vadd.f32 0.0, %v809
      %v811 = vpop.f32.mrb[0].mxu0
      %v812 = vadd.f32 0.0, %v811
      %813 = vmatprep.mubr.bf16.mxu0 0
      %814 = vmatmul.mubr.bf16.gmra.mrb[0].mxu0 %v560
      %v815 = vpop.f32.mrb[0].mxu0
      %v816 = vadd.f32 0.0, %v815
      %v817 = vpop.f32.mrb[0].mxu0
      %v818 = vadd.f32 0.0, %v817
      %v819 = vpop.f32.mrb[0].mxu0
      %v820 = vadd.f32 0.0, %v819
      %v821 = vpop.f32.mrb[0].mxu0
      %v822 = vadd.f32 0.0, %v821
      %823 = vmatprep.mubr.bf16.mxu0 0
      %824 = vmatmul.mubr.bf16.gmra.mrb[0].mxu0 %v563
      %v825 = vpop.f32.mrb[0].mxu0
      %v826 = vadd.f32 0.0, %v825
      %v827 = vpop.f32.mrb[0].mxu0
      %v828 = vadd.f32 0.0, %v827
      %v829 = vpop.f32.mrb[0].mxu0
      %v830 = vadd.f32 0.0, %v829
      %v831 = vpop.f32.mrb[0].mxu0
      %v832 = vadd.f32 0.0, %v831
      %833 = vmatprep.mubr.bf16.mxu0 0
      %834 = vmatmul.mubr.bf16.gmra.mrb[0].mxu0 %v566
      %v835 = vpop.f32.mrb[0].mxu0
      %v836 = vadd.f32 0.0, %v835
      %v837 = vpop.f32.mrb[0].mxu0
      %v838 = vadd.f32 0.0, %v837
      %v839 = vpop.f32.mrb[0].mxu0
      %v840 = vadd.f32 0.0, %v839
      %v841 = vpop.f32.mrb[0].mxu0
      %v842 = vadd.f32 0.0, %v841
      %843 = vmatprep.mubr.bf16.mxu0 0
      %844 = vmatmul.mubr.bf16.gmra.mrb[0].mxu0 %v569
      %v845 = vpop.f32.mrb[0].mxu0
      %v846 = vadd.f32 0.0, %v845
      %v847 = vpop.f32.mrb[0].mxu0
      %v848 = vadd.f32 0.0, %v847
      %v849 = vpop.f32.mrb[0].mxu0
      %v850 = vadd.f32 0.0, %v849
      %v851 = vpop.f32.mrb[0].mxu0
      %v852 = vadd.f32 0.0, %v851
      %853 = vmatprep.mubr.bf16.mxu0 0
      %854 = vmatmul.mubr.bf16.gmra.mrb[0].mxu0 %v572
      %v855 = vpop.f32.mrb[0].mxu0
      %v856 = vadd.f32 0.0, %v855
      %v857 = vpop.f32.mrb[0].mxu0
      %v858 = vadd.f32 0.0, %v857
      %v859 = vpop.f32.mrb[0].mxu0
      %v860 = vadd.f32 0.0, %v859
      %v861 = vpop.f32.mrb[0].mxu0
      %v862 = vadd.f32 0.0, %v861
      %863 = vmatprep.mubr.bf16.mxu0 0
      %864 = vmatmul.mubr.bf16.gmra.mrb[0].mxu0 %v575
      %v865 = vpop.f32.mrb[0].mxu0
      %v866 = vadd.f32 0.0, %v865
      %v867 = vpop.f32.mrb[0].mxu0
      %v868 = vadd.f32 0.0, %v867
      %v869 = vpop.f32.mrb[0].mxu0
      %v870 = vadd.f32 0.0, %v869
      %v871 = vpop.f32.mrb[0].mxu0
      %v872 = vadd.f32 0.0, %v871
      %873 = vmatprep.mubr.bf16.mxu0 0
      %874 = vmatmul.mubr.bf16.gmra.mrb[0].mxu0 %v578
      %v875 = vpop.f32.mrb[0].mxu0
      %v876 = vadd.f32 0.0, %v875
      %v877 = vpop.f32.mrb[0].mxu0
      %v878 = vadd.f32 0.0, %v877
      %v879 = vpop.f32.mrb[0].mxu0
      %v880 = vadd.f32 0.0, %v879
      %v881 = vpop.f32.mrb[0].mxu0
      %v882 = vadd.f32 0.0, %v881
      %883 = vmatprep.mubr.bf16.mxu0 0
      %884 = vmatmul.mubr.bf16.gmra.mrb[0].mxu0 %v581
      %v885 = vpop.f32.mrb[0].mxu0
      %v886 = vadd.f32 0.0, %v885
      %v887 = vpop.f32.mrb[0].mxu0
      %v888 = vadd.f32 0.0, %v887
      %v889 = vpop.f32.mrb[0].mxu0
      %v890 = vadd.f32 0.0, %v889
      %v891 = vpop.f32.mrb[0].mxu0
      %v892 = vadd.f32 0.0, %v891
      %893 = vmatprep.mubr.bf16.mxu0 0
      %894 = vmatmul.mubr.bf16.gmra.mrb[0].mxu0 %v584
      %v895 = vpop.f32.mrb[0].mxu0
      %v896 = vadd.f32 0.0, %v895
      %v897 = vpop.f32.mrb[0].mxu0
      %v898 = vadd.f32 0.0, %v897
      %v899 = vpop.f32.mrb[0].mxu0
      %v900 = vadd.f32 0.0, %v899
      %v901 = vpop.f32.mrb[0].mxu0
      %v902 = vadd.f32 0.0, %v901
      %903 = vmatprep.mubr.bf16.mxu0 0
      %904 = vmatmul.mubr.bf16.gmra.mrb[0].mxu0 %v587
      %v905 = vpop.f32.mrb[0].mxu0
      %v906 = vadd.f32 0.0, %v905
      %v907 = vpop.f32.mrb[0].mxu0
      %v908 = vadd.f32 0.0, %v907
      %v909 = vpop.f32.mrb[0].mxu0
      %v910 = vadd.f32 0.0, %v909
      %v911 = vpop.f32.mrb[0].mxu0
      %v912 = vadd.f32 0.0, %v911
      %913 = vmatprep.mubr.bf16.mxu0 0
      %914 = vmatmul.mubr.bf16.gmra.mrb[0].mxu0 %v590
      %v915 = vpop.f32.mrb[0].mxu0
      %v916 = vadd.f32 0.0, %v915
      %v917 = vpop.f32.mrb[0].mxu0
      %v918 = vadd.f32 0.0, %v917
      %v919 = vpop.f32.mrb[0].mxu0
      %v920 = vadd.f32 0.0, %v919
      %v921 = vpop.f32.mrb[0].mxu0
      %v922 = vadd.f32 0.0, %v921
      %923 = vmatprep.mubr.bf16.mxu0 0
      %924 = vmatmul.mubr.bf16.gmra.mrb[0].mxu0 %v593
      %v925 = vpop.f32.mrb[0].mxu0
      %v926 = vadd.f32 0.0, %v925
      %v927 = vpop.f32.mrb[0].mxu0
      %v928 = vadd.f32 0.0, %v927
      %v929 = vpop.f32.mrb[0].mxu0
      %v930 = vadd.f32 0.0, %v929
      %v931 = vpop.f32.mrb[0].mxu0
      %v932 = vadd.f32 0.0, %v931
      %933 = vmatprep.mubr.bf16.mxu0 0
      %934 = vmatmul.mubr.bf16.gmra.mrb[0].mxu0 %v596
      %v935 = vpop.f32.mrb[0].mxu0
      %v936 = vadd.f32 0.0, %v935
      %v937 = vpop.f32.mrb[0].mxu0
      %v938 = vadd.f32 0.0, %v937
      %v939 = vpop.f32.mrb[0].mxu0
      %v940 = vadd.f32 0.0, %v939
      %v941 = vpop.f32.mrb[0].mxu0
      %v942 = vadd.f32 0.0, %v941
      %943 = vmatprep.mubr.bf16.mxu0 0
      %944 = vmatmul.mubr.bf16.gmra.mrb[0].mxu0 %v599
      %v945 = vpop.f32.mrb[0].mxu0
      %v946 = vadd.f32 0.0, %v945
      %v947 = vpop.f32.mrb[0].mxu0
      %v948 = vadd.f32 0.0, %v947
      %v949 = vpop.f32.mrb[0].mxu0
      %v950 = vadd.f32 0.0, %v949
      %v951 = vpop.f32.mrb[0].mxu0
      %v952 = vadd.f32 0.0, %v951
      %953 = vdwg.mxu0
      %v954 = vmax.f32 %v636, 0.0
      %v955 = vmax.f32 %v638, 0.0
      %v956 = vmax.f32 %v640, 0.0
      %v957 = vmax.f32 %v642, 0.0
      %v958 = vmax.f32 %v646, 0.0
      %v959 = vmax.f32 %v648, 0.0
      %v960 = vmax.f32 %v650, 0.0
      %v961 = vmax.f32 %v652, 0.0
      %v962 = vmax.f32 %v656, 0.0
      %v963 = vmax.f32 %v658, 0.0
      %v964 = vmax.f32 %v660, 0.0
      %v965 = vmax.f32 %v662, 0.0
      %v966 = vmax.f32 %v666, 0.0
      %v967 = vmax.f32 %v668, 0.0
      %v968 = vmax.f32 %v670, 0.0
      %v969 = vmax.f32 %v672, 0.0
      %v970 = vmax.f32 %v676, 0.0
      %v971 = vmax.f32 %v678, 0.0
      %v972 = vmax.f32 %v680, 0.0
      %v973 = vmax.f32 %v682, 0.0
      %v974 = vmax.f32 %v686, 0.0
      %v975 = vmax.f32 %v688, 0.0
      %v976 = vmax.f32 %v690, 0.0
      %v977 = vmax.f32 %v692, 0.0
      %v978 = vmax.f32 %v696, 0.0
      %v979 = vmax.f32 %v698, 0.0
      %v980 = vmax.f32 %v700, 0.0
      %v981 = vmax.f32 %v702, 0.0
      %v982 = vmax.f32 %v706, 0.0
      %v983 = vmax.f32 %v708, 0.0
      %v984 = vmax.f32 %v710, 0.0
      %v985 = vmax.f32 %v712, 0.0
      %v986 = vmax.f32 %v716, 0.0
      %v987 = vmax.f32 %v718, 0.0
      %v988 = vmax.f32 %v720, 0.0
      %v989 = vmax.f32 %v722, 0.0
      %v990 = vmax.f32 %v726, 0.0
      %v991 = vmax.f32 %v728, 0.0
      %v992 = vmax.f32 %v730, 0.0
      %v993 = vmax.f32 %v732, 0.0
      %v994 = vmax.f32 %v736, 0.0
      %v995 = vmax.f32 %v738, 0.0
      %v996 = vmax.f32 %v740, 0.0
      %v997 = vmax.f32 %v742, 0.0
      %v998 = vmax.f32 %v746, 0.0
      %v999 = vmax.f32 %v748, 0.0
      %v1000 = vmax.f32 %v750, 0.0
      %v1001 = vmax.f32 %v752, 0.0
      %v1002 = vmax.f32 %v756, 0.0
      %v1003 = vmax.f32 %v758, 0.0
      %v1004 = vmax.f32 %v760, 0.0
      %v1005 = vmax.f32 %v762, 0.0
      %v1006 = vmax.f32 %v766, 0.0
      %v1007 = vmax.f32 %v768, 0.0
      %v1008 = vmax.f32 %v770, 0.0
      %v1009 = vmax.f32 %v772, 0.0
      %v1010 = vmax.f32 %v776, 0.0
      %v1011 = vmax.f32 %v778, 0.0
      %v1012 = vmax.f32 %v780, 0.0
      %v1013 = vmax.f32 %v782, 0.0
      %v1014 = vmax.f32 %v786, 0.0
      %v1015 = vmax.f32 %v788, 0.0
      %v1016 = vmax.f32 %v790, 0.0
      %v1017 = vmax.f32 %v792, 0.0
      %v1018 = vmax.f32 %v796, 0.0
      %v1019 = vmax.f32 %v798, 0.0
      %v1020 = vmax.f32 %v800, 0.0
      %v1021 = vmax.f32 %v802, 0.0
      %v1022 = vmax.f32 %v806, 0.0
      %v1023 = vmax.f32 %v808, 0.0
      %v1024 = vmax.f32 %v810, 0.0
      %v1025 = vmax.f32 %v812, 0.0
      %v1026 = vmax.f32 %v816, 0.0
      %v1027 = vmax.f32 %v818, 0.0
      %v1028 = vmax.f32 %v820, 0.0
      %v1029 = vmax.f32 %v822, 0.0
      %v1030 = vmax.f32 %v826, 0.0
      %v1031 = vmax.f32 %v828, 0.0
      %v1032 = vmax.f32 %v830, 0.0
      %v1033 = vmax.f32 %v832, 0.0
      %v1034 = vmax.f32 %v836, 0.0
      %v1035 = vmax.f32 %v838, 0.0
      %v1036 = vmax.f32 %v840, 0.0
      %v1037 = vmax.f32 %v842, 0.0
      %v1038 = vmax.f32 %v846, 0.0
      %v1039 = vmax.f32 %v848, 0.0
      %v1040 = vmax.f32 %v850, 0.0
      %v1041 = vmax.f32 %v852, 0.0
      %v1042 = vmax.f32 %v856, 0.0
      %v1043 = vmax.f32 %v858, 0.0
      %v1044 = vmax.f32 %v860, 0.0
      %v1045 = vmax.f32 %v862, 0.0
      %v1046 = vmax.f32 %v866, 0.0
      %v1047 = vmax.f32 %v868, 0.0
      %v1048 = vmax.f32 %v870, 0.0
      %v1049 = vmax.f32 %v872, 0.0
      %v1050 = vmax.f32 %v876, 0.0
      %v1051 = vmax.f32 %v878, 0.0
      %v1052 = vmax.f32 %v880, 0.0
      %v1053 = vmax.f32 %v882, 0.0
      %v1054 = vmax.f32 %v886, 0.0
      %v1055 = vmax.f32 %v888, 0.0
      %v1056 = vmax.f32 %v890, 0.0
      %v1057 = vmax.f32 %v892, 0.0
      %v1058 = vmax.f32 %v896, 0.0
      %v1059 = vmax.f32 %v898, 0.0
      %v1060 = vmax.f32 %v900, 0.0
      %v1061 = vmax.f32 %v902, 0.0
      %v1062 = vmax.f32 %v906, 0.0
      %v1063 = vmax.f32 %v908, 0.0
      %v1064 = vmax.f32 %v910, 0.0
      %v1065 = vmax.f32 %v912, 0.0
      %v1066 = vmax.f32 %v916, 0.0
      %v1067 = vmax.f32 %v918, 0.0
      %v1068 = vmax.f32 %v920, 0.0
      %v1069 = vmax.f32 %v922, 0.0
      %v1070 = vmax.f32 %v926, 0.0
      %v1071 = vmax.f32 %v928, 0.0
      %v1072 = vmax.f32 %v930, 0.0
      %v1073 = vmax.f32 %v932, 0.0
      %v1074 = vmax.f32 %v936, 0.0
      %v1075 = vmax.f32 %v938, 0.0
      %v1076 = vmax.f32 %v940, 0.0
      %v1077 = vmax.f32 %v942, 0.0
      %v1078 = vmax.f32 %v946, 0.0
      %v1079 = vmax.f32 %v948, 0.0
      %v1080 = vmax.f32 %v950, 0.0
      %v1081 = vmax.f32 %v952, 0.0
      %v1082 = vpack.c.bf16 %v956, %v954
      %v1083 = vpack.c.bf16 %v957, %v955
      %v1084 = vpack.c.bf16 %v960, %v958
      %v1085 = vpack.c.bf16 %v961, %v959
      %v1086 = vpack.c.bf16 %v964, %v962
      %v1087 = vpack.c.bf16 %v965, %v963
      %v1088 = vpack.c.bf16 %v968, %v966
      %v1089 = vpack.c.bf16 %v969, %v967
      %v1090 = vpack.c.bf16 %v972, %v970
      %v1091 = vpack.c.bf16 %v973, %v971
      %v1092 = vpack.c.bf16 %v976, %v974
      %v1093 = vpack.c.bf16 %v977, %v975
      %v1094 = vpack.c.bf16 %v980, %v978
      %v1095 = vpack.c.bf16 %v981, %v979
      %v1096 = vpack.c.bf16 %v984, %v982
      %v1097 = vpack.c.bf16 %v985, %v983
      %v1098 = vpack.c.bf16 %v988, %v986
      %v1099 = vpack.c.bf16 %v989, %v987
      %v1100 = vpack.c.bf16 %v992, %v990
      %v1101 = vpack.c.bf16 %v993, %v991
      %v1102 = vpack.c.bf16 %v996, %v994
      %v1103 = vpack.c.bf16 %v997, %v995
      %v1104 = vpack.c.bf16 %v1000, %v998
      %v1105 = vpack.c.bf16 %v1001, %v999
      %v1106 = vpack.c.bf16 %v1004, %v1002
      %v1107 = vpack.c.bf16 %v1005, %v1003
      %v1108 = vpack.c.bf16 %v1008, %v1006
      %v1109 = vpack.c.bf16 %v1009, %v1007
      %v1110 = vpack.c.bf16 %v1012, %v1010
      %v1111 = vpack.c.bf16 %v1013, %v1011
      %v1112 = vpack.c.bf16 %v1016, %v1014
      %v1113 = vpack.c.bf16 %v1017, %v1015
      %v1114 = vpack.c.bf16 %v1020, %v1018
      %v1115 = vpack.c.bf16 %v1021, %v1019
      %v1116 = vpack.c.bf16 %v1024, %v1022
      %v1117 = vpack.c.bf16 %v1025, %v1023
      %v1118 = vpack.c.bf16 %v1028, %v1026
      %v1119 = vpack.c.bf16 %v1029, %v1027
      %v1120 = vpack.c.bf16 %v1032, %v1030
      %v1121 = vpack.c.bf16 %v1033, %v1031
      %v1122 = vpack.c.bf16 %v1036, %v1034
      %v1123 = vpack.c.bf16 %v1037, %v1035
      %v1124 = vpack.c.bf16 %v1040, %v1038
      %v1125 = vpack.c.bf16 %v1041, %v1039
      %v1126 = vpack.c.bf16 %v1044, %v1042
      %v1127 = vpack.c.bf16 %v1045, %v1043
      %v1128 = vpack.c.bf16 %v1048, %v1046
      %v1129 = vpack.c.bf16 %v1049, %v1047
      %v1130 = vpack.c.bf16 %v1052, %v1050
      %v1131 = vpack.c.bf16 %v1053, %v1051
      %v1132 = vpack.c.bf16 %v1056, %v1054
      %v1133 = vpack.c.bf16 %v1057, %v1055
      %v1134 = vpack.c.bf16 %v1060, %v1058
      %v1135 = vpack.c.bf16 %v1061, %v1059
      %v1136 = vpack.c.bf16 %v1064, %v1062
      %v1137 = vpack.c.bf16 %v1065, %v1063
      %v1138 = vpack.c.bf16 %v1068, %v1066
      %v1139 = vpack.c.bf16 %v1069, %v1067
      %v1140 = vpack.c.bf16 %v1072, %v1070
      %v1141 = vpack.c.bf16 %v1073, %v1071
      %v1142 = vpack.c.bf16 %v1076, %v1074
      %v1143 = vpack.c.bf16 %v1077, %v1075
      %v1144 = vpack.c.bf16 %v1080, %v1078
      %v1145 = vpack.c.bf16 %v1081, %v1079
      %v1146 = vld [vmem:[%s219] sm:$0xf]
      %v1147 = vld [vmem:[%s219 + $0x4] sm:$0xf]
      %v1148 = vld [vmem:[%s219 + $0x8] sm:$0xf]
      %v1149 = vld [vmem:[%s219 + $0xc] sm:$0xf]
      %v1150 = vld [vmem:[%s219 + $0x10] sm:$0xf]
      %v1151 = vld [vmem:[%s219 + $0x14] sm:$0xf]
      %v1152 = vld [vmem:[%s219 + $0x18] sm:$0xf]
      %v1153 = vld [vmem:[%s219 + $0x1c] sm:$0xf]
      %v1154 = vld [vmem:[%s219 + $0x20] sm:$0xf]
      %v1155 = vld [vmem:[%s219 + $0x24] sm:$0xf]
      %v1156 = vld [vmem:[%s219 + $0x28] sm:$0xf]
      %v1157 = vld [vmem:[%s219 + $0x2c] sm:$0xf]
      %v1158 = vld [vmem:[%s219 + $0x30] sm:$0xf]
      %v1159 = vld [vmem:[%s219 + $0x34] sm:$0xf]
      %v1160 = vld [vmem:[%s219 + $0x38] sm:$0xf]
      %v1161 = vld [vmem:[%s219 + $0x3c] sm:$0xf]
      %v1162 = vld [vmem:[%s219 + $0x40] sm:$0xf]
      %v1163 = vld [vmem:[%s219 + $0x44] sm:$0xf]
      %v1164 = vld [vmem:[%s219 + $0x48] sm:$0xf]
      %v1165 = vld [vmem:[%s219 + $0x4c] sm:$0xf]
      %v1166 = vld [vmem:[%s219 + $0x50] sm:$0xf]
      %v1167 = vld [vmem:[%s219 + $0x54] sm:$0xf]
      %v1168 = vld [vmem:[%s219 + $0x58] sm:$0xf]
      %v1169 = vld [vmem:[%s219 + $0x5c] sm:$0xf]
      %v1170 = vld [vmem:[%s219 + $0x60] sm:$0xf]
      %v1171 = vld [vmem:[%s219 + $0x64] sm:$0xf]
      %v1172 = vld [vmem:[%s219 + $0x68] sm:$0xf]
      %v1173 = vld [vmem:[%s219 + $0x6c] sm:$0xf]
      %v1174 = vld [vmem:[%s219 + $0x70] sm:$0xf]
      %v1175 = vld [vmem:[%s219 + $0x74] sm:$0xf]
      %v1176 = vld [vmem:[%s219 + $0x78] sm:$0xf]
      %v1177 = vld [vmem:[%s219 + $0x7c] sm:$0xf]
      %v1210 = vunpack.c.l.b16 %v1146
      %v1211 = vunpack.c.l.b16 %v1147
      %v1212 = vunpack.c.l.b16 %v1148
      %v1213 = vunpack.c.l.b16 %v1149
      %v1214 = vunpack.c.l.b16 %v1150
      %v1215 = vunpack.c.l.b16 %v1151
      %v1216 = vunpack.c.l.b16 %v1152
      %v1217 = vunpack.c.l.b16 %v1153
      %v1218 = vunpack.c.l.b16 %v1154
      %v1219 = vunpack.c.l.b16 %v1155
      %v1220 = vunpack.c.l.b16 %v1156
      %v1221 = vunpack.c.l.b16 %v1157
      %v1222 = vunpack.c.l.b16 %v1158
      %v1223 = vunpack.c.l.b16 %v1159
      %v1224 = vunpack.c.l.b16 %v1160
      %v1225 = vunpack.c.l.b16 %v1161
      %v1226 = vunpack.c.l.b16 %v1162
      %v1227 = vunpack.c.l.b16 %v1163
      %v1228 = vunpack.c.l.b16 %v1164
      %v1229 = vunpack.c.l.b16 %v1165
      %v1230 = vunpack.c.l.b16 %v1166
      %v1231 = vunpack.c.l.b16 %v1167
      %v1232 = vunpack.c.l.b16 %v1168
      %v1233 = vunpack.c.l.b16 %v1169
      %v1234 = vunpack.c.l.b16 %v1170
      %v1235 = vunpack.c.l.b16 %v1171
      %v1236 = vunpack.c.l.b16 %v1172
      %v1237 = vunpack.c.l.b16 %v1173
      %v1238 = vunpack.c.l.b16 %v1174
      %v1239 = vunpack.c.l.b16 %v1175
      %v1240 = vunpack.c.l.b16 %v1176
      %v1241 = vunpack.c.l.b16 %v1177
      %v1242 = vpack.c.b16 %v1211, %v1210
      %v1243 = vpack.c.b16 %v1213, %v1212
      %v1244 = vpack.c.b16 %v1215, %v1214
      %v1245 = vpack.c.b16 %v1217, %v1216
      %v1246 = vpack.c.b16 %v1219, %v1218
      %v1247 = vpack.c.b16 %v1221, %v1220
      %v1248 = vpack.c.b16 %v1223, %v1222
      %v1249 = vpack.c.b16 %v1225, %v1224
      %v1250 = vpack.c.b16 %v1227, %v1226
      %v1251 = vpack.c.b16 %v1229, %v1228
      %v1252 = vpack.c.b16 %v1231, %v1230
      %v1253 = vpack.c.b16 %v1233, %v1232
      %v1254 = vpack.c.b16 %v1235, %v1234
      %v1255 = vpack.c.b16 %v1237, %v1236
      %v1256 = vpack.c.b16 %v1239, %v1238
      %v1257 = vpack.c.b16 %v1241, %v1240
      %1274 = vmatprep.subr.bf16.mxu0 0
      %1275 = vmatpush1.bf16.msra.mxu0 %v1242
      %1276 = vmatprep.subr.bf16.mxu0 0
      %1277 = vmatpush1.bf16.msra.mxu0 %v1243
      %1278 = vmatprep.subr.bf16.mxu0 0
      %1279 = vmatpush1.bf16.msra.mxu0 %v1244
      %1280 = vmatprep.subr.bf16.mxu0 0
      %1281 = vmatpush1.bf16.msra.mxu0 %v1245
      %1282 = vmatprep.subr.bf16.mxu0 0
      %1283 = vmatpush1.bf16.msra.mxu0 %v1246
      %1284 = vmatprep.subr.bf16.mxu0 0
      %1285 = vmatpush1.bf16.msra.mxu0 %v1247
      %1286 = vmatprep.subr.bf16.mxu0 0
      %1287 = vmatpush1.bf16.msra.mxu0 %v1248
      %1288 = vmatprep.subr.bf16.mxu0 0
      %1289 = vmatpush1.bf16.msra.mxu0 %v1249
      %1290 = vmatprep.subr.bf16.mxu0 0
      %1291 = vmatpush1.bf16.msra.mxu0 %v1250
      %1292 = vmatprep.subr.bf16.mxu0 0
      %1293 = vmatpush1.bf16.msra.mxu0 %v1251
      %1294 = vmatprep.subr.bf16.mxu0 0
      %1295 = vmatpush1.bf16.msra.mxu0 %v1252
      %1296 = vmatprep.subr.bf16.mxu0 0
      %1297 = vmatpush1.bf16.msra.mxu0 %v1253
      %1298 = vmatprep.subr.bf16.mxu0 0
      %1299 = vmatpush1.bf16.msra.mxu0 %v1254
      %1300 = vmatprep.subr.bf16.mxu0 0
      %1301 = vmatpush1.bf16.msra.mxu0 %v1255
      %1302 = vmatprep.subr.bf16.mxu0 0
      %1303 = vmatpush1.bf16.msra.mxu0 %v1256
      %1304 = vmatprep.subr.bf16.mxu0 0
      %1305 = vmatpush1.bf16.msra.mxu0 %v1257
      %1306 = vmatprep.mubr.bf16.mxu0 %v1083
      %1307 = vmatmul.mubr.bf16.gmra.mrb[0].mxu0 %v1082
      %v1308 = vpop.f32.mrb[0].mxu0
      %v1309 = vadd.f32 0.0, %v1308
      %v1310 = vpop.f32.mrb[0].mxu0
      %v1311 = vpop.f32.mrb[0].mxu0
      %v1312 = vadd.f32 0.0, %v1311
      %v1313 = vpop.f32.mrb[0].mxu0
      %1314 = vmatprep.mubr.bf16.mxu0 %v1085
      %1315 = vmatmul.mubr.bf16.gmra.mrb[0].mxu0 %v1084
      %v1316 = vpop.f32.mrb[0].mxu0
      %v1317 = vadd.f32 0.0, %v1316
      %v1318 = vpop.f32.mrb[0].mxu0
      %v1319 = vpop.f32.mrb[0].mxu0
      %v1320 = vadd.f32 0.0, %v1319
      %v1321 = vpop.f32.mrb[0].mxu0
      %1322 = vmatprep.mubr.bf16.mxu0 %v1087
      %1323 = vmatmul.mubr.bf16.gmra.mrb[0].mxu0 %v1086
      %v1324 = vpop.f32.mrb[0].mxu0
      %v1325 = vadd.f32 0.0, %v1324
      %v1326 = vpop.f32.mrb[0].mxu0
      %v1327 = vpop.f32.mrb[0].mxu0
      %v1328 = vadd.f32 0.0, %v1327
      %v1329 = vpop.f32.mrb[0].mxu0
      %1330 = vmatprep.mubr.bf16.mxu0 %v1089
      %1331 = vmatmul.mubr.bf16.gmra.mrb[0].mxu0 %v1088
      %v1332 = vpop.f32.mrb[0].mxu0
      %v1333 = vadd.f32 0.0, %v1332
      %v1334 = vpop.f32.mrb[0].mxu0
      %v1335 = vpop.f32.mrb[0].mxu0
      %v1336 = vadd.f32 0.0, %v1335
      %v1337 = vpop.f32.mrb[0].mxu0
      %1338 = vmatprep.mubr.bf16.mxu0 %v1091
      %1339 = vmatmul.mubr.bf16.gmra.mrb[0].mxu0 %v1090
      %v1340 = vpop.f32.mrb[0].mxu0
      %v1341 = vadd.f32 0.0, %v1340
      %v1342 = vpop.f32.mrb[0].mxu0
      %v1343 = vpop.f32.mrb[0].mxu0
      %v1344 = vadd.f32 0.0, %v1343
      %v1345 = vpop.f32.mrb[0].mxu0
      %1346 = vmatprep.mubr.bf16.mxu0 %v1093
      %1347 = vmatmul.mubr.bf16.gmra.mrb[0].mxu0 %v1092
      %v1348 = vpop.f32.mrb[0].mxu0
      %v1349 = vadd.f32 0.0, %v1348
      %v1350 = vpop.f32.mrb[0].mxu0
      %v1351 = vpop.f32.mrb[0].mxu0
      %v1352 = vadd.f32 0.0, %v1351
      %v1353 = vpop.f32.mrb[0].mxu0
      %1354 = vmatprep.mubr.bf16.mxu0 %v1095
      %1355 = vmatmul.mubr.bf16.gmra.mrb[0].mxu0 %v1094
      %v1356 = vpop.f32.mrb[0].mxu0
      %v1357 = vadd.f32 0.0, %v1356
      %v1358 = vpop.f32.mrb[0].mxu0
      %v1359 = vpop.f32.mrb[0].mxu0
      %v1360 = vadd.f32 0.0, %v1359
      %v1361 = vpop.f32.mrb[0].mxu0
      %1362 = vmatprep.mubr.bf16.mxu0 %v1097
      %1363 = vmatmul.mubr.bf16.gmra.mrb[0].mxu0 %v1096
      %v1364 = vpop.f32.mrb[0].mxu0
      %v1365 = vadd.f32 0.0, %v1364
      %v1366 = vpop.f32.mrb[0].mxu0
      %v1367 = vpop.f32.mrb[0].mxu0
      %v1368 = vadd.f32 0.0, %v1367
      %v1369 = vpop.f32.mrb[0].mxu0
      %1370 = vmatprep.mubr.bf16.mxu0 %v1099
      %1371 = vmatmul.mubr.bf16.gmra.mrb[0].mxu0 %v1098
      %v1372 = vpop.f32.mrb[0].mxu0
      %v1373 = vadd.f32 0.0, %v1372
      %v1374 = vpop.f32.mrb[0].mxu0
      %v1375 = vpop.f32.mrb[0].mxu0
      %v1376 = vadd.f32 0.0, %v1375
      %v1377 = vpop.f32.mrb[0].mxu0
      %1378 = vmatprep.mubr.bf16.mxu0 %v1101
      %1379 = vmatmul.mubr.bf16.gmra.mrb[0].mxu0 %v1100
      %v1380 = vpop.f32.mrb[0].mxu0
      %v1381 = vadd.f32 0.0, %v1380
      %v1382 = vpop.f32.mrb[0].mxu0
      %v1383 = vpop.f32.mrb[0].mxu0
      %v1384 = vadd.f32 0.0, %v1383
      %v1385 = vpop.f32.mrb[0].mxu0
      %1386 = vmatprep.mubr.bf16.mxu0 %v1103
      %1387 = vmatmul.mubr.bf16.gmra.mrb[0].mxu0 %v1102
      %v1388 = vpop.f32.mrb[0].mxu0
      %v1389 = vadd.f32 0.0, %v1388
      %v1390 = vpop.f32.mrb[0].mxu0
      %v1391 = vpop.f32.mrb[0].mxu0
      %v1392 = vadd.f32 0.0, %v1391
      %v1393 = vpop.f32.mrb[0].mxu0
      %1394 = vmatprep.mubr.bf16.mxu0 %v1105
      %1395 = vmatmul.mubr.bf16.gmra.mrb[0].mxu0 %v1104
      %v1396 = vpop.f32.mrb[0].mxu0
      %v1397 = vadd.f32 0.0, %v1396
      %v1398 = vpop.f32.mrb[0].mxu0
      %v1399 = vpop.f32.mrb[0].mxu0
      %v1400 = vadd.f32 0.0, %v1399
      %v1401 = vpop.f32.mrb[0].mxu0
      %1402 = vmatprep.mubr.bf16.mxu0 %v1107
      %1403 = vmatmul.mubr.bf16.gmra.mrb[0].mxu0 %v1106
      %v1404 = vpop.f32.mrb[0].mxu0
      %v1405 = vadd.f32 0.0, %v1404
      %v1406 = vpop.f32.mrb[0].mxu0
      %v1407 = vpop.f32.mrb[0].mxu0
      %v1408 = vadd.f32 0.0, %v1407
      %v1409 = vpop.f32.mrb[0].mxu0
      %1410 = vmatprep.mubr.bf16.mxu0 %v1109
      %1411 = vmatmul.mubr.bf16.gmra.mrb[0].mxu0 %v1108
      %v1412 = vpop.f32.mrb[0].mxu0
      %v1413 = vadd.f32 0.0, %v1412
      %v1414 = vpop.f32.mrb[0].mxu0
      %v1415 = vpop.f32.mrb[0].mxu0
      %v1416 = vadd.f32 0.0, %v1415
      %v1417 = vpop.f32.mrb[0].mxu0
      %1418 = vmatprep.mubr.bf16.mxu0 %v1111
      %1419 = vmatmul.mubr.bf16.gmra.mrb[0].mxu0 %v1110
      %v1420 = vpop.f32.mrb[0].mxu0
      %v1421 = vadd.f32 0.0, %v1420
      %v1422 = vpop.f32.mrb[0].mxu0
      %v1423 = vpop.f32.mrb[0].mxu0
      %v1424 = vadd.f32 0.0, %v1423
      %v1425 = vpop.f32.mrb[0].mxu0
      %1426 = vmatprep.mubr.bf16.mxu0 %v1113
      %1427 = vmatmul.mubr.bf16.gmra.mrb[0].mxu0 %v1112
      %v1428 = vpop.f32.mrb[0].mxu0
      %v1429 = vadd.f32 0.0, %v1428
      %v1430 = vpop.f32.mrb[0].mxu0
      %v1431 = vpop.f32.mrb[0].mxu0
      %v1432 = vadd.f32 0.0, %v1431
      %v1433 = vpop.f32.mrb[0].mxu0
      %1434 = vmatprep.mubr.bf16.mxu0 %v1115
      %1435 = vmatmul.mubr.bf16.gmra.mrb[0].mxu0 %v1114
      %v1436 = vpop.f32.mrb[0].mxu0
      %v1437 = vadd.f32 0.0, %v1436
      %v1438 = vpop.f32.mrb[0].mxu0
      %v1439 = vpop.f32.mrb[0].mxu0
      %v1440 = vadd.f32 0.0, %v1439
      %v1441 = vpop.f32.mrb[0].mxu0
      %1442 = vmatprep.mubr.bf16.mxu0 %v1117
      %1443 = vmatmul.mubr.bf16.gmra.mrb[0].mxu0 %v1116
      %v1444 = vpop.f32.mrb[0].mxu0
      %v1445 = vadd.f32 0.0, %v1444
      %v1446 = vpop.f32.mrb[0].mxu0
      %v1447 = vpop.f32.mrb[0].mxu0
      %v1448 = vadd.f32 0.0, %v1447
      %v1449 = vpop.f32.mrb[0].mxu0
      %1450 = vmatprep.mubr.bf16.mxu0 %v1119
      %1451 = vmatmul.mubr.bf16.gmra.mrb[0].mxu0 %v1118
      %v1452 = vpop.f32.mrb[0].mxu0
      %v1453 = vadd.f32 0.0, %v1452
      %v1454 = vpop.f32.mrb[0].mxu0
      %v1455 = vpop.f32.mrb[0].mxu0
      %v1456 = vadd.f32 0.0, %v1455
      %v1457 = vpop.f32.mrb[0].mxu0
      %1458 = vmatprep.mubr.bf16.mxu0 %v1121
      %1459 = vmatmul.mubr.bf16.gmra.mrb[0].mxu0 %v1120
      %v1460 = vpop.f32.mrb[0].mxu0
      %v1461 = vadd.f32 0.0, %v1460
      %v1462 = vpop.f32.mrb[0].mxu0
      %v1463 = vpop.f32.mrb[0].mxu0
      %v1464 = vadd.f32 0.0, %v1463
      %v1465 = vpop.f32.mrb[0].mxu0
      %1466 = vmatprep.mubr.bf16.mxu0 %v1123
      %1467 = vmatmul.mubr.bf16.gmra.mrb[0].mxu0 %v1122
      %v1468 = vpop.f32.mrb[0].mxu0
      %v1469 = vadd.f32 0.0, %v1468
      %v1470 = vpop.f32.mrb[0].mxu0
      %v1471 = vpop.f32.mrb[0].mxu0
      %v1472 = vadd.f32 0.0, %v1471
      %v1473 = vpop.f32.mrb[0].mxu0
      %1474 = vmatprep.mubr.bf16.mxu0 %v1125
      %1475 = vmatmul.mubr.bf16.gmra.mrb[0].mxu0 %v1124
      %v1476 = vpop.f32.mrb[0].mxu0
      %v1477 = vadd.f32 0.0, %v1476
      %v1478 = vpop.f32.mrb[0].mxu0
      %v1479 = vpop.f32.mrb[0].mxu0
      %v1480 = vadd.f32 0.0, %v1479
      %v1481 = vpop.f32.mrb[0].mxu0
      %1482 = vmatprep.mubr.bf16.mxu0 %v1127
      %1483 = vmatmul.mubr.bf16.gmra.mrb[0].mxu0 %v1126
      %v1484 = vpop.f32.mrb[0].mxu0
      %v1485 = vadd.f32 0.0, %v1484
      %v1486 = vpop.f32.mrb[0].mxu0
      %v1487 = vpop.f32.mrb[0].mxu0
      %v1488 = vadd.f32 0.0, %v1487
      %v1489 = vpop.f32.mrb[0].mxu0
      %1490 = vmatprep.mubr.bf16.mxu0 %v1129
      %1491 = vmatmul.mubr.bf16.gmra.mrb[0].mxu0 %v1128
      %v1492 = vpop.f32.mrb[0].mxu0
      %v1493 = vadd.f32 0.0, %v1492
      %v1494 = vpop.f32.mrb[0].mxu0
      %v1495 = vpop.f32.mrb[0].mxu0
      %v1496 = vadd.f32 0.0, %v1495
      %v1497 = vpop.f32.mrb[0].mxu0
      %1498 = vmatprep.mubr.bf16.mxu0 %v1131
      %1499 = vmatmul.mubr.bf16.gmra.mrb[0].mxu0 %v1130
      %v1500 = vpop.f32.mrb[0].mxu0
      %v1501 = vadd.f32 0.0, %v1500
      %v1502 = vpop.f32.mrb[0].mxu0
      %v1503 = vpop.f32.mrb[0].mxu0
      %v1504 = vadd.f32 0.0, %v1503
      %v1505 = vpop.f32.mrb[0].mxu0
      %1506 = vmatprep.mubr.bf16.mxu0 %v1133
      %1507 = vmatmul.mubr.bf16.gmra.mrb[0].mxu0 %v1132
      %v1508 = vpop.f32.mrb[0].mxu0
      %v1509 = vadd.f32 0.0, %v1508
      %v1510 = vpop.f32.mrb[0].mxu0
      %v1511 = vpop.f32.mrb[0].mxu0
      %v1512 = vadd.f32 0.0, %v1511
      %v1513 = vpop.f32.mrb[0].mxu0
      %1514 = vmatprep.mubr.bf16.mxu0 %v1135
      %1515 = vmatmul.mubr.bf16.gmra.mrb[0].mxu0 %v1134
      %v1516 = vpop.f32.mrb[0].mxu0
      %v1517 = vadd.f32 0.0, %v1516
      %v1518 = vpop.f32.mrb[0].mxu0
      %v1519 = vpop.f32.mrb[0].mxu0
      %v1520 = vadd.f32 0.0, %v1519
      %v1521 = vpop.f32.mrb[0].mxu0
      %1522 = vmatprep.mubr.bf16.mxu0 %v1137
      %1523 = vmatmul.mubr.bf16.gmra.mrb[0].mxu0 %v1136
      %v1524 = vpop.f32.mrb[0].mxu0
      %v1525 = vadd.f32 0.0, %v1524
      %v1526 = vpop.f32.mrb[0].mxu0
      %v1527 = vpop.f32.mrb[0].mxu0
      %v1528 = vadd.f32 0.0, %v1527
      %v1529 = vpop.f32.mrb[0].mxu0
      %1530 = vmatprep.mubr.bf16.mxu0 %v1139
      %1531 = vmatmul.mubr.bf16.gmra.mrb[0].mxu0 %v1138
      %v1532 = vpop.f32.mrb[0].mxu0
      %v1533 = vadd.f32 0.0, %v1532
      %v1534 = vpop.f32.mrb[0].mxu0
      %v1535 = vpop.f32.mrb[0].mxu0
      %v1536 = vadd.f32 0.0, %v1535
      %v1537 = vpop.f32.mrb[0].mxu0
      %1538 = vmatprep.mubr.bf16.mxu0 %v1141
      %1539 = vmatmul.mubr.bf16.gmra.mrb[0].mxu0 %v1140
      %v1540 = vpop.f32.mrb[0].mxu0
      %v1541 = vadd.f32 0.0, %v1540
      %v1542 = vpop.f32.mrb[0].mxu0
      %v1543 = vpop.f32.mrb[0].mxu0
      %v1544 = vadd.f32 0.0, %v1543
      %v1545 = vpop.f32.mrb[0].mxu0
      %1546 = vmatprep.mubr.bf16.mxu0 %v1143
      %1547 = vmatmul.mubr.bf16.gmra.mrb[0].mxu0 %v1142
      %v1548 = vpop.f32.mrb[0].mxu0
      %v1549 = vadd.f32 0.0, %v1548
      %v1550 = vpop.f32.mrb[0].mxu0
      %v1551 = vpop.f32.mrb[0].mxu0
      %v1552 = vadd.f32 0.0, %v1551
      %v1553 = vpop.f32.mrb[0].mxu0
      %1554 = vmatprep.mubr.bf16.mxu0 %v1145
      %1555 = vmatmul.mubr.bf16.gmra.mrb[0].mxu0 %v1144
      %v1556 = vpop.f32.mrb[0].mxu0
      %v1557 = vadd.f32 0.0, %v1556
      %v1558 = vpop.f32.mrb[0].mxu0
      %v1559 = vpop.f32.mrb[0].mxu0
      %v1560 = vadd.f32 0.0, %v1559
      %v1561 = vpop.f32.mrb[0].mxu0
      %1562 = vdwg.mxu0
      %v1563 = vadd.f32 %v360, %v1309
      %v1564 = vadd.f32 %v361, %v1312
      %v1565 = vadd.f32 %v362, %v1317
      %v1566 = vadd.f32 %v363, %v1320
      %v1567 = vadd.f32 %v364, %v1325
      %v1568 = vadd.f32 %v365, %v1328
      %v1569 = vadd.f32 %v366, %v1333
      %v1570 = vadd.f32 %v367, %v1336
      %v1571 = vadd.f32 %v368, %v1341
      %v1572 = vadd.f32 %v369, %v1344
      %v1573 = vadd.f32 %v370, %v1349
      %v1574 = vadd.f32 %v371, %v1352
      %v1575 = vadd.f32 %v372, %v1357
      %v1576 = vadd.f32 %v373, %v1360
      %v1577 = vadd.f32 %v374, %v1365
      %v1578 = vadd.f32 %v375, %v1368
      %v1579 = vadd.f32 %v376, %v1373
      %v1580 = vadd.f32 %v377, %v1376
      %v1581 = vadd.f32 %v378, %v1381
      %v1582 = vadd.f32 %v379, %v1384
      %v1583 = vadd.f32 %v380, %v1389
      %v1584 = vadd.f32 %v381, %v1392
      %v1585 = vadd.f32 %v382, %v1397
      %v1586 = vadd.f32 %v383, %v1400
      %v1587 = vadd.f32 %v384, %v1405
      %v1588 = vadd.f32 %v385, %v1408
      %v1589 = vadd.f32 %v386, %v1413
      %v1590 = vadd.f32 %v387, %v1416
      %v1591 = vadd.f32 %v388, %v1421
      %v1592 = vadd.f32 %v389, %v1424
      %v1593 = vadd.f32 %v390, %v1429
      %v1594 = vadd.f32 %v391, %v1432
      %v1595 = vadd.f32 %v392, %v1437
      %v1596 = vadd.f32 %v393, %v1440
      %v1597 = vadd.f32 %v394, %v1445
      %v1598 = vadd.f32 %v395, %v1448
      %v1599 = vadd.f32 %v396, %v1453
      %v1600 = vadd.f32 %v397, %v1456
      %v1601 = vadd.f32 %v398, %v1461
      %v1602 = vadd.f32 %v399, %v1464
      %v1603 = vadd.f32 %v400, %v1469
      %v1604 = vadd.f32 %v401, %v1472
      %v1605 = vadd.f32 %v402, %v1477
      %v1606 = vadd.f32 %v403, %v1480
      %v1607 = vadd.f32 %v404, %v1485
      %v1608 = vadd.f32 %v405, %v1488
      %v1609 = vadd.f32 %v406, %v1493
      %v1610 = vadd.f32 %v407, %v1496
      %v1611 = vadd.f32 %v408, %v1501
      %v1612 = vadd.f32 %v409, %v1504
      %v1613 = vadd.f32 %v410, %v1509
      %v1614 = vadd.f32 %v411, %v1512
      %v1615 = vadd.f32 %v412, %v1517
      %v1616 = vadd.f32 %v413, %v1520
      %v1617 = vadd.f32 %v414, %v1525
      %v1618 = vadd.f32 %v415, %v1528
      %v1619 = vadd.f32 %v416, %v1533
      %v1620 = vadd.f32 %v417, %v1536
      %v1621 = vadd.f32 %v418, %v1541
      %v1622 = vadd.f32 %v419, %v1544
      %v1623 = vadd.f32 %v420, %v1549
      %v1624 = vadd.f32 %v421, %v1552
      %v1625 = vadd.f32 %v422, %v1557
      %v1626 = vadd.f32 %v423, %v1560
      %1627 = vst.msk [vmem:[#allocation2] sm:$0xff] %vm504, %v1563
      %1628 = vst.msk [vmem:[#allocation2 + $0x8] sm:$0xff] %vm504, %v1564
      %1629 = vst.msk [vmem:[#allocation2 + $0x10] sm:$0xff] %vm504, %v1565
      %1630 = vst.msk [vmem:[#allocation2 + $0x18] sm:$0xff] %vm504, %v1566
      %1631 = vst.msk [vmem:[#allocation2 + $0x20] sm:$0xff] %vm504, %v1567
      %1632 = vst.msk [vmem:[#allocation2 + $0x28] sm:$0xff] %vm504, %v1568
      %1633 = vst.msk [vmem:[#allocation2 + $0x30] sm:$0xff] %vm504, %v1569
      %1634 = vst.msk [vmem:[#allocation2 + $0x38] sm:$0xff] %vm504, %v1570
      %1635 = vst.msk [vmem:[#allocation2 + $0x40] sm:$0xff] %vm504, %v1571
      %1636 = vst.msk [vmem:[#allocation2 + $0x48] sm:$0xff] %vm504, %v1572
      %1637 = vst.msk [vmem:[#allocation2 + $0x50] sm:$0xff] %vm504, %v1573
      %1638 = vst.msk [vmem:[#allocation2 + $0x58] sm:$0xff] %vm504, %v1574
      %1639 = vst.msk [vmem:[#allocation2 + $0x60] sm:$0xff] %vm504, %v1575
      %1640 = vst.msk [vmem:[#allocation2 + $0x68] sm:$0xff] %vm504, %v1576
      %1641 = vst.msk [vmem:[#allocation2 + $0x70] sm:$0xff] %vm504, %v1577
      %1642 = vst.msk [vmem:[#allocation2 + $0x78] sm:$0xff] %vm504, %v1578
      %1643 = vst.msk [vmem:[#allocation2 + $0x80] sm:$0xff] %vm504, %v1579
      %1644 = vst.msk [vmem:[#allocation2 + $0x88] sm:$0xff] %vm504, %v1580
      %1645 = vst.msk [vmem:[#allocation2 + $0x90] sm:$0xff] %vm504, %v1581
      %1646 = vst.msk [vmem:[#allocation2 + $0x98] sm:$0xff] %vm504, %v1582
      %1647 = vst.msk [vmem:[#allocation2 + $0xa0] sm:$0xff] %vm504, %v1583
      %1648 = vst.msk [vmem:[#allocation2 + $0xa8] sm:$0xff] %vm504, %v1584
      %1649 = vst.msk [vmem:[#allocation2 + $0xb0] sm:$0xff] %vm504, %v1585
      %1650 = vst.msk [vmem:[#allocation2 + $0xb8] sm:$0xff] %vm504, %v1586
      %1651 = vst.msk [vmem:[#allocation2 + $0xc0] sm:$0xff] %vm504, %v1587
      %1652 = vst.msk [vmem:[#allocation2 + $0xc8] sm:$0xff] %vm504, %v1588
      %1653 = vst.msk [vmem:[#allocation2 + $0xd0] sm:$0xff] %vm504, %v1589
      %1654 = vst.msk [vmem:[#allocation2 + $0xd8] sm:$0xff] %vm504, %v1590
      %1655 = vst.msk [vmem:[#allocation2 + $0xe0] sm:$0xff] %vm504, %v1591
      %1656 = vst.msk [vmem:[#allocation2 + $0xe8] sm:$0xff] %vm504, %v1592
      %1657 = vst.msk [vmem:[#allocation2 + $0xf0] sm:$0xff] %vm504, %v1593
      %1658 = vst.msk [vmem:[#allocation2 + $0xf8] sm:$0xff] %vm504, %v1594
      %1659 = vst.msk [vmem:[#allocation2 + $0x100] sm:$0xff] %vm504, %v1595
      %1660 = vst.msk [vmem:[#allocation2 + $0x108] sm:$0xff] %vm504, %v1596
      %1661 = vst.msk [vmem:[#allocation2 + $0x110] sm:$0xff] %vm504, %v1597
      %1662 = vst.msk [vmem:[#allocation2 + $0x118] sm:$0xff] %vm504, %v1598
      %1663 = vst.msk [vmem:[#allocation2 + $0x120] sm:$0xff] %vm504, %v1599
      %1664 = vst.msk [vmem:[#allocation2 + $0x128] sm:$0xff] %vm504, %v1600
      %1665 = vst.msk [vmem:[#allocation2 + $0x130] sm:$0xff] %vm504, %v1601
      %1666 = vst.msk [vmem:[#allocation2 + $0x138] sm:$0xff] %vm504, %v1602
      %1667 = vst.msk [vmem:[#allocation2 + $0x140] sm:$0xff] %vm504, %v1603
      %1668 = vst.msk [vmem:[#allocation2 + $0x148] sm:$0xff] %vm504, %v1604
      %1669 = vst.msk [vmem:[#allocation2 + $0x150] sm:$0xff] %vm504, %v1605
      %1670 = vst.msk [vmem:[#allocation2 + $0x158] sm:$0xff] %vm504, %v1606
      %1671 = vst.msk [vmem:[#allocation2 + $0x160] sm:$0xff] %vm504, %v1607
      %1672 = vst.msk [vmem:[#allocation2 + $0x168] sm:$0xff] %vm504, %v1608
      %1673 = vst.msk [vmem:[#allocation2 + $0x170] sm:$0xff] %vm504, %v1609
      %1674 = vst.msk [vmem:[#allocation2 + $0x178] sm:$0xff] %vm504, %v1610
      %1675 = vst.msk [vmem:[#allocation2 + $0x180] sm:$0xff] %vm504, %v1611
      %1676 = vst.msk [vmem:[#allocation2 + $0x188] sm:$0xff] %vm504, %v1612
      %1677 = vst.msk [vmem:[#allocation2 + $0x190] sm:$0xff] %vm504, %v1613
      %1678 = vst.msk [vmem:[#allocation2 + $0x198] sm:$0xff] %vm504, %v1614
      %1679 = vst.msk [vmem:[#allocation2 + $0x1a0] sm:$0xff] %vm504, %v1615
      %1680 = vst.msk [vmem:[#allocation2 + $0x1a8] sm:$0xff] %vm504, %v1616
      %1681 = vst.msk [vmem:[#allocation2 + $0x1b0] sm:$0xff] %vm504, %v1617
      %1682 = vst.msk [vmem:[#allocation2 + $0x1b8] sm:$0xff] %vm504, %v1618
      %1683 = vst.msk [vmem:[#allocation2 + $0x1c0] sm:$0xff] %vm504, %v1619
      %1684 = vst.msk [vmem:[#allocation2 + $0x1c8] sm:$0xff] %vm504, %v1620
      %1685 = vst.msk [vmem:[#allocation2 + $0x1d0] sm:$0xff] %vm504, %v1621
      %1686 = vst.msk [vmem:[#allocation2 + $0x1d8] sm:$0xff] %vm504, %v1622
      %1687 = vst.msk [vmem:[#allocation2 + $0x1e0] sm:$0xff] %vm504, %v1623
      %1688 = vst.msk [vmem:[#allocation2 + $0x1e8] sm:$0xff] %vm504, %v1624
      %1689 = vst.msk [vmem:[#allocation2 + $0x1f0] sm:$0xff] %vm504, %v1625
      %1690 = vst.msk [vmem:[#allocation2 + $0x1f8] sm:$0xff] %vm504, %v1626
      %p1691 = scmp.eq.s32.totalorder %s19, 3
      // Predicated region
      $region37: #{evoformer_forward.3} parent=31 // pred_check
        %p1692 = pneg %p1691
      $region38: #{evoformer_forward.3} parent=31 // pred_check_branch
        %1694 = sbr.rel (%p1692) target = $region40
      $region39: #{evoformer_forward.3} parent=31 // pred_region
        %v1695 = vld [vmem:[#allocation2] sm:$0xff]
        %v1696 = vld [vmem:[#allocation2 + $0x8] sm:$0xff]
        %v1697 = vld [vmem:[#allocation2 + $0x10] sm:$0xff]
        %v1698 = vld [vmem:[#allocation2 + $0x18] sm:$0xff]
        %v1699 = vld [vmem:[#allocation2 + $0x20] sm:$0xff]
        %v1700 = vld [vmem:[#allocation2 + $0x28] sm:$0xff]
        %v1701 = vld [vmem:[#allocation2 + $0x30] sm:$0xff]
        %v1702 = vld [vmem:[#allocation2 + $0x38] sm:$0xff]
        %v1703 = vld [vmem:[#allocation2 + $0x40] sm:$0xff]
        %v1704 = vld [vmem:[#allocation2 + $0x48] sm:$0xff]
        %v1705 = vld [vmem:[#allocation2 + $0x50] sm:$0xff]
        %v1706 = vld [vmem:[#allocation2 + $0x58] sm:$0xff]
        %v1707 = vld [vmem:[#allocation2 + $0x60] sm:$0xff]
        %v1708 = vld [vmem:[#allocation2 + $0x68] sm:$0xff]
        %v1709 = vld [vmem:[#allocation2 + $0x70] sm:$0xff]
        %v1710 = vld [vmem:[#allocation2 + $0x78] sm:$0xff]
        %v1711 = vld [vmem:[#allocation2 + $0x80] sm:$0xff]
        %v1712 = vld [vmem:[#allocation2 + $0x88] sm:$0xff]
        %v1713 = vld [vmem:[#allocation2 + $0x90] sm:$0xff]
        %v1714 = vld [vmem:[#allocation2 + $0x98] sm:$0xff]
        %v1715 = vld [vmem:[#allocation2 + $0xa0] sm:$0xff]
        %v1716 = vld [vmem:[#allocation2 + $0xa8] sm:$0xff]
        %v1717 = vld [vmem:[#allocation2 + $0xb0] sm:$0xff]
        %v1718 = vld [vmem:[#allocation2 + $0xb8] sm:$0xff]
        %v1719 = vld [vmem:[#allocation2 + $0xc0] sm:$0xff]
        %v1720 = vld [vmem:[#allocation2 + $0xc8] sm:$0xff]
        %v1721 = vld [vmem:[#allocation2 + $0xd0] sm:$0xff]
        %v1722 = vld [vmem:[#allocation2 + $0xd8] sm:$0xff]
        %v1723 = vld [vmem:[#allocation2 + $0xe0] sm:$0xff]
        %v1724 = vld [vmem:[#allocation2 + $0xe8] sm:$0xff]
        %v1725 = vld [vmem:[#allocation2 + $0xf0] sm:$0xff]
        %v1726 = vld [vmem:[#allocation2 + $0xf8] sm:$0xff]
        %v1727 = vld [vmem:[#allocation2 + $0x100] sm:$0xff]
        %v1728 = vld [vmem:[#allocation2 + $0x108] sm:$0xff]
        %v1729 = vld [vmem:[#allocation2 + $0x110] sm:$0xff]
        %v1730 = vld [vmem:[#allocation2 + $0x118] sm:$0xff]
        %v1731 = vld [vmem:[#allocation2 + $0x120] sm:$0xff]
        %v1732 = vld [vmem:[#allocation2 + $0x128] sm:$0xff]
        %v1733 = vld [vmem:[#allocation2 + $0x130] sm:$0xff]
        %v1734 = vld [vmem:[#allocation2 + $0x138] sm:$0xff]
        %v1735 = vld [vmem:[#allocation2 + $0x140] sm:$0xff]
        %v1736 = vld [vmem:[#allocation2 + $0x148] sm:$0xff]
        %v1737 = vld [vmem:[#allocation2 + $0x150] sm:$0xff]
        %v1738 = vld [vmem:[#allocation2 + $0x158] sm:$0xff]
        %v1739 = vld [vmem:[#allocation2 + $0x160] sm:$0xff]
        %v1740 = vld [vmem:[#allocation2 + $0x168] sm:$0xff]
        %v1741 = vld [vmem:[#allocation2 + $0x170] sm:$0xff]
        %v1742 = vld [vmem:[#allocation2 + $0x178] sm:$0xff]
        %v1743 = vld [vmem:[#allocation2 + $0x180] sm:$0xff]
        %v1744 = vld [vmem:[#allocation2 + $0x188] sm:$0xff]
        %v1745 = vld [vmem:[#allocation2 + $0x190] sm:$0xff]
        %v1746 = vld [vmem:[#allocation2 + $0x198] sm:$0xff]
        %v1747 = vld [vmem:[#allocation2 + $0x1a0] sm:$0xff]
        %v1748 = vld [vmem:[#allocation2 + $0x1a8] sm:$0xff]
        %v1749 = vld [vmem:[#allocation2 + $0x1b0] sm:$0xff]
        %v1750 = vld [vmem:[#allocation2 + $0x1b8] sm:$0xff]
        %v1751 = vld [vmem:[#allocation2 + $0x1c0] sm:$0xff]
        %v1752 = vld [vmem:[#allocation2 + $0x1c8] sm:$0xff]
        %v1753 = vld [vmem:[#allocation2 + $0x1d0] sm:$0xff]
        %v1754 = vld [vmem:[#allocation2 + $0x1d8] sm:$0xff]
        %v1755 = vld [vmem:[#allocation2 + $0x1e0] sm:$0xff]
        %v1756 = vld [vmem:[#allocation2 + $0x1e8] sm:$0xff]
        %v1757 = vld [vmem:[#allocation2 + $0x1f0] sm:$0xff]
        %v1758 = vld [vmem:[#allocation2 + $0x1f8] sm:$0xff]
        %1759 = vst.msk [vmem:[%s224] sm:$0xff] %vm504, %v1695
        %1760 = vst.msk [vmem:[%s224 + $0x8] sm:$0xff] %vm504, %v1696
        %1761 = vst.msk [vmem:[%s224 + $0x10] sm:$0xff] %vm504, %v1697
        %1762 = vst.msk [vmem:[%s224 + $0x18] sm:$0xff] %vm504, %v1698
        %1763 = vst.msk [vmem:[%s224 + $0x20] sm:$0xff] %vm504, %v1699
        %1764 = vst.msk [vmem:[%s224 + $0x28] sm:$0xff] %vm504, %v1700
        %1765 = vst.msk [vmem:[%s224 + $0x30] sm:$0xff] %vm504, %v1701
        %1766 = vst.msk [vmem:[%s224 + $0x38] sm:$0xff] %vm504, %v1702
        %1767 = vst.msk [vmem:[%s224 + $0x40] sm:$0xff] %vm504, %v1703
        %1768 = vst.msk [vmem:[%s224 + $0x48] sm:$0xff] %vm504, %v1704
        %1769 = vst.msk [vmem:[%s224 + $0x50] sm:$0xff] %vm504, %v1705
        %1770 = vst.msk [vmem:[%s224 + $0x58] sm:$0xff] %vm504, %v1706
        %1771 = vst.msk [vmem:[%s224 + $0x60] sm:$0xff] %vm504, %v1707
        %1772 = vst.msk [vmem:[%s224 + $0x68] sm:$0xff] %vm504, %v1708
        %1773 = vst.msk [vmem:[%s224 + $0x70] sm:$0xff] %vm504, %v1709
        %1774 = vst.msk [vmem:[%s224 + $0x78] sm:$0xff] %vm504, %v1710
        %1775 = vst.msk [vmem:[%s224 + $0x80] sm:$0xff] %vm504, %v1711
        %1776 = vst.msk [vmem:[%s224 + $0x88] sm:$0xff] %vm504, %v1712
        %1777 = vst.msk [vmem:[%s224 + $0x90] sm:$0xff] %vm504, %v1713
        %1778 = vst.msk [vmem:[%s224 + $0x98] sm:$0xff] %vm504, %v1714
        %1779 = vst.msk [vmem:[%s224 + $0xa0] sm:$0xff] %vm504, %v1715
        %1780 = vst.msk [vmem:[%s224 + $0xa8] sm:$0xff] %vm504, %v1716
        %1781 = vst.msk [vmem:[%s224 + $0xb0] sm:$0xff] %vm504, %v1717
        %1782 = vst.msk [vmem:[%s224 + $0xb8] sm:$0xff] %vm504, %v1718
        %1783 = vst.msk [vmem:[%s224 + $0xc0] sm:$0xff] %vm504, %v1719
        %1784 = vst.msk [vmem:[%s224 + $0xc8] sm:$0xff] %vm504, %v1720
        %1785 = vst.msk [vmem:[%s224 + $0xd0] sm:$0xff] %vm504, %v1721
        %1786 = vst.msk [vmem:[%s224 + $0xd8] sm:$0xff] %vm504, %v1722
        %1787 = vst.msk [vmem:[%s224 + $0xe0] sm:$0xff] %vm504, %v1723
        %1788 = vst.msk [vmem:[%s224 + $0xe8] sm:$0xff] %vm504, %v1724
        %1789 = vst.msk [vmem:[%s224 + $0xf0] sm:$0xff] %vm504, %v1725
        %1790 = vst.msk [vmem:[%s224 + $0xf8] sm:$0xff] %vm504, %v1726
        %1791 = vst.msk [vmem:[%s224 + $0x100] sm:$0xff] %vm504, %v1727
        %1792 = vst.msk [vmem:[%s224 + $0x108] sm:$0xff] %vm504, %v1728
        %1793 = vst.msk [vmem:[%s224 + $0x110] sm:$0xff] %vm504, %v1729
        %1794 = vst.msk [vmem:[%s224 + $0x118] sm:$0xff] %vm504, %v1730
        %1795 = vst.msk [vmem:[%s224 + $0x120] sm:$0xff] %vm504, %v1731
        %1796 = vst.msk [vmem:[%s224 + $0x128] sm:$0xff] %vm504, %v1732
        %1797 = vst.msk [vmem:[%s224 + $0x130] sm:$0xff] %vm504, %v1733
        %1798 = vst.msk [vmem:[%s224 + $0x138] sm:$0xff] %vm504, %v1734
        %1799 = vst.msk [vmem:[%s224 + $0x140] sm:$0xff] %vm504, %v1735
        %1800 = vst.msk [vmem:[%s224 + $0x148] sm:$0xff] %vm504, %v1736
        %1801 = vst.msk [vmem:[%s224 + $0x150] sm:$0xff] %vm504, %v1737
        %1802 = vst.msk [vmem:[%s224 + $0x158] sm:$0xff] %vm504, %v1738
        %1803 = vst.msk [vmem:[%s224 + $0x160] sm:$0xff] %vm504, %v1739
        %1804 = vst.msk [vmem:[%s224 + $0x168] sm:$0xff] %vm504, %v1740
        %1805 = vst.msk [vmem:[%s224 + $0x170] sm:$0xff] %vm504, %v1741
        %1806 = vst.msk [vmem:[%s224 + $0x178] sm:$0xff] %vm504, %v1742
        %1807 = vst.msk [vmem:[%s224 + $0x180] sm:$0xff] %vm504, %v1743
        %1808 = vst.msk [vmem:[%s224 + $0x188] sm:$0xff] %vm504, %v1744
        %1809 = vst.msk [vmem:[%s224 + $0x190] sm:$0xff] %vm504, %v1745
        %1810 = vst.msk [vmem:[%s224 + $0x198] sm:$0xff] %vm504, %v1746
        %1811 = vst.msk [vmem:[%s224 + $0x1a0] sm:$0xff] %vm504, %v1747
        %1812 = vst.msk [vmem:[%s224 + $0x1a8] sm:$0xff] %vm504, %v1748
        %1813 = vst.msk [vmem:[%s224 + $0x1b0] sm:$0xff] %vm504, %v1749
        %1814 = vst.msk [vmem:[%s224 + $0x1b8] sm:$0xff] %vm504, %v1750
        %1815 = vst.msk [vmem:[%s224 + $0x1c0] sm:$0xff] %vm504, %v1751
        %1816 = vst.msk [vmem:[%s224 + $0x1c8] sm:$0xff] %vm504, %v1752
        %1817 = vst.msk [vmem:[%s224 + $0x1d0] sm:$0xff] %vm504, %v1753
        %1818 = vst.msk [vmem:[%s224 + $0x1d8] sm:$0xff] %vm504, %v1754
        %1819 = vst.msk [vmem:[%s224 + $0x1e0] sm:$0xff] %vm504, %v1755
        %1820 = vst.msk [vmem:[%s224 + $0x1e8] sm:$0xff] %vm504, %v1756
        %1821 = vst.msk [vmem:[%s224 + $0x1f0] sm:$0xff] %vm504, %v1757
        %1822 = vst.msk [vmem:[%s224 + $0x1f8] sm:$0xff] %vm504, %v1758
      $region40: #{evoformer_forward.3} parent=31 // pred_fallthru
        _
      %s1823 = smul.u32 64, %s18
      %p1824 = scmp.lt.s32.totalorder %s1823, 127
      %s1825 = scalar_select %p1824, %s1823, 127
      %s1826 = smul.addr %s1825, 8
      %s1827 = scalar_lea.vmem %s3, %s1826
      // Predicated region
      $region41: #{evoformer_forward.3} parent=31 // pred_check
        %p1828 = pneg %p122
      $region42: #{evoformer_forward.3} parent=31 // pred_check_branch
        %1830 = sbr.rel (%p1828) target = $region44
      $region43: #{evoformer_forward.3} parent=31 // pred_region
        %s1831 = smul.u32 64, %s18
      $region44: #{evoformer_forward.3} parent=31 // pred_fallthru
        _
    $region32: #{evoformer_forward.3} parent=5 // pred_fallthru
      _
    %p1832 = scmp.le.s32.totalorder 2, %s9
    // Predicated region
    $region45: #{evoformer_forward.3} parent=5 // pred_check
      %p1833 = pneg %p1832
    $region46: #{evoformer_forward.3} parent=5 // pred_check_branch
      %1835 = sbr.rel (%p1833) target = $region48
    $region47: #{evoformer_forward.3} parent=5 // pred_region
      %s1836 = ssub.s32 %s9, 2
      // Predicated region
      $region49: #{evoformer_forward.3} parent=47 // pred_check
        %p1837 = pneg %p128
      $region50: #{evoformer_forward.3} parent=47 // pred_check_branch
        %1839 = sbr.rel (%p1837) target = $region52
      $region51: #{evoformer_forward.3} parent=47 // pred_region
        %s1840 = smul.u32 64, %s20
        %p1841 = scmp.lt.s32.totalorder %s1840, 127
        %s1842 = scalar_select %p1841, %s1840, 127
        %s1843 = smul.addr %s1842, 8
        %s1844 = scalar_lea.vmem %s3, %s1843
      $region52: #{evoformer_forward.3} parent=47 // pred_fallthru
        _
    $region48: #{evoformer_forward.3} parent=5 // pred_fallthru
      _
  $region6: #{evoformer_forward.3} parent=0 // loop_footer
    %s13 = sadd.s32 1, %s9
  $region7: #{evoformer_forward.3} parent=0 // loop_footer_branch
    %8 = sbr.rel target = $region3
  $region8: #{evoformer_forward.3} parent=0 // loop_exit
    _

</llo_original>
